<compile_context>
chip_gen: v7x
topology: tpu7x:2x2x1
jax: 0.10.0
libtpu: 0.0.40
codegen_flags: <defaults>
</compile_context>

<pallas_src>
import functools
import math

import jax
import jax.numpy as jnp
from jax import lax
from jax.experimental import pallas as pl
from jax.experimental.pallas import tpu as pltpu

NEG_INF = -1e30  # finite mask value: avoids inf-inf NaNs in the online softmax


def _layernorm(x, gamma, beta, eps=1e-5):
    mu = jnp.mean(x, axis=-1, keepdims=True)
    var = jnp.mean(jnp.square(x - mu), axis=-1, keepdims=True)
    return (x - mu) * lax.rsqrt(var + eps) * gamma + beta


# --------------------------------------------------------------------------------------------
# Kernel 1: projections (Q path, KV path), bf16 matmuls / f32 LayerNorm, head-major outputs.
# --------------------------------------------------------------------------------------------
def _mla_proj_kernel(x_ref,
                     wdq_ref, bdq_ref, gq_ref, bq_ref,
                     wqn_ref, bqn_ref, wqr_ref, bqr_ref,
                     wdkvn_ref, bdkvn_ref, wdkvr_ref, bdkvr_ref, gkv_ref, bkv_ref,
                     wk_ref, bk_ref, wv_ref, bv_ref,
                     qn_ref, qr_ref, kn_ref, v_ref, kr_ref,
                     *, n_heads, d_head, d_qk_n, d_qk_r):
    xb = x_ref[0].astype(jnp.bfloat16)                                  # (tp, C)

    # ---- Q path: down-proj -> LayerNorm (f32) -> up-proj (split q_n / rotated q_r columns) ----
    c_q = jnp.dot(xb, wdq_ref[...], preferred_element_type=jnp.float32) + bdq_ref[...]
    c_q = _layernorm(c_q, gq_ref[...], bq_ref[...]).astype(jnp.bfloat16)
    qn_all = jnp.dot(c_q, wqn_ref[...], preferred_element_type=jnp.float32) + bqn_ref[...]
    # wqr/bqr already carry the per-head rotary rotation (exact fold; angle = f(head index)).
    qr_all = jnp.dot(c_q, wqr_ref[...], preferred_element_type=jnp.float32) + bqr_ref[...]

    # ---- KV path: W_d_kv split column-wise into the normalized (d_kv) and rope (d_qk_r) parts --
    c_kvn = jnp.dot(xb, wdkvn_ref[...], preferred_element_type=jnp.float32) + bdkvn_ref[...]
    k_r = jnp.dot(xb, wdkvr_ref[...], preferred_element_type=jnp.float32) + bdkvr_ref[...]
    kv_n = _layernorm(c_kvn, gkv_ref[...], bkv_ref[...]).astype(jnp.bfloat16)
    kn_all = jnp.dot(kv_n, wk_ref[...], preferred_element_type=jnp.float32) + bk_ref[...]
    v_all = jnp.dot(kv_n, wv_ref[...], preferred_element_type=jnp.float32) + bv_ref[...]

    # k_r rotary in the reference acts on a (B, 1, S, d) tensor -> identity (left un-normalized).
    kr_ref[0] = k_r.astype(jnp.bfloat16)

    # Scatter head-contiguous matmul outputs into head-major (H, tp, d) layout ONCE here so the
    # attention kernel addresses whole per-head tiles via BlockSpec (no lane slicing in hot loop).
    for h in range(n_heads):
        qn_ref[0, h] = qn_all[:, h * d_qk_n:(h + 1) * d_qk_n].astype(jnp.bfloat16)
        qr_ref[0, h] = qr_all[:, h * d_qk_r:(h + 1) * d_qk_r].astype(jnp.bfloat16)
        kn_ref[0, h] = kn_all[:, h * d_qk_n:(h + 1) * d_qk_n].astype(jnp.bfloat16)
        v_ref[0, h] = v_all[:, h * d_head:(h + 1) * d_head].astype(jnp.bfloat16)


# --------------------------------------------------------------------------------------------
# Kernel 2: flash-style causal attention + per-head output projection accumulation.
# Grid: (B, q_tiles, heads, kv_tiles)  -> ("parallel", "parallel", "arbitrary", "arbitrary")
# --------------------------------------------------------------------------------------------
def _mla_attn_kernel(qn_ref, qr_ref, kn_ref, kr_ref, v_ref, wo_ref, bo_ref,
                     o_ref,
                     m_ref, l_ref, acc_ref, oacc_ref,
                     *, scale, block_q, block_k):
    qt = pl.program_id(1)
    h = pl.program_id(2)
    kv = pl.program_id(3)
    n_h = pl.num_programs(2)
    n_kv = pl.num_programs(3)

    @pl.when(kv == 0)
    def _init_head():
        m_ref[...] = jnp.full_like(m_ref, NEG_INF)
        l_ref[...] = jnp.zeros_like(l_ref)
        acc_ref[...] = jnp.zeros_like(acc_ref)

    @pl.when(jnp.logical_and(kv == 0, h == 0))
    def _init_out():
        oacc_ref[...] = jnp.zeros_like(oacc_ref)

    # Skip KV tiles entirely in the causal future of this query tile (saves ~2x score FLOPs).
    @pl.when(kv * block_k < (qt + 1) * block_q)
    def _flash_update():
        qn = qn_ref[0, 0]                      # (tq, d_qk_n) bf16
        qr = qr_ref[0, 0]                      # (tq, d_qk_r) bf16 (rotary already folded in)
        kn = kn_ref[0, 0]                      # (tk, d_qk_n) bf16
        kr = kr_ref[0]                         # (tk, d_qk_r) bf16, shared across heads
        vv = v_ref[0, 0]                       # (tk, d_head) bf16

        dn = (((1,), (1,)), ((), ()))          # contract last dims: q @ k.T without concats
        s = (lax.dot_general(qn, kn, dn, preferred_element_type=jnp.float32)
             + lax.dot_general(qr, kr, dn, preferred_element_type=jnp.float32)) * scale

        row = qt * block_q + lax.broadcasted_iota(jnp.int32, (block_q, block_k), 0)
        col = kv * block_k + lax.broadcasted_iota(jnp.int32, (block_q, block_k), 1)
        s = jnp.where(col <= row, s, NEG_INF)  # causal, cache_len == 0 (NoKVCache prefill)

        m_prev = m_ref[...]
        m_new = jnp.maximum(m_prev, jnp.max(s, axis=-1, keepdims=True))
        alpha = jnp.exp(m_prev - m_new)
        p = jnp.exp(s - m_new)
        l_ref[...] = alpha * l_ref[...] + jnp.sum(p, axis=-1, keepdims=True)
        acc_ref[...] = alpha * acc_ref[...] + jnp.dot(
            p.astype(jnp.bfloat16), vv, preferred_element_type=jnp.float32)
        m_ref[...] = m_new

    @pl.when(kv == n_kv - 1)
    def _head_epilogue():
        y = acc_ref[...] * pl.reciprocal(l_ref[...], approx=True)      # (tq, d_head) f32
        # Output projection folded into the head reduction: out += y_h @ W_o[h*d_head:(h+1)*d_head]
        oacc_ref[...] += jnp.dot(y.astype(jnp.bfloat16), wo_ref[...],
                                 preferred_element_type=jnp.float32)

        @pl.when(h == n_h - 1)
        def _final():
            # Single lane-dense (tq, d_model) store.
            o_ref[0] = (oacc_ref[...] + bo_ref[...]).astype(o_ref.dtype)


# --------------------------------------------------------------------------------------------
# Parameter prep: exact weight-side re-layout + rotary fold + bf16 casts (done once, outside).
# --------------------------------------------------------------------------------------------
def _prepare_weights(params, n_heads, d_model):
    d_head = d_model // n_heads
    d_kv = d_model // 2
    d_qk_n = d_head // 2
    d_qk_r = d_head // 2

    bf16 = jnp.bfloat16

    # --- W_u_q: split columns per head into q_n and q_r groups; fold rotary into q_r columns ---
    wuq = params["wuq"]                                   # (d_q, d_model)
    buq = params["buq"]                                   # (1, d_model)
    d_q = wuq.shape[0]
    w3 = wuq.reshape(d_q, n_heads, d_head)
    b3 = buq.reshape(n_heads, d_head)
    w_n, w_r = w3[:, :, :d_qk_n], w3[:, :, d_qk_n:]
    b_n, b_r = b3[:, :d_qk_n], b3[:, d_qk_n:]

    # Rotary angle is indexed by the HEAD index (reference quirk: Rotary sees x.shape[1]==H).
    half = d_qk_r // 2
    inv_freq = (1.0 / 10000.0) ** (jnp.arange(0, d_qk_r, 2, dtype=jnp.float32) / d_qk_r)
    t = jnp.arange(n_heads, dtype=jnp.float32)
    freqs = jnp.outer(t, inv_freq)                        # (H, half)
    cos, sin = jnp.cos(freqs), jnp.sin(freqs)
    cd = jax.vmap(jnp.diag)(cos)                          # (H, half, half)
    sd = jax.vmap(jnp.diag)(sin)
    # y = x @ M with y1 = x1*cos + x2*sin, y2 = -x1*sin + x2*cos  (matches the reference Rotary)
    rot = jnp.concatenate([jnp.concatenate([cd, -sd], axis=2),
                           jnp.concatenate([sd, cd], axis=2)], axis=1)    # (H, d_qk_r, d_qk_r)
    w_r_rot = jnp.einsum("qhd,hde->qhe", w_r, rot)
    b_r_rot = jnp.einsum("hd,hde->he", b_r, rot)

    # --- W_d_kv: split columns into the LayerNorm'd (d_kv) part and the rope (d_qk_r) part ---
    wdkv, bdkv = params["wdkv"], params["bdkv"]

    # --- W_u_kv: split columns per head into k_n and v groups ---
    wukv = params["wukv"].reshape(d_kv, n_heads, d_qk_n + d_head)
    bukv = params["bukv"].reshape(n_heads, d_qk_n + d_head)

    return {
        "wdq": params["wdq"].astype(bf16), "bdq": params["bdq"],
        "gq": params["gq"], "bq": params["bq"],
        "wqn": w_n.reshape(d_q, n_heads * d_qk_n).astype(bf16),
        "bqn": b_n.reshape(1, n_heads * d_qk_n),
        "wqr": w_r_rot.reshape(d_q, n_heads * d_qk_r).astype(bf16),
        "bqr": b_r_rot.reshape(1, n_heads * d_qk_r),
        "wdkv_n": wdkv[:, :d_kv].astype(bf16), "bdkv_n": bdkv[:, :d_kv],
        "wdkv_r": wdkv[:, d_kv:].astype(bf16), "bdkv_r": bdkv[:, d_kv:],
        "gkv": params["gkv"], "bkv": params["bkv"],
        "wk": wukv[:, :, :d_qk_n].reshape(d_kv, n_heads * d_qk_n).astype(bf16),
        "bk": bukv[:, :d_qk_n].reshape(1, n_heads * d_qk_n),
        "wv": wukv[:, :, d_qk_n:].reshape(d_kv, n_heads * d_head).astype(bf16),
        "bv": bukv[:, d_qk_n:].reshape(1, n_heads * d_head),
        "wo": params["wo"].astype(bf16), "bo": params["bo"],
    }


# --------------------------------------------------------------------------------------------
# Forward wrapper
# --------------------------------------------------------------------------------------------
def mla_forward(x, params, n_heads, *, block_q=256, block_k=256, block_proj=256):
    B, T, C = x.shape
    d_head = C // n_heads
    d_qk_n = d_head // 2
    d_qk_r = d_head // 2

    tq = min(block_q, T)
    tk = min(block_k, T)
    tp = min(block_proj, T)
    assert T % tq == 0 and T % tk == 0 and T % tp == 0, "sequence must divide the tile sizes"

    w = _prepare_weights(params, n_heads, C)
    cparams = pltpu.CompilerParams(vmem_limit_bytes=48 * 1024 * 1024)  # raised scoped VMEM limit

    # ---------------- Call 1: projections ----------------
    proj_args = [x,
                 w["wdq"], w["bdq"], w["gq"], w["bq"],
                 w["wqn"], w["bqn"], w["wqr"], w["bqr"],
                 w["wdkv_n"], w["bdkv_n"], w["wdkv_r"], w["bdkv_r"], w["gkv"], w["bkv"],
                 w["wk"], w["bk"], w["wv"], w["bv"]]

    def const_spec(a):
        nd = a.ndim
        return pl.BlockSpec(a.shape, lambda b, t, _nd=nd: (0,) * _nd)

    proj_in_specs = ([pl.BlockSpec((1, tp, C), lambda b, t: (b, t, 0))]
                     + [const_spec(a) for a in proj_args[1:]])
    proj_out_shape = (
        jax.ShapeDtypeStruct((B, n_heads, T, d_qk_n), jnp.bfloat16),   # q_n
        jax.ShapeDtypeStruct((B, n_heads, T, d_qk_r), jnp.bfloat16),   # q_r (rotary folded)
        jax.ShapeDtypeStruct((B, n_heads, T, d_qk_n), jnp.bfloat16),   # k_n
        jax.ShapeDtypeStruct((B, n_heads, T, d_head), jnp.bfloat16),   # v
        jax.ShapeDtypeStruct((B, T, d_qk_r), jnp.bfloat16),            # k_r (shared over heads)
    )
    proj_out_specs = (
        pl.BlockSpec((1, n_heads, tp, d_qk_n), lambda b, t: (b, 0, t, 0)),
        pl.BlockSpec((1, n_heads, tp, d_qk_r), lambda b, t: (b, 0, t, 0)),
        pl.BlockSpec((1, n_heads, tp, d_qk_n), lambda b, t: (b, 0, t, 0)),
        pl.BlockSpec((1, n_heads, tp, d_head), lambda b, t: (b, 0, t, 0)),
        pl.BlockSpec((1, tp, d_qk_r), lambda b, t: (b, t, 0)),
    )
    proj_kernel = functools.partial(_mla_proj_kernel, n_heads=n_heads, d_head=d_head,
                                    d_qk_n=d_qk_n, d_qk_r=d_qk_r)
    qn, qr, kn, v, kr = pl.pallas_call(
        proj_kernel,
        out_shape=proj_out_shape,
        grid=(B, T // tp),
        in_specs=proj_in_specs,
        out_specs=proj_out_specs,
        compiler_params=pltpu.CompilerParams(
            dimension_semantics=("parallel", "parallel"),
            vmem_limit_bytes=48 * 1024 * 1024),
    )(*proj_args)

    # ---------------- Call 2: flash attention + W_o ----------------
    n_qt, n_kt = T // tq, T // tk
    scale = 1.0 / math.sqrt(d_head)
    attn_kernel = functools.partial(_mla_attn_kernel, scale=scale, block_q=tq, block_k=tk)

    attn_in_specs = [
        pl.BlockSpec((1, 1, tq, d_qk_n), lambda b, qt, h, kv: (b, h, qt, 0)),   # q_n
        pl.BlockSpec((1, 1, tq, d_qk_r), lambda b, qt, h, kv: (b, h, qt, 0)),   # q_r
        pl.BlockSpec((1, 1, tk, d_qk_n), lambda b, qt, h, kv: (b, h, kv, 0)),   # k_n
        pl.BlockSpec((1, tk, d_qk_r),    lambda b, qt, h, kv: (b, kv, 0)),      # k_r (shared)
        pl.BlockSpec((1, 1, tk, d_head), lambda b, qt, h, kv: (b, h, kv, 0)),   # v
        pl.BlockSpec((d_head, C),        lambda b, qt, h, kv: (h, 0)),          # W_o rows of head h
        pl.BlockSpec((1, C),             lambda b, qt, h, kv: (0, 0)),          # b_o
    ]
    out = pl.pallas_call(
        attn_kernel,
        out_shape=jax.ShapeDtypeStruct((B, T, C), x.dtype),
        grid=(B, n_qt, n_heads, n_kt),
        in_specs=attn_in_specs,
        out_specs=pl.BlockSpec((1, tq, C), lambda b, qt, h, kv: (b, qt, 0)),
        scratch_shapes=[pltpu.VMEM((tq, 1), jnp.float32),      # m
                        pltpu.VMEM((tq, 1), jnp.float32),      # l
                        pltpu.VMEM((tq, d_head), jnp.float32),  # per-head acc
                        pltpu.VMEM((tq, C), jnp.float32)],      # output-projection accumulator
        compiler_params=pltpu.CompilerParams(
            dimension_semantics=("parallel", "parallel", "arbitrary", "arbitrary"),
            vmem_limit_bytes=48 * 1024 * 1024),
    )(qn, qr, kn, kr, v, w["wo"], w["bo"])
    return out


# --------------------------------------------------------------------------------------------
# Params + pure-JAX reference (faithful to the PyTorch module, incl. its rotary quirks)
# --------------------------------------------------------------------------------------------
def init_params(key, d_model, n_heads):
    d_head = d_model // n_heads
    d_q = d_model // 3
    d_kv = d_model // 2
    d_qk_n = d_head // 2
    d_qk_r = d_head // 2
    ks = jax.random.split(key, 10)
    f32 = jnp.float32

    def lin(kw, kb, fan_in, fan_out):
        lim = 1.0 / math.sqrt(fan_in)
        return (jax.random.uniform(kw, (fan_in, fan_out), f32, -lim, lim),
                jax.random.uniform(kb, (1, fan_out), f32, -lim, lim))

    p = {}
    p["wdq"], p["bdq"] = lin(ks[0], ks[1], d_model, d_q)
    p["gq"], p["bq"] = jnp.ones((1, d_q), f32), jnp.zeros((1, d_q), f32)
    p["wuq"], p["buq"] = lin(ks[2], ks[3], d_q, d_model)
    p["wdkv"], p["bdkv"] = lin(ks[4], ks[5], d_model, d_kv + d_qk_r)
    p["gkv"], p["bkv"] = jnp.ones((1, d_kv), f32), jnp.zeros((1, d_kv), f32)
    p["wukv"], p["bukv"] = lin(ks[6], ks[7], d_kv, d_model + n_heads * d_qk_n)
    p["wo"], p["bo"] = lin(ks[8], ks[9], d_model, d_model)
    return p


def mla_reference(x, p, n_heads):
    B, T, C = x.shape
    d_head = C // n_heads
    d_kv = C // 2
    d_qk_n = d_head // 2
    d_qk_r = d_head // 2
    c_q = _layernorm(x @ p["wdq"] + p["bdq"], p["gq"], p["bq"])
    q = (c_q @ p["wuq"] + p["buq"]).reshape(B, T, n_heads, d_head).transpose(0, 2, 1, 3)
    q_n, q_r = q[..., :d_qk_n], q[..., d_qk_n:]
    inv = (1.0 / 10000.0) ** (jnp.arange(0, d_qk_r, 2, dtype=jnp.float32) / d_qk_r)
    fr = jnp.outer(jnp.arange(n_heads, dtype=jnp.float32), inv)       # angle indexed by head
    cos, sin = jnp.cos(fr)[None, :, None, :], jnp.sin(fr)[None, :, None, :]
    x1, x2 = q_r[..., :d_qk_r // 2], q_r[..., d_qk_r // 2:]
    q_r = jnp.concatenate([x1 * cos + x2 * sin, -x1 * sin + x2 * cos], axis=-1)
    c_kv = x @ p["wdkv"] + p["bdkv"]
    kv_n = _layernorm(c_kv[..., :d_kv], p["gkv"], p["bkv"])
    k_r = jnp.broadcast_to(c_kv[..., d_kv:][:, None], (B, n_heads, T, d_qk_r))  # rotary == id
    kv = (kv_n @ p["wukv"] + p["bukv"]).reshape(B, T, n_heads, d_qk_n + d_head).transpose(0, 2, 1, 3)
    k_n, v = kv[..., :d_qk_n], kv[..., d_qk_n:]
    qc = jnp.concatenate([q_n, q_r], -1)
    kc = jnp.concatenate([k_n, k_r], -1)
    s = jnp.einsum("bhtd,bhsd->bhts", qc, kc) / math.sqrt(d_head)
    s = jnp.where(jnp.tril(jnp.ones((T, T), bool)), s, -jnp.inf)
    y = jnp.einsum("bhts,bhsd->bhtd", jax.nn.softmax(s, axis=-1), v)
    y = y.transpose(0, 2, 1, 3).reshape(B, T, C)
    return y @ p["wo"] + p["bo"]


if __name__ == "__main__":
    B, T = 2, 8
    d_model, n_heads = 64, 4

    key = jax.random.PRNGKey(0)
    kx, kp = jax.random.split(key)
    x = jax.random.normal(kx, (B, T, d_model), dtype=jnp.float32)
    params = init_params(kp, d_model, n_heads)

    fwd = jax.jit(functools.partial(mla_forward, n_heads=n_heads))
    out = jax.block_until_ready(fwd(x, params))

    assert out.shape == (B, T, d_model)
    assert bool(jnp.all(jnp.isfinite(out)))

    ref = mla_reference(x, params, n_heads)
    err = float(jnp.max(jnp.abs(out - ref)))
    assert err < 1e-1, f"mismatch vs reference: max abs err {err}"  # bf16 MXU tolerance

    print("KERNEL_OK")
</pallas_src>

<mosaic_0001>
module attributes {stable_mosaic.version = 11 : i64} {
  func.func @_mla_attn_kernel(%arg0: i32, %arg1: i32, %arg2: i32, %arg3: i32, %arg4: memref<1x1x8x8xbf16, #tpu.memory_space<vmem>>, %arg5: memref<1x1x8x8xbf16, #tpu.memory_space<vmem>>, %arg6: memref<1x1x8x8xbf16, #tpu.memory_space<vmem>>, %arg7: memref<1x8x8xbf16, #tpu.memory_space<vmem>>, %arg8: memref<1x1x8x16xbf16, #tpu.memory_space<vmem>>, %arg9: memref<16x64xbf16, #tpu.memory_space<vmem>>, %arg10: memref<1x64xf32, #tpu.memory_space<vmem>>, %arg11: memref<1x8x64xf32, #tpu.memory_space<vmem>>, %arg12: memref<8x1xf32, #tpu.memory_space<vmem>>, %arg13: memref<8x1xf32, #tpu.memory_space<vmem>>, %arg14: memref<8x16xf32, #tpu.memory_space<vmem>>, %arg15: memref<8x64xf32, #tpu.memory_space<vmem>>) attributes {dimension_semantics = [#tpu.dimension_semantics<parallel>, #tpu.dimension_semantics<parallel>, #tpu.dimension_semantics<arbitrary>, #tpu.dimension_semantics<arbitrary>], iteration_bounds = array<i64: 2, 1, 4, 1>, scalar_prefetch = 0 : i64, scratch_operands = 4 : i64, tpu.core_type = #tpu.core_type<tc>, window_params = [{transform_indices = @transform_0, window_bounds = array<i64: 1, 1, 8, 8>}, {transform_indices = @transform_1, window_bounds = array<i64: 1, 1, 8, 8>}, {transform_indices = @transform_2, window_bounds = array<i64: 1, 1, 8, 8>}, {transform_indices = @transform_3, window_bounds = array<i64: 1, 8, 8>}, {transform_indices = @transform_4, window_bounds = array<i64: 1, 1, 8, 16>}, {transform_indices = @transform_5, window_bounds = array<i64: 16, 64>}, {pipeline_mode = #tpu.pipeline_mode<synchronous>, transform_indices = @transform_6, window_bounds = array<i64: 1, 64>}, {transform_indices = @transform_7, window_bounds = array<i64: 1, 8, 64>}]} {
    %c0_i32 = arith.constant 0 : i32
    %0 = arith.cmpi eq, %arg3, %c0_i32 : i32
    %1 = arith.extui %0 : i1 to i32
    %c0_i32_0 = arith.constant 0 : i32
    %2 = arith.cmpi ne, %1, %c0_i32_0 : i32
    scf.if %2 {
      %cst = arith.constant -1.000000e+30 : f32
      %17 = vector.broadcast %cst : f32 to vector<8x1xf32>
      %c0 = arith.constant 0 : index
      %c0_8 = arith.constant 0 : index
      %18 = vector.load %arg12[%c0, %c0_8] : memref<8x1xf32, #tpu.memory_space<vmem>>, vector<8x1xf32>
      tpu.vector_store %arg12[%c0, %c0_8], %17 {strides = array<i32>} : memref<8x1xf32, #tpu.memory_space<vmem>>, vector<8x1xf32>,
      %cst_9 = arith.constant 0.000000e+00 : f32
      %19 = vector.broadcast %cst_9 : f32 to vector<8x1xf32>
      %c0_10 = arith.constant 0 : index
      %c0_11 = arith.constant 0 : index
      %20 = vector.load %arg13[%c0_10, %c0_11] : memref<8x1xf32, #tpu.memory_space<vmem>>, vector<8x1xf32>
      tpu.vector_store %arg13[%c0_10, %c0_11], %19 {strides = array<i32>} : memref<8x1xf32, #tpu.memory_space<vmem>>, vector<8x1xf32>,
      %cst_12 = arith.constant 0.000000e+00 : f32
      %21 = vector.broadcast %cst_12 : f32 to vector<8x16xf32>
      %c0_13 = arith.constant 0 : index
      %c0_14 = arith.constant 0 : index
      %22 = vector.load %arg14[%c0_13, %c0_14] : memref<8x16xf32, #tpu.memory_space<vmem>>, vector<8x16xf32>
      tpu.vector_store %arg14[%c0_13, %c0_14], %21 {strides = array<i32>} : memref<8x16xf32, #tpu.memory_space<vmem>>, vector<8x16xf32>,
    } else {
    }
    %c0_i32_1 = arith.constant 0 : i32
    %3 = arith.cmpi eq, %arg3, %c0_i32_1 : i32
    %c0_i32_2 = arith.constant 0 : i32
    %4 = arith.cmpi eq, %arg2, %c0_i32_2 : i32
    %5 = arith.andi %3, %4 : i1
    %6 = arith.extui %5 : i1 to i32
    %c0_i32_3 = arith.constant 0 : i32
    %7 = arith.cmpi ne, %6, %c0_i32_3 : i32
    scf.if %7 {
      %cst = arith.constant 0.000000e+00 : f32
      %17 = vector.broadcast %cst : f32 to vector<8x64xf32>
      %c0 = arith.constant 0 : index
      %c0_8 = arith.constant 0 : index
      %18 = vector.load %arg15[%c0, %c0_8] : memref<8x64xf32, #tpu.memory_space<vmem>>, vector<8x64xf32>
      tpu.vector_store %arg15[%c0, %c0_8], %17 {strides = array<i32>} : memref<8x64xf32, #tpu.memory_space<vmem>>, vector<8x64xf32>,
    } else {
    }
    %c8_i32 = arith.constant 8 : i32
    %8 = arith.muli %arg3, %c8_i32 : i32
    %c1_i32 = arith.constant 1 : i32
    %9 = arith.addi %arg1, %c1_i32 : i32
    %c8_i32_4 = arith.constant 8 : i32
    %10 = arith.muli %9, %c8_i32_4 : i32
    %11 = arith.cmpi slt, %8, %10 : i32
    %12 = arith.extui %11 : i1 to i32
    %c0_i32_5 = arith.constant 0 : i32
    %13 = arith.cmpi ne, %12, %c0_i32_5 : i32
    scf.if %13 {
      %c0 = arith.constant 0 : index
      %c0_8 = arith.constant 0 : index
      %c0_9 = arith.constant 0 : index
      %c0_10 = arith.constant 0 : index
      %17 = vector.load %arg4[%c0, %c0_8, %c0_9, %c0_10] : memref<1x1x8x8xbf16, #tpu.memory_space<vmem>>, vector<1x1x8x8xbf16>
      %18 = vector.shape_cast %17 : vector<1x1x8x8xbf16> to vector<8x8xbf16>
      %c0_11 = arith.constant 0 : index
      %c0_12 = arith.constant 0 : index
      %c0_13 = arith.constant 0 : index
      %c0_14 = arith.constant 0 : index
      %19 = vector.load %arg5[%c0_11, %c0_12, %c0_13, %c0_14] : memref<1x1x8x8xbf16, #tpu.memory_space<vmem>>, vector<1x1x8x8xbf16>
      %20 = vector.shape_cast %19 : vector<1x1x8x8xbf16> to vector<8x8xbf16>
      %c0_15 = arith.constant 0 : index
      %c0_16 = arith.constant 0 : index
      %c0_17 = arith.constant 0 : index
      %c0_18 = arith.constant 0 : index
      %21 = vector.load %arg6[%c0_15, %c0_16, %c0_17, %c0_18] : memref<1x1x8x8xbf16, #tpu.memory_space<vmem>>, vector<1x1x8x8xbf16>
      %22 = vector.shape_cast %21 : vector<1x1x8x8xbf16> to vector<8x8xbf16>
      %c0_19 = arith.constant 0 : index
      %c0_20 = arith.constant 0 : index
      %c0_21 = arith.constant 0 : index
      %23 = vector.load %arg7[%c0_19, %c0_20, %c0_21] : memref<1x8x8xbf16, #tpu.memory_space<vmem>>, vector<1x8x8xbf16>
      %24 = vector.shape_cast %23 : vector<1x8x8xbf16> to vector<8x8xbf16>
      %c0_22 = arith.constant 0 : index
      %c0_23 = arith.constant 0 : index
      %c0_24 = arith.constant 0 : index
      %c0_25 = arith.constant 0 : index
      %25 = vector.load %arg8[%c0_22, %c0_23, %c0_24, %c0_25] : memref<1x1x8x16xbf16, #tpu.memory_space<vmem>>, vector<1x1x8x16xbf16>
      %26 = vector.shape_cast %25 : vector<1x1x8x16xbf16> to vector<8x16xbf16>
      %cst = arith.constant dense<0.000000e+00> : vector<8x8xf32>
      %27 = tpu.matmul %18, %22, %cst {dimension_numbers = #tpu.dot_dimension_numbers<[1], [1], [0], [0], [0, 0, 1, 0], [], []>} : vector<8x8xbf16>, vector<8x8xbf16>, vector<8x8xf32> -> vector<8x8xf32>
      %cst_26 = arith.constant dense<0.000000e+00> : vector<8x8xf32>
      %28 = tpu.matmul %20, %24, %cst_26 {dimension_numbers = #tpu.dot_dimension_numbers<[1], [1], [0], [0], [0, 0, 1, 0], [], []>} : vector<8x8xbf16>, vector<8x8xbf16>, vector<8x8xf32> -> vector<8x8xf32>
      %29 = arith.addf %27, %28 : vector<8x8xf32>
      %cst_27 = arith.constant 2.500000e-01 : f32
      %30 = vector.broadcast %cst_27 : f32 to vector<8x8xf32>
      %31 = arith.mulf %29, %30 : vector<8x8xf32>
      %c8_i32_28 = arith.constant 8 : i32
      %32 = arith.muli %arg1, %c8_i32_28 : i32
      %33 = tpu.iota {dimensions = array<i32: 0>} : vector<8x8xi32>
      %34 = vector.broadcast %32 : i32 to vector<8x8xi32>
      %35 = arith.addi %34, %33 : vector<8x8xi32>
      %c8_i32_29 = arith.constant 8 : i32
      %36 = arith.muli %arg3, %c8_i32_29 : i32
      %37 = tpu.iota {dimensions = array<i32: 1>} : vector<8x8xi32>
      %38 = vector.broadcast %36 : i32 to vector<8x8xi32>
      %39 = arith.addi %38, %37 : vector<8x8xi32>
      %40 = arith.cmpi sle, %39, %35 : vector<8x8xi32>
      %cst_30 = arith.constant -1.000000e+30 : f32
      %41 = vector.broadcast %cst_30 : f32 to vector<8x8xf32>
      %42 = arith.select %40, %31, %41 : vector<8x8xi1>, vector<8x8xf32>
      %c0_31 = arith.constant 0 : index
      %c0_32 = arith.constant 0 : index
      %43 = vector.load %arg12[%c0_31, %c0_32] : memref<8x1xf32, #tpu.memory_space<vmem>>, vector<8x1xf32>
      %cst_33 = arith.constant dense<0xFF800000> : vector<8xf32>
      %44 = vector.multi_reduction <maximumf>, %42, %cst_33 [1] : vector<8x8xf32> to vector<8xf32>
      %45 = vector.shape_cast %44 : vector<8xf32> to vector<8x1xf32>
      %46 = arith.maximumf %43, %45 : vector<8x1xf32>
      %47 = arith.subf %43, %46 : vector<8x1xf32>
      %48 = math.exp %47 : vector<8x1xf32>
      %49 = vector.broadcast %46 : vector<8x1xf32> to vector<8x8xf32>
      %50 = arith.subf %42, %49 : vector<8x8xf32>
      %51 = math.exp %50 : vector<8x8xf32>
      %c0_34 = arith.constant 0 : index
      %c0_35 = arith.constant 0 : index
      %52 = vector.load %arg13[%c0_34, %c0_35] : memref<8x1xf32, #tpu.memory_space<vmem>>, vector<8x1xf32>
      %53 = arith.mulf %48, %52 : vector<8x1xf32>
      %cst_36 = arith.constant dense<0.000000e+00> : vector<8xf32>
      %54 = vector.multi_reduction <add>, %51, %cst_36 [1] : vector<8x8xf32> to vector<8xf32>
      %55 = vector.shape_cast %54 : vector<8xf32> to vector<8x1xf32>
      %56 = arith.addf %53, %55 : vector<8x1xf32>
      %c0_37 = arith.constant 0 : index
      %c0_38 = arith.constant 0 : index
      %57 = vector.load %arg13[%c0_37, %c0_38] : memref<8x1xf32, #tpu.memory_space<vmem>>, vector<8x1xf32>
      tpu.vector_store %arg13[%c0_37, %c0_38], %56 {strides = array<i32>} : memref<8x1xf32, #tpu.memory_space<vmem>>, vector<8x1xf32>,
      %c0_39 = arith.constant 0 : index
      %c0_40 = arith.constant 0 : index
      %58 = vector.load %arg14[%c0_39, %c0_40] : memref<8x16xf32, #tpu.memory_space<vmem>>, vector<8x16xf32>
      %59 = vector.broadcast %48 : vector<8x1xf32> to vector<8x16xf32>
      %60 = arith.mulf %59, %58 : vector<8x16xf32>
      %61 = arith.truncf %51 : vector<8x8xf32> to vector<8x8xbf16>
      %cst_41 = arith.constant dense<0.000000e+00> : vector<8x16xf32>
      %62 = tpu.matmul %61, %26, %cst_41 {dimension_numbers = #tpu.dot_dimension_numbers<[1], [0], [0], [1], [0, 0, 1, 1], [], []>} : vector<8x8xbf16>, vector<8x16xbf16>, vector<8x16xf32> -> vector<8x16xf32>
      %63 = arith.addf %60, %62 : vector<8x16xf32>
      %c0_42 = arith.constant 0 : index
      %c0_43 = arith.constant 0 : index
      %64 = vector.load %arg14[%c0_42, %c0_43] : memref<8x16xf32, #tpu.memory_space<vmem>>, vector<8x16xf32>
      tpu.vector_store %arg14[%c0_42, %c0_43], %63 {strides = array<i32>} : memref<8x16xf32, #tpu.memory_space<vmem>>, vector<8x16xf32>,
      %c0_44 = arith.constant 0 : index
      %c0_45 = arith.constant 0 : index
      %65 = vector.load %arg12[%c0_44, %c0_45] : memref<8x1xf32, #tpu.memory_space<vmem>>, vector<8x1xf32>
      tpu.vector_store %arg12[%c0_44, %c0_45], %46 {strides = array<i32>} : memref<8x1xf32, #tpu.memory_space<vmem>>, vector<8x1xf32>,
    } else {
    }
    %c0_i32_6 = arith.constant 0 : i32
    %14 = arith.cmpi eq, %arg3, %c0_i32_6 : i32
    %15 = arith.extui %14 : i1 to i32
    %c0_i32_7 = arith.constant 0 : i32
    %16 = arith.cmpi ne, %15, %c0_i32_7 : i32
    scf.if %16 {
      %c0 = arith.constant 0 : index
      %c0_8 = arith.constant 0 : index
      %17 = vector.load %arg14[%c0, %c0_8] : memref<8x16xf32, #tpu.memory_space<vmem>>, vector<8x16xf32>
      %c0_9 = arith.constant 0 : index
      %c0_10 = arith.constant 0 : index
      %18 = vector.load %arg13[%c0_9, %c0_10] : memref<8x1xf32, #tpu.memory_space<vmem>>, vector<8x1xf32>
      %19 = tpu.reciprocal %18 {approx = true} : vector<8x1xf32> -> vector<8x1xf32>
      %20 = vector.broadcast %19 : vector<8x1xf32> to vector<8x16xf32>
      %21 = arith.mulf %17, %20 : vector<8x16xf32>
      %c0_11 = arith.constant 0 : index
      %c0_12 = arith.constant 0 : index
      %22 = vector.load %arg15[%c0_11, %c0_12] : memref<8x64xf32, #tpu.memory_space<vmem>>, vector<8x64xf32>
      %23 = arith.truncf %21 : vector<8x16xf32> to vector<8x16xbf16>
      %c0_13 = arith.constant 0 : index
      %c0_14 = arith.constant 0 : index
      %24 = vector.load %arg9[%c0_13, %c0_14] : memref<16x64xbf16, #tpu.memory_space<vmem>>, vector<16x64xbf16>
      %cst = arith.constant dense<0.000000e+00> : vector<8x64xf32>
      %25 = tpu.matmul %23, %24, %cst {dimension_numbers = #tpu.dot_dimension_numbers<[1], [0], [0], [1], [0, 0, 1, 1], [], []>} : vector<8x16xbf16>, vector<16x64xbf16>, vector<8x64xf32> -> vector<8x64xf32>
      %26 = arith.addf %22, %25 : vector<8x64xf32>
      %c0_15 = arith.constant 0 : index
      %c0_16 = arith.constant 0 : index
      %27 = vector.load %arg15[%c0_15, %c0_16] : memref<8x64xf32, #tpu.memory_space<vmem>>, vector<8x64xf32>
      tpu.vector_store %arg15[%c0_15, %c0_16], %26 {strides = array<i32>} : memref<8x64xf32, #tpu.memory_space<vmem>>, vector<8x64xf32>,
      %c3_i32 = arith.constant 3 : i32
      %28 = arith.cmpi eq, %arg2, %c3_i32 : i32
      %29 = arith.extui %28 : i1 to i32
      %c0_i32_17 = arith.constant 0 : i32
      %30 = arith.cmpi ne, %29, %c0_i32_17 : i32
      scf.if %30 {
        %c0_18 = arith.constant 0 : index
        %c0_19 = arith.constant 0 : index
        %31 = vector.load %arg15[%c0_18, %c0_19] : memref<8x64xf32, #tpu.memory_space<vmem>>, vector<8x64xf32>
        %c0_20 = arith.constant 0 : index
        %c0_21 = arith.constant 0 : index
        %32 = vector.load %arg10[%c0_20, %c0_21] : memref<1x64xf32, #tpu.memory_space<vmem>>, vector<1x64xf32>
        %33 = vector.broadcast %32 : vector<1x64xf32> to vector<8x64xf32>
        %34 = arith.addf %31, %33 : vector<8x64xf32>
        %c0_22 = arith.constant 0 : index
        %c0_23 = arith.constant 0 : index
        %c0_24 = arith.constant 0 : index
        %35 = vector.load %arg11[%c0_22, %c0_23, %c0_24] : memref<1x8x64xf32, #tpu.memory_space<vmem>>, vector<1x8x64xf32>
        %36 = vector.shape_cast %35 : vector<1x8x64xf32> to vector<8x64xf32>
        %37 = vector.shape_cast %34 : vector<8x64xf32> to vector<1x8x64xf32>
        tpu.vector_store %arg11[%c0_22, %c0_23, %c0_24], %37 {strides = array<i32>} : memref<1x8x64xf32, #tpu.memory_space<vmem>>, vector<1x8x64xf32>,
      } else {
      }
    } else {
    }
    return
  }
  func.func @transform_0(%arg0: i32, %arg1: i32, %arg2: i32, %arg3: i32) -> (i32, i32, i32, i32) {
    %c0_i32 = arith.constant 0 : i32
    %c0_i32_0 = arith.constant 0 : i32
    return %arg0, %arg2, %arg1, %c0_i32 : i32, i32, i32, i32
  }
  func.func @transform_1(%arg0: i32, %arg1: i32, %arg2: i32, %arg3: i32) -> (i32, i32, i32, i32) {
    %c0_i32 = arith.constant 0 : i32
    %c0_i32_0 = arith.constant 0 : i32
    return %arg0, %arg2, %arg1, %c0_i32 : i32, i32, i32, i32
  }
  func.func @transform_2(%arg0: i32, %arg1: i32, %arg2: i32, %arg3: i32) -> (i32, i32, i32, i32) {
    %c0_i32 = arith.constant 0 : i32
    %c0_i32_0 = arith.constant 0 : i32
    return %arg0, %arg2, %arg3, %c0_i32 : i32, i32, i32, i32
  }
  func.func @transform_3(%arg0: i32, %arg1: i32, %arg2: i32, %arg3: i32) -> (i32, i32, i32) {
    %c0_i32 = arith.constant 0 : i32
    %c0_i32_0 = arith.constant 0 : i32
    return %arg0, %arg3, %c0_i32 : i32, i32, i32
  }
  func.func @transform_4(%arg0: i32, %arg1: i32, %arg2: i32, %arg3: i32) -> (i32, i32, i32, i32) {
    %c0_i32 = arith.constant 0 : i32
    %c0_i32_0 = arith.constant 0 : i32
    return %arg0, %arg2, %arg3, %c0_i32 : i32, i32, i32, i32
  }
  func.func @transform_5(%arg0: i32, %arg1: i32, %arg2: i32, %arg3: i32) -> (i32, i32) {
    %c0_i32 = arith.constant 0 : i32
    %c0_i32_0 = arith.constant 0 : i32
    return %arg2, %c0_i32 : i32, i32
  }
  func.func @transform_6(%arg0: i32, %arg1: i32, %arg2: i32, %arg3: i32) -> (i32, i32) {
    %c0_i32 = arith.constant 0 : i32
    %c0_i32_0 = arith.constant 0 : i32
    %c0_i32_1 = arith.constant 0 : i32
    return %c0_i32, %c0_i32_0 : i32, i32
  }
  func.func @transform_7(%arg0: i32, %arg1: i32, %arg2: i32, %arg3: i32) -> (i32, i32, i32) {
    %c0_i32 = arith.constant 0 : i32
    %c0_i32_0 = arith.constant 0 : i32
    return %arg0, %arg1, %c0_i32 : i32, i32, i32
  }
}

module attributes {stable_mosaic.version = 11 : i64} {
  func.func @_mla_proj_kernel(%arg0: i32, %arg1: i32, %arg2: memref<1x8x64xf32, #tpu.memory_space<vmem>>, %arg3: memref<64x21xbf16, #tpu.memory_space<vmem>>, %arg4: memref<1x21xf32, #tpu.memory_space<vmem>>, %arg5: memref<1x21xf32, #tpu.memory_space<vmem>>, %arg6: memref<1x21xf32, #tpu.memory_space<vmem>>, %arg7: memref<21x32xbf16, #tpu.memory_space<vmem>>, %arg8: memref<1x32xf32, #tpu.memory_space<vmem>>, %arg9: memref<21x32xbf16, #tpu.memory_space<vmem>>, %arg10: memref<1x32xf32, #tpu.memory_space<vmem>>, %arg11: memref<64x32xbf16, #tpu.memory_space<vmem>>, %arg12: memref<1x32xf32, #tpu.memory_space<vmem>>, %arg13: memref<64x8xbf16, #tpu.memory_space<vmem>>, %arg14: memref<1x8xf32, #tpu.memory_space<vmem>>, %arg15: memref<1x32xf32, #tpu.memory_space<vmem>>, %arg16: memref<1x32xf32, #tpu.memory_space<vmem>>, %arg17: memref<32x32xbf16, #tpu.memory_space<vmem>>, %arg18: memref<1x32xf32, #tpu.memory_space<vmem>>, %arg19: memref<32x64xbf16, #tpu.memory_space<vmem>>, %arg20: memref<1x64xf32, #tpu.memory_space<vmem>>, %arg21: memref<1x4x8x8xbf16, #tpu.memory_space<vmem>>, %arg22: memref<1x4x8x8xbf16, #tpu.memory_space<vmem>>, %arg23: memref<1x4x8x8xbf16, #tpu.memory_space<vmem>>, %arg24: memref<1x4x8x16xbf16, #tpu.memory_space<vmem>>, %arg25: memref<1x8x8xbf16, #tpu.memory_space<vmem>>) attributes {dimension_semantics = [#tpu.dimension_semantics<parallel>, #tpu.dimension_semantics<parallel>], iteration_bounds = array<i64: 2, 1>, scalar_prefetch = 0 : i64, scratch_operands = 0 : i64, tpu.core_type = #tpu.core_type<tc>, window_params = [{transform_indices = @transform_0, window_bounds = array<i64: 1, 8, 64>}, {pipeline_mode = #tpu.pipeline_mode<synchronous>, transform_indices = @transform_1, window_bounds = array<i64: 64, 21>}, {pipeline_mode = #tpu.pipeline_mode<synchronous>, transform_indices = @transform_2, window_bounds = array<i64: 1, 21>}, {pipeline_mode = #tpu.pipeline_mode<synchronous>, transform_indices = @transform_3, window_bounds = array<i64: 1, 21>}, {pipeline_mode = #tpu.pipeline_mode<synchronous>, transform_indices = @transform_4, window_bounds = array<i64: 1, 21>}, {pipeline_mode = #tpu.pipeline_mode<synchronous>, transform_indices = @transform_5, window_bounds = array<i64: 21, 32>}, {pipeline_mode = #tpu.pipeline_mode<synchronous>, transform_indices = @transform_6, window_bounds = array<i64: 1, 32>}, {pipeline_mode = #tpu.pipeline_mode<synchronous>, transform_indices = @transform_7, window_bounds = array<i64: 21, 32>}, {pipeline_mode = #tpu.pipeline_mode<synchronous>, transform_indices = @transform_8, window_bounds = array<i64: 1, 32>}, {pipeline_mode = #tpu.pipeline_mode<synchronous>, transform_indices = @transform_9, window_bounds = array<i64: 64, 32>}, {pipeline_mode = #tpu.pipeline_mode<synchronous>, transform_indices = @transform_10, window_bounds = array<i64: 1, 32>}, {pipeline_mode = #tpu.pipeline_mode<synchronous>, transform_indices = @transform_11, window_bounds = array<i64: 64, 8>}, {pipeline_mode = #tpu.pipeline_mode<synchronous>, transform_indices = @transform_12, window_bounds = array<i64: 1, 8>}, {pipeline_mode = #tpu.pipeline_mode<synchronous>, transform_indices = @transform_13, window_bounds = array<i64: 1, 32>}, {pipeline_mode = #tpu.pipeline_mode<synchronous>, transform_indices = @transform_14, window_bounds = array<i64: 1, 32>}, {pipeline_mode = #tpu.pipeline_mode<synchronous>, transform_indices = @transform_15, window_bounds = array<i64: 32, 32>}, {pipeline_mode = #tpu.pipeline_mode<synchronous>, transform_indices = @transform_16, window_bounds = array<i64: 1, 32>}, {pipeline_mode = #tpu.pipeline_mode<synchronous>, transform_indices = @transform_17, window_bounds = array<i64: 32, 64>}, {pipeline_mode = #tpu.pipeline_mode<synchronous>, transform_indices = @transform_18, window_bounds = array<i64: 1, 64>}, {transform_indices = @transform_19, window_bounds = array<i64: 1, 4, 8, 8>}, {transform_indices = @transform_20, window_bounds = array<i64: 1, 4, 8, 8>}, {transform_indices = @transform_21, window_bounds = array<i64: 1, 4, 8, 8>}, {transform_indices = @transform_22, window_bounds = array<i64: 1, 4, 8, 16>}, {transform_indices = @transform_23, window_bounds = array<i64: 1, 8, 8>}]} {
    %c0 = arith.constant 0 : index
    %c0_0 = arith.constant 0 : index
    %c0_1 = arith.constant 0 : index
    %0 = vector.load %arg2[%c0, %c0_0, %c0_1] : memref<1x8x64xf32, #tpu.memory_space<vmem>>, vector<1x8x64xf32>
    %1 = vector.shape_cast %0 : vector<1x8x64xf32> to vector<8x64xf32>
    %2 = arith.truncf %1 : vector<8x64xf32> to vector<8x64xbf16>
    %c0_2 = arith.constant 0 : index
    %c0_3 = arith.constant 0 : index
    %3 = vector.load %arg3[%c0_2, %c0_3] : memref<64x21xbf16, #tpu.memory_space<vmem>>, vector<64x21xbf16>
    %cst = arith.constant dense<0.000000e+00> : vector<8x21xf32>
    %4 = tpu.matmul %2, %3, %cst {dimension_numbers = #tpu.dot_dimension_numbers<[1], [0], [0], [1], [0, 0, 1, 1], [], []>} : vector<8x64xbf16>, vector<64x21xbf16>, vector<8x21xf32> -> vector<8x21xf32>
    %c0_4 = arith.constant 0 : index
    %c0_5 = arith.constant 0 : index
    %5 = vector.load %arg4[%c0_4, %c0_5] : memref<1x21xf32, #tpu.memory_space<vmem>>, vector<1x21xf32>
    %6 = vector.broadcast %5 : vector<1x21xf32> to vector<8x21xf32>
    %7 = arith.addf %4, %6 : vector<8x21xf32>
    %c0_6 = arith.constant 0 : index
    %c0_7 = arith.constant 0 : index
    %8 = vector.load %arg5[%c0_6, %c0_7] : memref<1x21xf32, #tpu.memory_space<vmem>>, vector<1x21xf32>
    %c0_8 = arith.constant 0 : index
    %c0_9 = arith.constant 0 : index
    %9 = vector.load %arg6[%c0_8, %c0_9] : memref<1x21xf32, #tpu.memory_space<vmem>>, vector<1x21xf32>
    %cst_10 = arith.constant dense<0.000000e+00> : vector<8xf32>
    %10 = vector.multi_reduction <add>, %7, %cst_10 [1] : vector<8x21xf32> to vector<8xf32>
    %11 = vector.shape_cast %10 : vector<8xf32> to vector<8x1xf32>
    %cst_11 = arith.constant 2.100000e+01 : f32
    %12 = vector.broadcast %cst_11 : f32 to vector<8x1xf32>
    %13 = arith.divf %11, %12 : vector<8x1xf32>
    %14 = vector.broadcast %13 : vector<8x1xf32> to vector<8x21xf32>
    %15 = arith.subf %7, %14 : vector<8x21xf32>
    %16 = arith.mulf %15, %15 : vector<8x21xf32>
    %cst_12 = arith.constant dense<0.000000e+00> : vector<8xf32>
    %17 = vector.multi_reduction <add>, %16, %cst_12 [1] : vector<8x21xf32> to vector<8xf32>
    %18 = vector.shape_cast %17 : vector<8xf32> to vector<8x1xf32>
    %cst_13 = arith.constant 2.100000e+01 : f32
    %19 = vector.broadcast %cst_13 : f32 to vector<8x1xf32>
    %20 = arith.divf %18, %19 : vector<8x1xf32>
    %21 = vector.broadcast %13 : vector<8x1xf32> to vector<8x21xf32>
    %22 = arith.subf %7, %21 : vector<8x21xf32>
    %cst_14 = arith.constant 9.99999974E-6 : f32
    %23 = vector.broadcast %cst_14 : f32 to vector<8x1xf32>
    %24 = arith.addf %20, %23 : vector<8x1xf32>
    %25 = math.rsqrt %24 : vector<8x1xf32>
    %26 = vector.broadcast %25 : vector<8x1xf32> to vector<8x21xf32>
    %27 = arith.mulf %22, %26 : vector<8x21xf32>
    %28 = vector.broadcast %8 : vector<1x21xf32> to vector<8x21xf32>
    %29 = arith.mulf %27, %28 : vector<8x21xf32>
    %30 = vector.broadcast %9 : vector<1x21xf32> to vector<8x21xf32>
    %31 = arith.addf %29, %30 : vector<8x21xf32>
    %32 = arith.truncf %31 : vector<8x21xf32> to vector<8x21xbf16>
    %c0_15 = arith.constant 0 : index
    %c0_16 = arith.constant 0 : index
    %33 = vector.load %arg7[%c0_15, %c0_16] : memref<21x32xbf16, #tpu.memory_space<vmem>>, vector<21x32xbf16>
    %cst_17 = arith.constant dense<0.000000e+00> : vector<8x32xf32>
    %34 = tpu.matmul %32, %33, %cst_17 {dimension_numbers = #tpu.dot_dimension_numbers<[1], [0], [0], [1], [0, 0, 1, 1], [], []>} : vector<8x21xbf16>, vector<21x32xbf16>, vector<8x32xf32> -> vector<8x32xf32>
    %c0_18 = arith.constant 0 : index
    %c0_19 = arith.constant 0 : index
    %35 = vector.load %arg8[%c0_18, %c0_19] : memref<1x32xf32, #tpu.memory_space<vmem>>, vector<1x32xf32>
    %36 = vector.broadcast %35 : vector<1x32xf32> to vector<8x32xf32>
    %37 = arith.addf %34, %36 : vector<8x32xf32>
    %c0_20 = arith.constant 0 : index
    %c0_21 = arith.constant 0 : index
    %38 = vector.load %arg9[%c0_20, %c0_21] : memref<21x32xbf16, #tpu.memory_space<vmem>>, vector<21x32xbf16>
    %cst_22 = arith.constant dense<0.000000e+00> : vector<8x32xf32>
    %39 = tpu.matmul %32, %38, %cst_22 {dimension_numbers = #tpu.dot_dimension_numbers<[1], [0], [0], [1], [0, 0, 1, 1], [], []>} : vector<8x21xbf16>, vector<21x32xbf16>, vector<8x32xf32> -> vector<8x32xf32>
    %c0_23 = arith.constant 0 : index
    %c0_24 = arith.constant 0 : index
    %40 = vector.load %arg10[%c0_23, %c0_24] : memref<1x32xf32, #tpu.memory_space<vmem>>, vector<1x32xf32>
    %41 = vector.broadcast %40 : vector<1x32xf32> to vector<8x32xf32>
    %42 = arith.addf %39, %41 : vector<8x32xf32>
    %c0_25 = arith.constant 0 : index
    %c0_26 = arith.constant 0 : index
    %43 = vector.load %arg11[%c0_25, %c0_26] : memref<64x32xbf16, #tpu.memory_space<vmem>>, vector<64x32xbf16>
    %cst_27 = arith.constant dense<0.000000e+00> : vector<8x32xf32>
    %44 = tpu.matmul %2, %43, %cst_27 {dimension_numbers = #tpu.dot_dimension_numbers<[1], [0], [0], [1], [0, 0, 1, 1], [], []>} : vector<8x64xbf16>, vector<64x32xbf16>, vector<8x32xf32> -> vector<8x32xf32>
    %c0_28 = arith.constant 0 : index
    %c0_29 = arith.constant 0 : index
    %45 = vector.load %arg12[%c0_28, %c0_29] : memref<1x32xf32, #tpu.memory_space<vmem>>, vector<1x32xf32>
    %46 = vector.broadcast %45 : vector<1x32xf32> to vector<8x32xf32>
    %47 = arith.addf %44, %46 : vector<8x32xf32>
    %c0_30 = arith.constant 0 : index
    %c0_31 = arith.constant 0 : index
    %48 = vector.load %arg13[%c0_30, %c0_31] : memref<64x8xbf16, #tpu.memory_space<vmem>>, vector<64x8xbf16>
    %cst_32 = arith.constant dense<0.000000e+00> : vector<8x8xf32>
    %49 = tpu.matmul %2, %48, %cst_32 {dimension_numbers = #tpu.dot_dimension_numbers<[1], [0], [0], [1], [0, 0, 1, 1], [], []>} : vector<8x64xbf16>, vector<64x8xbf16>, vector<8x8xf32> -> vector<8x8xf32>
    %c0_33 = arith.constant 0 : index
    %c0_34 = arith.constant 0 : index
    %50 = vector.load %arg14[%c0_33, %c0_34] : memref<1x8xf32, #tpu.memory_space<vmem>>, vector<1x8xf32>
    %51 = vector.broadcast %50 : vector<1x8xf32> to vector<8x8xf32>
    %52 = arith.addf %49, %51 : vector<8x8xf32>
    %c0_35 = arith.constant 0 : index
    %c0_36 = arith.constant 0 : index
    %53 = vector.load %arg15[%c0_35, %c0_36] : memref<1x32xf32, #tpu.memory_space<vmem>>, vector<1x32xf32>
    %c0_37 = arith.constant 0 : index
    %c0_38 = arith.constant 0 : index
    %54 = vector.load %arg16[%c0_37, %c0_38] : memref<1x32xf32, #tpu.memory_space<vmem>>, vector<1x32xf32>
    %cst_39 = arith.constant dense<0.000000e+00> : vector<8xf32>
    %55 = vector.multi_reduction <add>, %47, %cst_39 [1] : vector<8x32xf32> to vector<8xf32>
    %56 = vector.shape_cast %55 : vector<8xf32> to vector<8x1xf32>
    %cst_40 = arith.constant 3.200000e+01 : f32
    %57 = vector.broadcast %cst_40 : f32 to vector<8x1xf32>
    %58 = arith.divf %56, %57 : vector<8x1xf32>
    %59 = vector.broadcast %58 : vector<8x1xf32> to vector<8x32xf32>
    %60 = arith.subf %47, %59 : vector<8x32xf32>
    %61 = arith.mulf %60, %60 : vector<8x32xf32>
    %cst_41 = arith.constant dense<0.000000e+00> : vector<8xf32>
    %62 = vector.multi_reduction <add>, %61, %cst_41 [1] : vector<8x32xf32> to vector<8xf32>
    %63 = vector.shape_cast %62 : vector<8xf32> to vector<8x1xf32>
    %cst_42 = arith.constant 3.200000e+01 : f32
    %64 = vector.broadcast %cst_42 : f32 to vector<8x1xf32>
    %65 = arith.divf %63, %64 : vector<8x1xf32>
    %66 = vector.broadcast %58 : vector<8x1xf32> to vector<8x32xf32>
    %67 = arith.subf %47, %66 : vector<8x32xf32>
    %cst_43 = arith.constant 9.99999974E-6 : f32
    %68 = vector.broadcast %cst_43 : f32 to vector<8x1xf32>
    %69 = arith.addf %65, %68 : vector<8x1xf32>
    %70 = math.rsqrt %69 : vector<8x1xf32>
    %71 = vector.broadcast %70 : vector<8x1xf32> to vector<8x32xf32>
    %72 = arith.mulf %67, %71 : vector<8x32xf32>
    %73 = vector.broadcast %53 : vector<1x32xf32> to vector<8x32xf32>
    %74 = arith.mulf %72, %73 : vector<8x32xf32>
    %75 = vector.broadcast %54 : vector<1x32xf32> to vector<8x32xf32>
    %76 = arith.addf %74, %75 : vector<8x32xf32>
    %77 = arith.truncf %76 : vector<8x32xf32> to vector<8x32xbf16>
    %c0_44 = arith.constant 0 : index
    %c0_45 = arith.constant 0 : index
    %78 = vector.load %arg17[%c0_44, %c0_45] : memref<32x32xbf16, #tpu.memory_space<vmem>>, vector<32x32xbf16>
    %cst_46 = arith.constant dense<0.000000e+00> : vector<8x32xf32>
    %79 = tpu.matmul %77, %78, %cst_46 {dimension_numbers = #tpu.dot_dimension_numbers<[1], [0], [0], [1], [0, 0, 1, 1], [], []>} : vector<8x32xbf16>, vector<32x32xbf16>, vector<8x32xf32> -> vector<8x32xf32>
    %c0_47 = arith.constant 0 : index
    %c0_48 = arith.constant 0 : index
    %80 = vector.load %arg18[%c0_47, %c0_48] : memref<1x32xf32, #tpu.memory_space<vmem>>, vector<1x32xf32>
    %81 = vector.broadcast %80 : vector<1x32xf32> to vector<8x32xf32>
    %82 = arith.addf %79, %81 : vector<8x32xf32>
    %c0_49 = arith.constant 0 : index
    %c0_50 = arith.constant 0 : index
    %83 = vector.load %arg19[%c0_49, %c0_50] : memref<32x64xbf16, #tpu.memory_space<vmem>>, vector<32x64xbf16>
    %cst_51 = arith.constant dense<0.000000e+00> : vector<8x64xf32>
    %84 = tpu.matmul %77, %83, %cst_51 {dimension_numbers = #tpu.dot_dimension_numbers<[1], [0], [0], [1], [0, 0, 1, 1], [], []>} : vector<8x32xbf16>, vector<32x64xbf16>, vector<8x64xf32> -> vector<8x64xf32>
    %c0_52 = arith.constant 0 : index
    %c0_53 = arith.constant 0 : index
    %85 = vector.load %arg20[%c0_52, %c0_53] : memref<1x64xf32, #tpu.memory_space<vmem>>, vector<1x64xf32>
    %86 = vector.broadcast %85 : vector<1x64xf32> to vector<8x64xf32>
    %87 = arith.addf %84, %86 : vector<8x64xf32>
    %88 = arith.truncf %52 : vector<8x8xf32> to vector<8x8xbf16>
    %c0_54 = arith.constant 0 : index
    %c0_55 = arith.constant 0 : index
    %c0_56 = arith.constant 0 : index
    %89 = vector.load %arg25[%c0_54, %c0_55, %c0_56] : memref<1x8x8xbf16, #tpu.memory_space<vmem>>, vector<1x8x8xbf16>
    %90 = vector.shape_cast %89 : vector<1x8x8xbf16> to vector<8x8xbf16>
    %91 = vector.shape_cast %88 : vector<8x8xbf16> to vector<1x8x8xbf16>
    tpu.vector_store %arg25[%c0_54, %c0_55, %c0_56], %91 {strides = array<i32>} : memref<1x8x8xbf16, #tpu.memory_space<vmem>>, vector<1x8x8xbf16>,
    %92 = vector.extract_strided_slice %37 {offsets = [0, 0], sizes = [8, 8], strides = [1, 1]} : vector<8x32xf32> to vector<8x8xf32>
    %93 = arith.truncf %92 : vector<8x8xf32> to vector<8x8xbf16>
    %c0_57 = arith.constant 0 : index
    %c0_58 = arith.constant 0 : index
    %c0_59 = arith.constant 0 : index
    %c0_60 = arith.constant 0 : index
    %94 = vector.load %arg21[%c0_57, %c0_58, %c0_59, %c0_60] : memref<1x4x8x8xbf16, #tpu.memory_space<vmem>>, vector<1x1x8x8xbf16>
    %95 = vector.shape_cast %94 : vector<1x1x8x8xbf16> to vector<8x8xbf16>
    %96 = vector.shape_cast %93 : vector<8x8xbf16> to vector<1x1x8x8xbf16>
    tpu.vector_store %arg21[%c0_57, %c0_58, %c0_59, %c0_60], %96 {strides = array<i32>} : memref<1x4x8x8xbf16, #tpu.memory_space<vmem>>, vector<1x1x8x8xbf16>,
    %97 = vector.extract_strided_slice %42 {offsets = [0, 0], sizes = [8, 8], strides = [1, 1]} : vector<8x32xf32> to vector<8x8xf32>
    %98 = arith.truncf %97 : vector<8x8xf32> to vector<8x8xbf16>
    %c0_61 = arith.constant 0 : index
    %c0_62 = arith.constant 0 : index
    %c0_63 = arith.constant 0 : index
    %c0_64 = arith.constant 0 : index
    %99 = vector.load %arg22[%c0_61, %c0_62, %c0_63, %c0_64] : memref<1x4x8x8xbf16, #tpu.memory_space<vmem>>, vector<1x1x8x8xbf16>
    %100 = vector.shape_cast %99 : vector<1x1x8x8xbf16> to vector<8x8xbf16>
    %101 = vector.shape_cast %98 : vector<8x8xbf16> to vector<1x1x8x8xbf16>
    tpu.vector_store %arg22[%c0_61, %c0_62, %c0_63, %c0_64], %101 {strides = array<i32>} : memref<1x4x8x8xbf16, #tpu.memory_space<vmem>>, vector<1x1x8x8xbf16>,
    %102 = vector.extract_strided_slice %82 {offsets = [0, 0], sizes = [8, 8], strides = [1, 1]} : vector<8x32xf32> to vector<8x8xf32>
    %103 = arith.truncf %102 : vector<8x8xf32> to vector<8x8xbf16>
    %c0_65 = arith.constant 0 : index
    %c0_66 = arith.constant 0 : index
    %c0_67 = arith.constant 0 : index
    %c0_68 = arith.constant 0 : index
    %104 = vector.load %arg23[%c0_65, %c0_66, %c0_67, %c0_68] : memref<1x4x8x8xbf16, #tpu.memory_space<vmem>>, vector<1x1x8x8xbf16>
    %105 = vector.shape_cast %104 : vector<1x1x8x8xbf16> to vector<8x8xbf16>
    %106 = vector.shape_cast %103 : vector<8x8xbf16> to vector<1x1x8x8xbf16>
    tpu.vector_store %arg23[%c0_65, %c0_66, %c0_67, %c0_68], %106 {strides = array<i32>} : memref<1x4x8x8xbf16, #tpu.memory_space<vmem>>, vector<1x1x8x8xbf16>,
    %107 = vector.extract_strided_slice %87 {offsets = [0, 0], sizes = [8, 16], strides = [1, 1]} : vector<8x64xf32> to vector<8x16xf32>
    %108 = arith.truncf %107 : vector<8x16xf32> to vector<8x16xbf16>
    %c0_69 = arith.constant 0 : index
    %c0_70 = arith.constant 0 : index
    %c0_71 = arith.constant 0 : index
    %c0_72 = arith.constant 0 : index
    %109 = vector.load %arg24[%c0_69, %c0_70, %c0_71, %c0_72] : memref<1x4x8x16xbf16, #tpu.memory_space<vmem>>, vector<1x1x8x16xbf16>
    %110 = vector.shape_cast %109 : vector<1x1x8x16xbf16> to vector<8x16xbf16>
    %111 = vector.shape_cast %108 : vector<8x16xbf16> to vector<1x1x8x16xbf16>
    tpu.vector_store %arg24[%c0_69, %c0_70, %c0_71, %c0_72], %111 {strides = array<i32>} : memref<1x4x8x16xbf16, #tpu.memory_space<vmem>>, vector<1x1x8x16xbf16>,
    %112 = vector.extract_strided_slice %37 {offsets = [0, 8], sizes = [8, 8], strides = [1, 1]} : vector<8x32xf32> to vector<8x8xf32>
    %113 = arith.truncf %112 : vector<8x8xf32> to vector<8x8xbf16>
    %c0_73 = arith.constant 0 : index
    %c1 = arith.constant 1 : index
    %c0_74 = arith.constant 0 : index
    %c0_75 = arith.constant 0 : index
    %114 = vector.load %arg21[%c0_73, %c1, %c0_74, %c0_75] : memref<1x4x8x8xbf16, #tpu.memory_space<vmem>>, vector<1x1x8x8xbf16>
    %115 = vector.shape_cast %114 : vector<1x1x8x8xbf16> to vector<8x8xbf16>
    %116 = vector.shape_cast %113 : vector<8x8xbf16> to vector<1x1x8x8xbf16>
    tpu.vector_store %arg21[%c0_73, %c1, %c0_74, %c0_75], %116 {strides = array<i32>} : memref<1x4x8x8xbf16, #tpu.memory_space<vmem>>, vector<1x1x8x8xbf16>,
    %117 = vector.extract_strided_slice %42 {offsets = [0, 8], sizes = [8, 8], strides = [1, 1]} : vector<8x32xf32> to vector<8x8xf32>
    %118 = arith.truncf %117 : vector<8x8xf32> to vector<8x8xbf16>
    %c0_76 = arith.constant 0 : index
    %c1_77 = arith.constant 1 : index
    %c0_78 = arith.constant 0 : index
    %c0_79 = arith.constant 0 : index
    %119 = vector.load %arg22[%c0_76, %c1_77, %c0_78, %c0_79] : memref<1x4x8x8xbf16, #tpu.memory_space<vmem>>, vector<1x1x8x8xbf16>
    %120 = vector.shape_cast %119 : vector<1x1x8x8xbf16> to vector<8x8xbf16>
    %121 = vector.shape_cast %118 : vector<8x8xbf16> to vector<1x1x8x8xbf16>
    tpu.vector_store %arg22[%c0_76, %c1_77, %c0_78, %c0_79], %121 {strides = array<i32>} : memref<1x4x8x8xbf16, #tpu.memory_space<vmem>>, vector<1x1x8x8xbf16>,
    %122 = vector.extract_strided_slice %82 {offsets = [0, 8], sizes = [8, 8], strides = [1, 1]} : vector<8x32xf32> to vector<8x8xf32>
    %123 = arith.truncf %122 : vector<8x8xf32> to vector<8x8xbf16>
    %c0_80 = arith.constant 0 : index
    %c1_81 = arith.constant 1 : index
    %c0_82 = arith.constant 0 : index
    %c0_83 = arith.constant 0 : index
    %124 = vector.load %arg23[%c0_80, %c1_81, %c0_82, %c0_83] : memref<1x4x8x8xbf16, #tpu.memory_space<vmem>>, vector<1x1x8x8xbf16>
    %125 = vector.shape_cast %124 : vector<1x1x8x8xbf16> to vector<8x8xbf16>
    %126 = vector.shape_cast %123 : vector<8x8xbf16> to vector<1x1x8x8xbf16>
    tpu.vector_store %arg23[%c0_80, %c1_81, %c0_82, %c0_83], %126 {strides = array<i32>} : memref<1x4x8x8xbf16, #tpu.memory_space<vmem>>, vector<1x1x8x8xbf16>,
    %127 = vector.extract_strided_slice %87 {offsets = [0, 16], sizes = [8, 16], strides = [1, 1]} : vector<8x64xf32> to vector<8x16xf32>
    %128 = arith.truncf %127 : vector<8x16xf32> to vector<8x16xbf16>
    %c0_84 = arith.constant 0 : index
    %c1_85 = arith.constant 1 : index
    %c0_86 = arith.constant 0 : index
    %c0_87 = arith.constant 0 : index
    %129 = vector.load %arg24[%c0_84, %c1_85, %c0_86, %c0_87] : memref<1x4x8x16xbf16, #tpu.memory_space<vmem>>, vector<1x1x8x16xbf16>
    %130 = vector.shape_cast %129 : vector<1x1x8x16xbf16> to vector<8x16xbf16>
    %131 = vector.shape_cast %128 : vector<8x16xbf16> to vector<1x1x8x16xbf16>
    tpu.vector_store %arg24[%c0_84, %c1_85, %c0_86, %c0_87], %131 {strides = array<i32>} : memref<1x4x8x16xbf16, #tpu.memory_space<vmem>>, vector<1x1x8x16xbf16>,
    %132 = vector.extract_strided_slice %37 {offsets = [0, 16], sizes = [8, 8], strides = [1, 1]} : vector<8x32xf32> to vector<8x8xf32>
    %133 = arith.truncf %132 : vector<8x8xf32> to vector<8x8xbf16>
    %c0_88 = arith.constant 0 : index
    %c2 = arith.constant 2 : index
    %c0_89 = arith.constant 0 : index
    %c0_90 = arith.constant 0 : index
    %134 = vector.load %arg21[%c0_88, %c2, %c0_89, %c0_90] : memref<1x4x8x8xbf16, #tpu.memory_space<vmem>>, vector<1x1x8x8xbf16>
    %135 = vector.shape_cast %134 : vector<1x1x8x8xbf16> to vector<8x8xbf16>
    %136 = vector.shape_cast %133 : vector<8x8xbf16> to vector<1x1x8x8xbf16>
    tpu.vector_store %arg21[%c0_88, %c2, %c0_89, %c0_90], %136 {strides = array<i32>} : memref<1x4x8x8xbf16, #tpu.memory_space<vmem>>, vector<1x1x8x8xbf16>,
    %137 = vector.extract_strided_slice %42 {offsets = [0, 16], sizes = [8, 8], strides = [1, 1]} : vector<8x32xf32> to vector<8x8xf32>
    %138 = arith.truncf %137 : vector<8x8xf32> to vector<8x8xbf16>
    %c0_91 = arith.constant 0 : index
    %c2_92 = arith.constant 2 : index
    %c0_93 = arith.constant 0 : index
    %c0_94 = arith.constant 0 : index
    %139 = vector.load %arg22[%c0_91, %c2_92, %c0_93, %c0_94] : memref<1x4x8x8xbf16, #tpu.memory_space<vmem>>, vector<1x1x8x8xbf16>
    %140 = vector.shape_cast %139 : vector<1x1x8x8xbf16> to vector<8x8xbf16>
    %141 = vector.shape_cast %138 : vector<8x8xbf16> to vector<1x1x8x8xbf16>
    tpu.vector_store %arg22[%c0_91, %c2_92, %c0_93, %c0_94], %141 {strides = array<i32>} : memref<1x4x8x8xbf16, #tpu.memory_space<vmem>>, vector<1x1x8x8xbf16>,
    %142 = vector.extract_strided_slice %82 {offsets = [0, 16], sizes = [8, 8], strides = [1, 1]} : vector<8x32xf32> to vector<8x8xf32>
    %143 = arith.truncf %142 : vector<8x8xf32> to vector<8x8xbf16>
    %c0_95 = arith.constant 0 : index
    %c2_96 = arith.constant 2 : index
    %c0_97 = arith.constant 0 : index
    %c0_98 = arith.constant 0 : index
    %144 = vector.load %arg23[%c0_95, %c2_96, %c0_97, %c0_98] : memref<1x4x8x8xbf16, #tpu.memory_space<vmem>>, vector<1x1x8x8xbf16>
    %145 = vector.shape_cast %144 : vector<1x1x8x8xbf16> to vector<8x8xbf16>
    %146 = vector.shape_cast %143 : vector<8x8xbf16> to vector<1x1x8x8xbf16>
    tpu.vector_store %arg23[%c0_95, %c2_96, %c0_97, %c0_98], %146 {strides = array<i32>} : memref<1x4x8x8xbf16, #tpu.memory_space<vmem>>, vector<1x1x8x8xbf16>,
    %147 = vector.extract_strided_slice %87 {offsets = [0, 32], sizes = [8, 16], strides = [1, 1]} : vector<8x64xf32> to vector<8x16xf32>
    %148 = arith.truncf %147 : vector<8x16xf32> to vector<8x16xbf16>
    %c0_99 = arith.constant 0 : index
    %c2_100 = arith.constant 2 : index
    %c0_101 = arith.constant 0 : index
    %c0_102 = arith.constant 0 : index
    %149 = vector.load %arg24[%c0_99, %c2_100, %c0_101, %c0_102] : memref<1x4x8x16xbf16, #tpu.memory_space<vmem>>, vector<1x1x8x16xbf16>
    %150 = vector.shape_cast %149 : vector<1x1x8x16xbf16> to vector<8x16xbf16>
    %151 = vector.shape_cast %148 : vector<8x16xbf16> to vector<1x1x8x16xbf16>
    tpu.vector_store %arg24[%c0_99, %c2_100, %c0_101, %c0_102], %151 {strides = array<i32>} : memref<1x4x8x16xbf16, #tpu.memory_space<vmem>>, vector<1x1x8x16xbf16>,
    %152 = vector.extract_strided_slice %37 {offsets = [0, 24], sizes = [8, 8], strides = [1, 1]} : vector<8x32xf32> to vector<8x8xf32>
    %153 = arith.truncf %152 : vector<8x8xf32> to vector<8x8xbf16>
    %c0_103 = arith.constant 0 : index
    %c3 = arith.constant 3 : index
    %c0_104 = arith.constant 0 : index
    %c0_105 = arith.constant 0 : index
    %154 = vector.load %arg21[%c0_103, %c3, %c0_104, %c0_105] : memref<1x4x8x8xbf16, #tpu.memory_space<vmem>>, vector<1x1x8x8xbf16>
    %155 = vector.shape_cast %154 : vector<1x1x8x8xbf16> to vector<8x8xbf16>
    %156 = vector.shape_cast %153 : vector<8x8xbf16> to vector<1x1x8x8xbf16>
    tpu.vector_store %arg21[%c0_103, %c3, %c0_104, %c0_105], %156 {strides = array<i32>} : memref<1x4x8x8xbf16, #tpu.memory_space<vmem>>, vector<1x1x8x8xbf16>,
    %157 = vector.extract_strided_slice %42 {offsets = [0, 24], sizes = [8, 8], strides = [1, 1]} : vector<8x32xf32> to vector<8x8xf32>
    %158 = arith.truncf %157 : vector<8x8xf32> to vector<8x8xbf16>
    %c0_106 = arith.constant 0 : index
    %c3_107 = arith.constant 3 : index
    %c0_108 = arith.constant 0 : index
    %c0_109 = arith.constant 0 : index
    %159 = vector.load %arg22[%c0_106, %c3_107, %c0_108, %c0_109] : memref<1x4x8x8xbf16, #tpu.memory_space<vmem>>, vector<1x1x8x8xbf16>
    %160 = vector.shape_cast %159 : vector<1x1x8x8xbf16> to vector<8x8xbf16>
    %161 = vector.shape_cast %158 : vector<8x8xbf16> to vector<1x1x8x8xbf16>
    tpu.vector_store %arg22[%c0_106, %c3_107, %c0_108, %c0_109], %161 {strides = array<i32>} : memref<1x4x8x8xbf16, #tpu.memory_space<vmem>>, vector<1x1x8x8xbf16>,
    %162 = vector.extract_strided_slice %82 {offsets = [0, 24], sizes = [8, 8], strides = [1, 1]} : vector<8x32xf32> to vector<8x8xf32>
    %163 = arith.truncf %162 : vector<8x8xf32> to vector<8x8xbf16>
    %c0_110 = arith.constant 0 : index
    %c3_111 = arith.constant 3 : index
    %c0_112 = arith.constant 0 : index
    %c0_113 = arith.constant 0 : index
    %164 = vector.load %arg23[%c0_110, %c3_111, %c0_112, %c0_113] : memref<1x4x8x8xbf16, #tpu.memory_space<vmem>>, vector<1x1x8x8xbf16>
    %165 = vector.shape_cast %164 : vector<1x1x8x8xbf16> to vector<8x8xbf16>
    %166 = vector.shape_cast %163 : vector<8x8xbf16> to vector<1x1x8x8xbf16>
    tpu.vector_store %arg23[%c0_110, %c3_111, %c0_112, %c0_113], %166 {strides = array<i32>} : memref<1x4x8x8xbf16, #tpu.memory_space<vmem>>, vector<1x1x8x8xbf16>,
    %167 = vector.extract_strided_slice %87 {offsets = [0, 48], sizes = [8, 16], strides = [1, 1]} : vector<8x64xf32> to vector<8x16xf32>
    %168 = arith.truncf %167 : vector<8x16xf32> to vector<8x16xbf16>
    %c0_114 = arith.constant 0 : index
    %c3_115 = arith.constant 3 : index
    %c0_116 = arith.constant 0 : index
    %c0_117 = arith.constant 0 : index
    %169 = vector.load %arg24[%c0_114, %c3_115, %c0_116, %c0_117] : memref<1x4x8x16xbf16, #tpu.memory_space<vmem>>, vector<1x1x8x16xbf16>
    %170 = vector.shape_cast %169 : vector<1x1x8x16xbf16> to vector<8x16xbf16>
    %171 = vector.shape_cast %168 : vector<8x16xbf16> to vector<1x1x8x16xbf16>
    tpu.vector_store %arg24[%c0_114, %c3_115, %c0_116, %c0_117], %171 {strides = array<i32>} : memref<1x4x8x16xbf16, #tpu.memory_space<vmem>>, vector<1x1x8x16xbf16>,
    return
  }
  func.func @transform_0(%arg0: i32, %arg1: i32) -> (i32, i32, i32) {
    %c0_i32 = arith.constant 0 : i32
    %c0_i32_0 = arith.constant 0 : i32
    return %arg0, %arg1, %c0_i32 : i32, i32, i32
  }
  func.func @transform_1(%arg0: i32, %arg1: i32) -> (i32, i32) {
    %c0_i32 = arith.constant 0 : i32
    %c0_i32_0 = arith.constant 0 : i32
    %c0_i32_1 = arith.constant 0 : i32
    return %c0_i32, %c0_i32_0 : i32, i32
  }
  func.func @transform_2(%arg0: i32, %arg1: i32) -> (i32, i32) {
    %c0_i32 = arith.constant 0 : i32
    %c0_i32_0 = arith.constant 0 : i32
    %c0_i32_1 = arith.constant 0 : i32
    return %c0_i32, %c0_i32_0 : i32, i32
  }
  func.func @transform_3(%arg0: i32, %arg1: i32) -> (i32, i32) {
    %c0_i32 = arith.constant 0 : i32
    %c0_i32_0 = arith.constant 0 : i32
    %c0_i32_1 = arith.constant 0 : i32
    return %c0_i32, %c0_i32_0 : i32, i32
  }
  func.func @transform_4(%arg0: i32, %arg1: i32) -> (i32, i32) {
    %c0_i32 = arith.constant 0 : i32
    %c0_i32_0 = arith.constant 0 : i32
    %c0_i32_1 = arith.constant 0 : i32
    return %c0_i32, %c0_i32_0 : i32, i32
  }
  func.func @transform_5(%arg0: i32, %arg1: i32) -> (i32, i32) {
    %c0_i32 = arith.constant 0 : i32
    %c0_i32_0 = arith.constant 0 : i32
    %c0_i32_1 = arith.constant 0 : i32
    return %c0_i32, %c0_i32_0 : i32, i32
  }
  func.func @transform_6(%arg0: i32, %arg1: i32) -> (i32, i32) {
    %c0_i32 = arith.constant 0 : i32
    %c0_i32_0 = arith.constant 0 : i32
    %c0_i32_1 = arith.constant 0 : i32
    return %c0_i32, %c0_i32_0 : i32, i32
  }
  func.func @transform_7(%arg0: i32, %arg1: i32) -> (i32, i32) {
    %c0_i32 = arith.constant 0 : i32
    %c0_i32_0 = arith.constant 0 : i32
    %c0_i32_1 = arith.constant 0 : i32
    return %c0_i32, %c0_i32_0 : i32, i32
  }
  func.func @transform_8(%arg0: i32, %arg1: i32) -> (i32, i32) {
    %c0_i32 = arith.constant 0 : i32
    %c0_i32_0 = arith.constant 0 : i32
    %c0_i32_1 = arith.constant 0 : i32
    return %c0_i32, %c0_i32_0 : i32, i32
  }
  func.func @transform_9(%arg0: i32, %arg1: i32) -> (i32, i32) {
    %c0_i32 = arith.constant 0 : i32
    %c0_i32_0 = arith.constant 0 : i32
    %c0_i32_1 = arith.constant 0 : i32
    return %c0_i32, %c0_i32_0 : i32, i32
  }
  func.func @transform_10(%arg0: i32, %arg1: i32) -> (i32, i32) {
    %c0_i32 = arith.constant 0 : i32
    %c0_i32_0 = arith.constant 0 : i32
    %c0_i32_1 = arith.constant 0 : i32
    return %c0_i32, %c0_i32_0 : i32, i32
  }
  func.func @transform_11(%arg0: i32, %arg1: i32) -> (i32, i32) {
    %c0_i32 = arith.constant 0 : i32
    %c0_i32_0 = arith.constant 0 : i32
    %c0_i32_1 = arith.constant 0 : i32
    return %c0_i32, %c0_i32_0 : i32, i32
  }
  func.func @transform_12(%arg0: i32, %arg1: i32) -> (i32, i32) {
    %c0_i32 = arith.constant 0 : i32
    %c0_i32_0 = arith.constant 0 : i32
    %c0_i32_1 = arith.constant 0 : i32
    return %c0_i32, %c0_i32_0 : i32, i32
  }
  func.func @transform_13(%arg0: i32, %arg1: i32) -> (i32, i32) {
    %c0_i32 = arith.constant 0 : i32
    %c0_i32_0 = arith.constant 0 : i32
    %c0_i32_1 = arith.constant 0 : i32
    return %c0_i32, %c0_i32_0 : i32, i32
  }
  func.func @transform_14(%arg0: i32, %arg1: i32) -> (i32, i32) {
    %c0_i32 = arith.constant 0 : i32
    %c0_i32_0 = arith.constant 0 : i32
    %c0_i32_1 = arith.constant 0 : i32
    return %c0_i32, %c0_i32_0 : i32, i32
  }
  func.func @transform_15(%arg0: i32, %arg1: i32) -> (i32, i32) {
    %c0_i32 = arith.constant 0 : i32
    %c0_i32_0 = arith.constant 0 : i32
    %c0_i32_1 = arith.constant 0 : i32
    return %c0_i32, %c0_i32_0 : i32, i32
  }
  func.func @transform_16(%arg0: i32, %arg1: i32) -> (i32, i32) {
    %c0_i32 = arith.constant 0 : i32
    %c0_i32_0 = arith.constant 0 : i32
    %c0_i32_1 = arith.constant 0 : i32
    return %c0_i32, %c0_i32_0 : i32, i32
  }
  func.func @transform_17(%arg0: i32, %arg1: i32) -> (i32, i32) {
    %c0_i32 = arith.constant 0 : i32
    %c0_i32_0 = arith.constant 0 : i32
    %c0_i32_1 = arith.constant 0 : i32
    return %c0_i32, %c0_i32_0 : i32, i32
  }
  func.func @transform_18(%arg0: i32, %arg1: i32) -> (i32, i32) {
    %c0_i32 = arith.constant 0 : i32
    %c0_i32_0 = arith.constant 0 : i32
    %c0_i32_1 = arith.constant 0 : i32
    return %c0_i32, %c0_i32_0 : i32, i32
  }
  func.func @transform_19(%arg0: i32, %arg1: i32) -> (i32, i32, i32, i32) {
    %c0_i32 = arith.constant 0 : i32
    %c0_i32_0 = arith.constant 0 : i32
    %c0_i32_1 = arith.constant 0 : i32
    return %arg0, %c0_i32, %arg1, %c0_i32_0 : i32, i32, i32, i32
  }
  func.func @transform_20(%arg0: i32, %arg1: i32) -> (i32, i32, i32, i32) {
    %c0_i32 = arith.constant 0 : i32
    %c0_i32_0 = arith.constant 0 : i32
    %c0_i32_1 = arith.constant 0 : i32
    return %arg0, %c0_i32, %arg1, %c0_i32_0 : i32, i32, i32, i32
  }
  func.func @transform_21(%arg0: i32, %arg1: i32) -> (i32, i32, i32, i32) {
    %c0_i32 = arith.constant 0 : i32
    %c0_i32_0 = arith.constant 0 : i32
    %c0_i32_1 = arith.constant 0 : i32
    return %arg0, %c0_i32, %arg1, %c0_i32_0 : i32, i32, i32, i32
  }
  func.func @transform_22(%arg0: i32, %arg1: i32) -> (i32, i32, i32, i32) {
    %c0_i32 = arith.constant 0 : i32
    %c0_i32_0 = arith.constant 0 : i32
    %c0_i32_1 = arith.constant 0 : i32
    return %arg0, %c0_i32, %arg1, %c0_i32_0 : i32, i32, i32, i32
  }
  func.func @transform_23(%arg0: i32, %arg1: i32) -> (i32, i32, i32) {
    %c0_i32 = arith.constant 0 : i32
    %c0_i32_0 = arith.constant 0 : i32
    return %arg0, %arg1, %c0_i32 : i32, i32, i32
  }
}

</mosaic_0001>

<llo_original>
// kernel: mla_forward.3
$region0: #{mla_forward.3}
  #allocation0 [shape = 'u32[]', space=smem, size = 0x4, offset = 0x4, fixed_abs, tag = 'smem constant byte address 0x4 - core index']
  #allocation1 [shape = 'u32[144,128]{1,0:T(1,128)}', space=vmem, size = 0x12000, scoped, tag = 'internal scratch']
  #allocation2 [shape = 'f32[8,1]{1,0:T(8,128)}', space=vmem, size = 0x1000, scoped, tag = 'scratch operand']
  #allocation3 [shape = 'f32[8,1]{1,0:T(8,128)}', space=vmem, size = 0x1000, scoped, tag = 'scratch operand']
  #allocation4 [shape = 'f32[8,16]{1,0:T(8,128)}', space=vmem, size = 0x1000, scoped, tag = 'scratch operand']
  #allocation5 [shape = 'f32[8,64]{1,0:T(8,128)}', space=vmem, size = 0x1000, scoped, tag = 'scratch operand']
  %s0 = inlined_call_operand.vmem [shape: bf16[2,4,8,8], index: 0, kind: input, shape index: {}]
  %s1 = inlined_call_operand.vmem [shape: bf16[2,4,8,8], index: 1, kind: input, shape index: {}]
  %s2 = inlined_call_operand.vmem [shape: bf16[2,4,8,8], index: 2, kind: input, shape index: {}]
  %s3 = inlined_call_operand.vmem [shape: bf16[2,8,8], index: 3, kind: input, shape index: {}]
  %s4 = inlined_call_operand.vmem [shape: bf16[2,4,8,16], index: 4, kind: input, shape index: {}]
  %s5 = inlined_call_operand.vmem [shape: bf16[64,64], index: 5, kind: input, shape index: {}]
  %s6 = inlined_call_operand.vmem [shape: f32[1,64], index: 6, kind: input, shape index: {}]
  %s7 = inlined_call_operand.hbm [shape: f32[2,8,64], index: 7, kind: output, shape index: {}]
  %s8 = sld [smem:[#allocation0]]
  $region81: #{mla_forward.3} parent=0
    _
  %s10 = ssub.s32 1, %s8
  %s11 = scalar_select 0, %s10, %s8
  $region1: #{mla_forward.3} parent=0
    #allocation6 [shape = 'u8[8192]{0}', space=vmem, size = 0x2000, scoped, tag = 'output window, operand 0']
    #allocation7 [shape = 's32[2]{0}', space=sflag, size = 0x8, scoped, tag = 'scoped memory for mla_forward.3']
    %12 = vsyncpa [#allocation7], 0
    %s13 = scalar_lea.sflag [#allocation7], 1
    %14 = vsyncpa %s13, 0
    loop: start=0, step=1, limit=10
    $region2: #{mla_forward.3} parent=1 // loop_pre_header
      _
    $region3: #{mla_forward.3} parent=1 // loop_header
      %s16 = sphi 0, %s20
      %p17 = scmp.ge.s32.totalorder %s16, 10
      %s23 = sphi 0, %s49
      %s24 = sphi 0, %s45
      %s25 = sphi 0, %s41
      %s26 = sphi 0, %s37
      %s27 = sphi 0, %s23
      %s28 = sphi 0, %s24
      %s29 = sphi 0, %s25
      %s30 = sphi 0, %s26
      %s31 = sphi 0, %s27
      %s32 = sphi 0, %s28
      %s33 = sphi 0, %s29
      %s34 = sphi 0, %s30
      %s56 = sphi 0, %s58
      %s59 = sphi 0, %s56
      %s60 = sphi 0, %s59
      %s76 = sphi 0, %s60
      %s86 = sphi 0, %s88
      %s89 = sphi 0, %s86
      %s90 = sphi 0, %s89
      %s106 = sphi 0, %s90
      %s116 = sphi 0, %s118
      %s119 = sphi 0, %s116
      %s120 = sphi 0, %s119
      %s136 = sphi 0, %s120
      %s144 = sphi 0, %s146
      %s147 = sphi 0, %s144
      %s148 = sphi 0, %s147
      %s164 = sphi 0, %s148
      %s174 = sphi 0, %s176
      %s177 = sphi 0, %s174
      %s178 = sphi 0, %s177
      %s194 = sphi 0, %s178
      %s200 = sphi 0, %s202
      %s203 = sphi 0, %s200
      %s204 = sphi 0, %s203
      %s220 = sphi 0, %s204
      %s224 = sphi 0, %s224
      %s226 = sphi 0, %s224
      %s227 = sphi 0, %s226
      %s241 = sphi 0, %s227
      %s249 = sphi 0, %s251
      %s252 = sphi 0, %s249
      %s253 = sphi 0, %s252
      %s269 = sphi 0, %s253
    $region4: #{mla_forward.3} parent=1 // loop_header_branch
      %19 = sbr.rel (%p17) target = $region8
    $region5: #{mla_forward.3} parent=1 // loop_body
      %s21 = ssub.s32 %s16, 1
      %s22 = ssub.s32 %s16, 2
      %s35 = sadd.s32 1, %s26
      %p36 = scmp.ge.s32.totalorder %s35, 1
      %s37 = scalar_select %p36, 0, %s35
      %s38 = sadd.s32 1, %s25
      %s39 = scalar_select %p36, %s38, %s25
      %p40 = scmp.ge.s32.totalorder %s39, 4
      %s41 = scalar_select %p40, 0, %s39
      %s42 = sadd.s32 1, %s24
      %s43 = scalar_select %p40, %s42, %s24
      %p44 = scmp.ge.s32.totalorder %s43, 1
      %s45 = scalar_select %p44, 0, %s43
      %s46 = sadd.s32 1, %s23
      %s47 = scalar_select %p44, %s46, %s23
      %p48 = scmp.ge.s32.totalorder %s47, 2
      %s49 = scalar_select %p48, 0, %s47
      %s50 = ssub.s32 %s23, %s49
      %s51 = ssub.s32 %s25, %s41
      %s52 = sor.u32 %s50, %s51
      %s53 = ssub.s32 %s24, %s45
      %s54 = sor.u32 %s52, %s53
      %p55 = scmp.eq.s32.totalorder %s54, 0
      %s57 = sadd.s32 %s56, 1
      %s58 = scalar_select %p55, %s56, %s57
      %p61 = pneg %p55
      %p62 = scmp.eq.s32.totalorder %s16, 7
      %p63 = por %p61, %p62
      %p64 = scmp.ne.s32.totalorder %s56, %s59
      %p65 = scmp.eq.s32.totalorder %s16, 0
      %p66 = por %p64, %p65
      %p67 = scmp.ne.s32.totalorder %s56, %s59
      %p68 = scmp.eq.s32.totalorder %s21, 7
      %p69 = por %p67, %p68
      %p70 = scmp.ne.s32.totalorder %s59, %s60
      %p71 = scmp.eq.s32.totalorder %s21, 0
      %p72 = por %p70, %p71
      %p73 = scmp.ne.s32.totalorder %s59, %s60
      %p74 = scmp.eq.s32.totalorder %s22, 7
      %p75 = por %p73, %p74
      %p77 = scmp.ne.s32.totalorder %s60, %s76
      %p78 = scmp.eq.s32.totalorder %s22, 0
      %p79 = por %p77, %p78
      %s80 = ssub.s32 %s23, %s49
      %s81 = ssub.s32 %s25, %s41
      %s82 = sor.u32 %s80, %s81
      %s83 = ssub.s32 %s24, %s45
      %s84 = sor.u32 %s82, %s83
      %p85 = scmp.eq.s32.totalorder %s84, 0
      %s87 = sadd.s32 %s86, 1
      %s88 = scalar_select %p85, %s86, %s87
      %p91 = pneg %p85
      %p92 = scmp.eq.s32.totalorder %s16, 7
      %p93 = por %p91, %p92
      %p94 = scmp.ne.s32.totalorder %s86, %s89
      %p95 = scmp.eq.s32.totalorder %s16, 0
      %p96 = por %p94, %p95
      %p97 = scmp.ne.s32.totalorder %s86, %s89
      %p98 = scmp.eq.s32.totalorder %s21, 7
      %p99 = por %p97, %p98
      %p100 = scmp.ne.s32.totalorder %s89, %s90
      %p101 = scmp.eq.s32.totalorder %s21, 0
      %p102 = por %p100, %p101
      %p103 = scmp.ne.s32.totalorder %s89, %s90
      %p104 = scmp.eq.s32.totalorder %s22, 7
      %p105 = por %p103, %p104
      %p107 = scmp.ne.s32.totalorder %s90, %s106
      %p108 = scmp.eq.s32.totalorder %s22, 0
      %p109 = por %p107, %p108
      %s110 = ssub.s32 %s23, %s49
      %s111 = ssub.s32 %s25, %s41
      %s112 = sor.u32 %s110, %s111
      %s113 = ssub.s32 %s26, %s37
      %s114 = sor.u32 %s112, %s113
      %p115 = scmp.eq.s32.totalorder %s114, 0
      %s117 = sadd.s32 %s116, 1
      %s118 = scalar_select %p115, %s116, %s117
      %p121 = pneg %p115
      %p122 = scmp.eq.s32.totalorder %s16, 7
      %p123 = por %p121, %p122
      %p124 = scmp.ne.s32.totalorder %s116, %s119
      %p125 = scmp.eq.s32.totalorder %s16, 0
      %p126 = por %p124, %p125
      %p127 = scmp.ne.s32.totalorder %s116, %s119
      %p128 = scmp.eq.s32.totalorder %s21, 7
      %p129 = por %p127, %p128
      %p130 = scmp.ne.s32.totalorder %s119, %s120
      %p131 = scmp.eq.s32.totalorder %s21, 0
      %p132 = por %p130, %p131
      %p133 = scmp.ne.s32.totalorder %s119, %s120
      %p134 = scmp.eq.s32.totalorder %s22, 7
      %p135 = por %p133, %p134
      %p137 = scmp.ne.s32.totalorder %s120, %s136
      %p138 = scmp.eq.s32.totalorder %s22, 0
      %p139 = por %p137, %p138
      %s140 = ssub.s32 %s23, %s49
      %s141 = ssub.s32 %s26, %s37
      %s142 = sor.u32 %s140, %s141
      %p143 = scmp.eq.s32.totalorder %s142, 0
      %s145 = sadd.s32 %s144, 1
      %s146 = scalar_select %p143, %s144, %s145
      %p149 = pneg %p143
      %p150 = scmp.eq.s32.totalorder %s16, 7
      %p151 = por %p149, %p150
      %p152 = scmp.ne.s32.totalorder %s144, %s147
      %p153 = scmp.eq.s32.totalorder %s16, 0
      %p154 = por %p152, %p153
      %p155 = scmp.ne.s32.totalorder %s144, %s147
      %p156 = scmp.eq.s32.totalorder %s21, 7
      %p157 = por %p155, %p156
      %p158 = scmp.ne.s32.totalorder %s147, %s148
      %p159 = scmp.eq.s32.totalorder %s21, 0
      %p160 = por %p158, %p159
      %p161 = scmp.ne.s32.totalorder %s147, %s148
      %p162 = scmp.eq.s32.totalorder %s22, 7
      %p163 = por %p161, %p162
      %p165 = scmp.ne.s32.totalorder %s148, %s164
      %p166 = scmp.eq.s32.totalorder %s22, 0
      %p167 = por %p165, %p166
      %s168 = ssub.s32 %s23, %s49
      %s169 = ssub.s32 %s25, %s41
      %s170 = sor.u32 %s168, %s169
      %s171 = ssub.s32 %s26, %s37
      %s172 = sor.u32 %s170, %s171
      %p173 = scmp.eq.s32.totalorder %s172, 0
      %s175 = sadd.s32 %s174, 1
      %s176 = scalar_select %p173, %s174, %s175
      %p179 = pneg %p173
      %p180 = scmp.eq.s32.totalorder %s16, 7
      %p181 = por %p179, %p180
      %p182 = scmp.ne.s32.totalorder %s174, %s177
      %p183 = scmp.eq.s32.totalorder %s16, 0
      %p184 = por %p182, %p183
      %p185 = scmp.ne.s32.totalorder %s174, %s177
      %p186 = scmp.eq.s32.totalorder %s21, 7
      %p187 = por %p185, %p186
      %p188 = scmp.ne.s32.totalorder %s177, %s178
      %p189 = scmp.eq.s32.totalorder %s21, 0
      %p190 = por %p188, %p189
      %p191 = scmp.ne.s32.totalorder %s177, %s178
      %p192 = scmp.eq.s32.totalorder %s22, 7
      %p193 = por %p191, %p192
      %p195 = scmp.ne.s32.totalorder %s178, %s194
      %p196 = scmp.eq.s32.totalorder %s22, 0
      %p197 = por %p195, %p196
      %s198 = ssub.s32 %s25, %s41
      %p199 = scmp.eq.s32.totalorder %s198, 0
      %s201 = sadd.s32 %s200, 1
      %s202 = scalar_select %p199, %s200, %s201
      %p205 = pneg %p199
      %p206 = scmp.eq.s32.totalorder %s16, 7
      %p207 = por %p205, %p206
      %p208 = scmp.ne.s32.totalorder %s200, %s203
      %p209 = scmp.eq.s32.totalorder %s16, 0
      %p210 = por %p208, %p209
      %p211 = scmp.ne.s32.totalorder %s200, %s203
      %p212 = scmp.eq.s32.totalorder %s21, 7
      %p213 = por %p211, %p212
      %p214 = scmp.ne.s32.totalorder %s203, %s204
      %p215 = scmp.eq.s32.totalorder %s21, 0
      %p216 = por %p214, %p215
      %p217 = scmp.ne.s32.totalorder %s203, %s204
      %p218 = scmp.eq.s32.totalorder %s22, 7
      %p219 = por %p217, %p218
      %p221 = scmp.ne.s32.totalorder %s204, %s220
      %p222 = scmp.eq.s32.totalorder %s22, 0
      %p223 = por %p221, %p222
      %s225 = sadd.s32 %s224, 1
      %p228 = scmp.eq.s32.totalorder %s16, 7
      %p229 = scmp.ne.s32.totalorder %s224, %s226
      %p230 = scmp.eq.s32.totalorder %s16, 0
      %p231 = por %p229, %p230
      %p232 = scmp.ne.s32.totalorder %s224, %s226
      %p233 = scmp.eq.s32.totalorder %s21, 7
      %p234 = por %p232, %p233
      %p235 = scmp.ne.s32.totalorder %s226, %s227
      %p236 = scmp.eq.s32.totalorder %s21, 0
      %p237 = por %p235, %p236
      %p238 = scmp.ne.s32.totalorder %s226, %s227
      %p239 = scmp.eq.s32.totalorder %s22, 7
      %p240 = por %p238, %p239
      %p242 = scmp.ne.s32.totalorder %s227, %s241
      %p243 = scmp.eq.s32.totalorder %s22, 0
      %p244 = por %p242, %p243
      %s245 = ssub.s32 %s23, %s49
      %s246 = ssub.s32 %s24, %s45
      %s247 = sor.u32 %s245, %s246
      %p248 = scmp.eq.s32.totalorder %s247, 0
      %s250 = sadd.s32 %s249, 1
      %s251 = scalar_select %p248, %s249, %s250
      %p254 = pneg %p248
      %p255 = scmp.eq.s32.totalorder %s16, 7
      %p256 = por %p254, %p255
      %p257 = scmp.ne.s32.totalorder %s249, %s252
      %p258 = scmp.eq.s32.totalorder %s16, 0
      %p259 = por %p257, %p258
      %p260 = scmp.ne.s32.totalorder %s249, %s252
      %p261 = scmp.eq.s32.totalorder %s21, 7
      %p262 = por %p260, %p261
      %p263 = scmp.ne.s32.totalorder %s252, %s253
      %p264 = scmp.eq.s32.totalorder %s21, 0
      %p265 = por %p263, %p264
      %p266 = scmp.ne.s32.totalorder %s252, %s253
      %p267 = scmp.eq.s32.totalorder %s22, 7
      %p268 = por %p266, %p267
      %p270 = scmp.ne.s32.totalorder %s253, %s269
      %p271 = scmp.eq.s32.totalorder %s22, 0
      %p272 = por %p270, %p271
      %p273 = scmp.le.s32.totalorder 1, %s16
      %p274 = scmp.lt.s32.totalorder %s16, 9
      %p275 = pnand %p273, %p274
      %p276 = pneg %p275
      // Predicated region
      $region9: #{mla_forward.3} parent=5 // pred_check
        _
      $region10: #{mla_forward.3} parent=5 // pred_check_branch
        %278 = sbr.rel (%p275) target = $region12
      $region11: #{mla_forward.3} parent=5 // pred_region
        %s279 = ssub.s32 %s16, 1
        // Predicated region
        $region13: #{mla_forward.3} parent=11 // pred_check
          %p280 = pneg %p237
        $region14: #{mla_forward.3} parent=11 // pred_check_branch
          %282 = sbr.rel (%p280) target = $region16
        $region15: #{mla_forward.3} parent=11 // pred_region
          _
        $region16: #{mla_forward.3} parent=11 // pred_fallthru
          _
      $region12: #{mla_forward.3} parent=5 // pred_fallthru
        _
      %p283 = scmp.lt.s32.totalorder %s16, 8
      // Predicated region
      $region17: #{mla_forward.3} parent=5 // pred_check
        %p284 = pneg %p283
      $region18: #{mla_forward.3} parent=5 // pred_check_branch
        %286 = sbr.rel (%p284) target = $region20
      $region19: #{mla_forward.3} parent=5 // pred_region
        // Predicated region
        $region21: #{mla_forward.3} parent=19 // pred_check
          %p287 = pneg %p66
        $region22: #{mla_forward.3} parent=19 // pred_check_branch
          %289 = sbr.rel (%p287) target = $region24
        $region23: #{mla_forward.3} parent=19 // pred_region
          %p290 = scmp.lt.s32.totalorder %s23, 1
          %s291 = scalar_select %p290, %s23, 1
          %p292 = scmp.lt.s32.totalorder %s25, 3
          %s293 = scalar_select %p292, %s25, 3
          %p294 = scmp.lt.s32.totalorder %s24, 0
          %s295 = scalar_select %p294, %s24, 0
          %s296 = sadd.s32 %s295, %s293
          %s297 = smul.addr %s291, 4
          %s298 = sadd.s32 %s296, %s297
          %s299 = smul.addr %s298, 4
          %s300 = scalar_lea.vmem %s0, %s299
        $region24: #{mla_forward.3} parent=19 // pred_fallthru
          _
        // Predicated region
        $region25: #{mla_forward.3} parent=19 // pred_check
          %p301 = pneg %p96
        $region26: #{mla_forward.3} parent=19 // pred_check_branch
          %303 = sbr.rel (%p301) target = $region28
        $region27: #{mla_forward.3} parent=19 // pred_region
          %p304 = scmp.lt.s32.totalorder %s23, 1
          %s305 = scalar_select %p304, %s23, 1
          %p306 = scmp.lt.s32.totalorder %s25, 3
          %s307 = scalar_select %p306, %s25, 3
          %p308 = scmp.lt.s32.totalorder %s24, 0
          %s309 = scalar_select %p308, %s24, 0
          %s310 = sadd.s32 %s309, %s307
          %s311 = smul.addr %s305, 4
          %s312 = sadd.s32 %s310, %s311
          %s313 = smul.addr %s312, 4
          %s314 = scalar_lea.vmem %s1, %s313
        $region28: #{mla_forward.3} parent=19 // pred_fallthru
          _
        // Predicated region
        $region29: #{mla_forward.3} parent=19 // pred_check
          %p315 = pneg %p126
        $region30: #{mla_forward.3} parent=19 // pred_check_branch
          %317 = sbr.rel (%p315) target = $region32
        $region31: #{mla_forward.3} parent=19 // pred_region
          %p318 = scmp.lt.s32.totalorder %s23, 1
          %s319 = scalar_select %p318, %s23, 1
          %p320 = scmp.lt.s32.totalorder %s25, 3
          %s321 = scalar_select %p320, %s25, 3
          %p322 = scmp.lt.s32.totalorder %s26, 0
          %s323 = scalar_select %p322, %s26, 0
          %s324 = sadd.s32 %s323, %s321
          %s325 = smul.addr %s319, 4
          %s326 = sadd.s32 %s324, %s325
          %s327 = smul.addr %s326, 4
          %s328 = scalar_lea.vmem %s2, %s327
        $region32: #{mla_forward.3} parent=19 // pred_fallthru
          _
        // Predicated region
        $region33: #{mla_forward.3} parent=19 // pred_check
          %p329 = pneg %p154
        $region34: #{mla_forward.3} parent=19 // pred_check_branch
          %331 = sbr.rel (%p329) target = $region36
        $region35: #{mla_forward.3} parent=19 // pred_region
          %p332 = scmp.lt.s32.totalorder %s23, 1
          %s333 = scalar_select %p332, %s23, 1
          %p334 = scmp.lt.s32.totalorder %s26, 0
          %s335 = scalar_select %p334, %s26, 0
          %s336 = sadd.s32 %s335, %s333
          %s337 = smul.addr %s336, 4
          %s338 = scalar_lea.vmem %s3, %s337
        $region36: #{mla_forward.3} parent=19 // pred_fallthru
          _
        // Predicated region
        $region37: #{mla_forward.3} parent=19 // pred_check
          %p339 = pneg %p184
        $region38: #{mla_forward.3} parent=19 // pred_check_branch
          %341 = sbr.rel (%p339) target = $region40
        $region39: #{mla_forward.3} parent=19 // pred_region
          %p342 = scmp.lt.s32.totalorder %s23, 1
          %s343 = scalar_select %p342, %s23, 1
          %p344 = scmp.lt.s32.totalorder %s25, 3
          %s345 = scalar_select %p344, %s25, 3
          %p346 = scmp.lt.s32.totalorder %s26, 0
          %s347 = scalar_select %p346, %s26, 0
          %s348 = sadd.s32 %s347, %s345
          %s349 = smul.addr %s343, 4
          %s350 = sadd.s32 %s348, %s349
          %s351 = smul.addr %s350, 4
          %s352 = scalar_lea.vmem %s4, %s351
        $region40: #{mla_forward.3} parent=19 // pred_fallthru
          _
        // Predicated region
        $region41: #{mla_forward.3} parent=19 // pred_check
          %p353 = pneg %p210
        $region42: #{mla_forward.3} parent=19 // pred_check_branch
          %355 = sbr.rel (%p353) target = $region44
        $region43: #{mla_forward.3} parent=19 // pred_region
          %s356 = smul.u32 2, %s25
          %p357 = scmp.lt.s32.totalorder %s356, 7
          %s358 = scalar_select %p357, %s356, 7
          %s359 = smul.addr %s358, 4
          %s360 = scalar_lea.vmem %s5, %s359
          %s361 = smul.u32 2, %s25
        $region44: #{mla_forward.3} parent=19 // pred_fallthru
          _
      $region20: #{mla_forward.3} parent=5 // pred_fallthru
        _
      %p362 = scmp.le.s32.totalorder 1, %s16
      %p363 = scmp.lt.s32.totalorder %s16, 9
      %p364 = pnand %p362, %p363
      %p365 = pneg %p364
      // Predicated region
      $region45: #{mla_forward.3} parent=5 // pred_check
        _
      $region46: #{mla_forward.3} parent=5 // pred_check_branch
        %367 = sbr.rel (%p364) target = $region48
      $region47: #{mla_forward.3} parent=5 // pred_region
        %s368 = ssub.s32 %s16, 1
        %p369 = scmp.lt.s32.totalorder %s27, 1
        %s370 = scalar_select %p369, %s27, 1
        %p371 = scmp.lt.s32.totalorder %s29, 3
        %s372 = scalar_select %p371, %s29, 3
        %p373 = scmp.lt.s32.totalorder %s28, 0
        %s374 = scalar_select %p373, %s28, 0
        %s375 = sadd.s32 %s374, %s372
        %s376 = smul.addr %s370, 4
        %s377 = sadd.s32 %s375, %s376
        %s378 = smul.addr %s377, 4
        %s379 = scalar_lea.vmem %s0, %s378
        %p380 = pneg %p72
        %p381 = pneg %p69
        %p382 = scmp.lt.s32.totalorder %s27, 1
        %s383 = scalar_select %p382, %s27, 1
        %p384 = scmp.lt.s32.totalorder %s29, 3
        %s385 = scalar_select %p384, %s29, 3
        %p386 = scmp.lt.s32.totalorder %s28, 0
        %s387 = scalar_select %p386, %s28, 0
        %s388 = sadd.s32 %s387, %s385
        %s389 = smul.addr %s383, 4
        %s390 = sadd.s32 %s388, %s389
        %s391 = smul.addr %s390, 4
        %s392 = scalar_lea.vmem %s1, %s391
        %p393 = pneg %p102
        %p394 = pneg %p99
        %p395 = scmp.lt.s32.totalorder %s27, 1
        %s396 = scalar_select %p395, %s27, 1
        %p397 = scmp.lt.s32.totalorder %s29, 3
        %s398 = scalar_select %p397, %s29, 3
        %p399 = scmp.lt.s32.totalorder %s30, 0
        %s400 = scalar_select %p399, %s30, 0
        %s401 = sadd.s32 %s400, %s398
        %s402 = smul.addr %s396, 4
        %s403 = sadd.s32 %s401, %s402
        %s404 = smul.addr %s403, 4
        %s405 = scalar_lea.vmem %s2, %s404
        %p406 = pneg %p132
        %p407 = pneg %p129
        %p408 = scmp.lt.s32.totalorder %s27, 1
        %s409 = scalar_select %p408, %s27, 1
        %p410 = scmp.lt.s32.totalorder %s30, 0
        %s411 = scalar_select %p410, %s30, 0
        %s412 = sadd.s32 %s411, %s409
        %s413 = smul.addr %s412, 4
        %s414 = scalar_lea.vmem %s3, %s413
        %p415 = pneg %p160
        %p416 = pneg %p157
        %p417 = scmp.lt.s32.totalorder %s27, 1
        %s418 = scalar_select %p417, %s27, 1
        %p419 = scmp.lt.s32.totalorder %s29, 3
        %s420 = scalar_select %p419, %s29, 3
        %p421 = scmp.lt.s32.totalorder %s30, 0
        %s422 = scalar_select %p421, %s30, 0
        %s423 = sadd.s32 %s422, %s420
        %s424 = smul.addr %s418, 4
        %s425 = sadd.s32 %s423, %s424
        %s426 = smul.addr %s425, 4
        %s427 = scalar_lea.vmem %s4, %s426
        %p428 = pneg %p190
        %p429 = pneg %p187
        %s430 = smul.u32 2, %s29
        %p431 = scmp.lt.s32.totalorder %s430, 7
        %s432 = scalar_select %p431, %s430, 7
        %s433 = smul.addr %s432, 4
        %s434 = scalar_lea.vmem %s5, %s433
        %p435 = pneg %p216
        %p436 = pneg %p213
        %p437 = pneg %p237
        %p438 = pneg %p234
        %p439 = pneg %p265
        %p440 = pneg %p262
        %s441 = sand.u32 %s252, 1
        %s442 = scalar_lea.sflag [#allocation7], %s441
        %s443 = sand.u32 %s252, 1
        %s444 = smul.addr %s443, 8
        %s445 = scalar_lea.vmem [#allocation6], %s444
        %p446 = scmp.lt.s32.totalorder %s27, 1
        %s447 = scalar_select %p446, %s27, 1
        %p448 = scmp.lt.s32.totalorder %s29, 3
        %s449 = scalar_select %p448, %s29, 3
        %p450 = scmp.lt.s32.totalorder %s28, 0
        %s451 = scalar_select %p450, %s28, 0
        %s452 = sadd.s32 %s451, %s449
        %s453 = smul.addr %s447, 4
        %s454 = sadd.s32 %s452, %s453
        %s455 = smul.addr %s454, 4
        %s456 = scalar_lea.vmem %s0, %s455
        %p457 = scmp.lt.s32.totalorder %s27, 1
        %s458 = scalar_select %p457, %s27, 1
        %p459 = scmp.lt.s32.totalorder %s29, 3
        %s460 = scalar_select %p459, %s29, 3
        %p461 = scmp.lt.s32.totalorder %s28, 0
        %s462 = scalar_select %p461, %s28, 0
        %s463 = sadd.s32 %s462, %s460
        %s464 = smul.addr %s458, 4
        %s465 = sadd.s32 %s463, %s464
        %s466 = smul.addr %s465, 4
        %s467 = scalar_lea.vmem %s1, %s466
        %p468 = scmp.lt.s32.totalorder %s27, 1
        %s469 = scalar_select %p468, %s27, 1
        %p470 = scmp.lt.s32.totalorder %s29, 3
        %s471 = scalar_select %p470, %s29, 3
        %p472 = scmp.lt.s32.totalorder %s30, 0
        %s473 = scalar_select %p472, %s30, 0
        %s474 = sadd.s32 %s473, %s471
        %s475 = smul.addr %s469, 4
        %s476 = sadd.s32 %s474, %s475
        %s477 = smul.addr %s476, 4
        %s478 = scalar_lea.vmem %s2, %s477
        %p479 = scmp.lt.s32.totalorder %s27, 1
        %s480 = scalar_select %p479, %s27, 1
        %p481 = scmp.lt.s32.totalorder %s30, 0
        %s482 = scalar_select %p481, %s30, 0
        %s483 = sadd.s32 %s482, %s480
        %s484 = smul.addr %s483, 4
        %s485 = scalar_lea.vmem %s3, %s484
        %p486 = scmp.lt.s32.totalorder %s27, 1
        %s487 = scalar_select %p486, %s27, 1
        %p488 = scmp.lt.s32.totalorder %s29, 3
        %s489 = scalar_select %p488, %s29, 3
        %p490 = scmp.lt.s32.totalorder %s30, 0
        %s491 = scalar_select %p490, %s30, 0
        %s492 = sadd.s32 %s491, %s489
        %s493 = smul.addr %s487, 4
        %s494 = sadd.s32 %s492, %s493
        %s495 = smul.addr %s494, 4
        %s496 = scalar_lea.vmem %s4, %s495
        %s497 = smul.u32 2, %s29
        %p498 = scmp.lt.s32.totalorder %s497, 7
        %s499 = scalar_select %p498, %s497, 7
        %s500 = smul.addr %s499, 4
        %s501 = scalar_lea.vmem %s5, %s500
        %s502 = smul.u32 2, %s29
        %p504 = scmp.eq.s32.totalorder %s30, 0
        // Predicated region
        $region49: #{mla_forward.3} parent=47 // pred_check
          %p505 = pneg %p504
        $region50: #{mla_forward.3} parent=47 // pred_check_branch
          %507 = sbr.rel (%p505) target = $region52
        $region51: #{mla_forward.3} parent=47 // pred_region
          %vm508 = vcmask 7168
          %509 = vst.msk [vmem:[#allocation2] sm:$0xff] %vm508, -1e+30
          %510 = vst.msk [vmem:[#allocation3] sm:$0xff] %vm508, 0.0
          %vm511 = vcmask 130048
          %512 = vst.msk [vmem:[#allocation4] sm:$0xff] %vm511, 0.0
        $region52: #{mla_forward.3} parent=47 // pred_fallthru
          _
        %p513 = scmp.eq.s32.totalorder %s29, 0
        %p514 = pnand %p504, %p513
        %p515 = pneg %p514
        // Predicated region
        $region53: #{mla_forward.3} parent=47 // pred_check
          _
        $region54: #{mla_forward.3} parent=47 // pred_check_branch
          %517 = sbr.rel (%p514) target = $region56
        $region55: #{mla_forward.3} parent=47 // pred_region
          %vm518 = vcmask 523264
          %519 = vst.msk [vmem:[#allocation5] sm:$0xff] %vm518, 0.0
        $region56: #{mla_forward.3} parent=47 // pred_fallthru
          _
        %s520 = smul.u32 %s30, 8
        %s521 = sadd.s32 %s28, 1
        %s522 = smul.u32 %s521, 8
        %p523 = scmp.lt.s32.totalorder %s520, %s522
        // Predicated region
        $region57: #{mla_forward.3} parent=47 // pred_check
          %p524 = pneg %p523
        $region58: #{mla_forward.3} parent=47 // pred_check_branch
          %526 = sbr.rel (%p524) target = $region60
        $region59: #{mla_forward.3} parent=47 // pred_region
          %v527 = vld [vmem:[%s456] sm:$0xf]
          %v528 = vld [vmem:[%s467] sm:$0xf]
          %v529 = vld [vmem:[%s478] sm:$0xf]
          %v530 = vld [vmem:[%s485] sm:$0xf]
          %v531 = vld [vmem:[%s496] sm:$0xf]
          %vm532 = vcmask 64512
          %v534 = vsel %vm532, %v528, 0
          %v537 = vsel %vm532, %v530, 0
          %539 = vmatprep.subr.bf16.mxu0 0
          %540 = vmatpush1.bf16.xpose.msra.mxu0 %v537
          %541 = vmatprep.subr.bf16.mxu0 0
          %542 = vmatpush1.bf16.xpose.msra.mxu0 0
          %543 = vmatprep.subr.bf16.mxu0 0
          %544 = vmatpush1.bf16.xpose.msra.mxu0 0
          %545 = vmatprep.subr.bf16.mxu0 0
          %546 = vmatpush1.bf16.xpose.msra.mxu0 0
          %547 = vmatprep.subr.bf16.mxu0 0
          %548 = vmatpush1.bf16.xpose.msra.mxu0 0
          %549 = vmatprep.subr.bf16.mxu0 0
          %550 = vmatpush1.bf16.xpose.msra.mxu0 0
          %551 = vmatprep.subr.bf16.mxu0 0
          %552 = vmatpush1.bf16.xpose.msra.mxu0 0
          %553 = vmatprep.subr.bf16.mxu0 0
          %554 = vmatpush1.bf16.xpose.msra.mxu0 0
          %555 = vmatprep.subr.bf16.mxu0 0
          %556 = vmatpush1.bf16.xpose.msra.mxu0 0
          %557 = vmatprep.subr.bf16.mxu0 0
          %558 = vmatpush1.bf16.xpose.msra.mxu0 0
          %559 = vmatprep.subr.bf16.mxu0 0
          %560 = vmatpush1.bf16.xpose.msra.mxu0 0
          %561 = vmatprep.subr.bf16.mxu0 0
          %562 = vmatpush1.bf16.xpose.msra.mxu0 0
          %563 = vmatprep.subr.bf16.mxu0 0
          %564 = vmatpush1.bf16.xpose.msra.mxu0 0
          %565 = vmatprep.subr.bf16.mxu0 0
          %566 = vmatpush1.bf16.xpose.msra.mxu0 0
          %567 = vmatprep.subr.bf16.mxu0 0
          %568 = vmatpush1.bf16.xpose.msra.mxu0 0
          %569 = vmatprep.subr.bf16.mxu0 0
          %570 = vmatpush1.bf16.xpose.msra.mxu0 0
          %571 = vmatprep.mubr.bf16.mxu0 0
          %572 = vmatmul.mubr.bf16.gmra.mrb[0].mxu0 %v534
          %v573 = vpop.f32.mrb[0].mxu0
          %v574 = vadd.f32 0.0, %v573
          %v575 = vpop.f32.mrb[0].mxu0
          %v576 = vpop.f32.mrb[0].mxu0
          %v577 = vpop.f32.mrb[0].mxu0
          %578 = vdwg.mxu0
          %v580 = vsel %vm532, %v527, 0
          %v583 = vsel %vm532, %v529, 0
          %585 = vmatprep.subr.bf16.mxu0 0
          %586 = vmatpush1.bf16.xpose.msra.mxu0 %v583
          %587 = vmatprep.subr.bf16.mxu0 0
          %588 = vmatpush1.bf16.xpose.msra.mxu0 0
          %589 = vmatprep.subr.bf16.mxu0 0
          %590 = vmatpush1.bf16.xpose.msra.mxu0 0
          %591 = vmatprep.subr.bf16.mxu0 0
          %592 = vmatpush1.bf16.xpose.msra.mxu0 0
          %593 = vmatprep.subr.bf16.mxu0 0
          %594 = vmatpush1.bf16.xpose.msra.mxu0 0
          %595 = vmatprep.subr.bf16.mxu0 0
          %596 = vmatpush1.bf16.xpose.msra.mxu0 0
          %597 = vmatprep.subr.bf16.mxu0 0
          %598 = vmatpush1.bf16.xpose.msra.mxu0 0
          %599 = vmatprep.subr.bf16.mxu0 0
          %600 = vmatpush1.bf16.xpose.msra.mxu0 0
          %601 = vmatprep.subr.bf16.mxu0 0
          %602 = vmatpush1.bf16.xpose.msra.mxu0 0
          %603 = vmatprep.subr.bf16.mxu0 0
          %604 = vmatpush1.bf16.xpose.msra.mxu0 0
          %605 = vmatprep.subr.bf16.mxu0 0
          %606 = vmatpush1.bf16.xpose.msra.mxu0 0
          %607 = vmatprep.subr.bf16.mxu0 0
          %608 = vmatpush1.bf16.xpose.msra.mxu0 0
          %609 = vmatprep.subr.bf16.mxu0 0
          %610 = vmatpush1.bf16.xpose.msra.mxu0 0
          %611 = vmatprep.subr.bf16.mxu0 0
          %612 = vmatpush1.bf16.xpose.msra.mxu0 0
          %613 = vmatprep.subr.bf16.mxu0 0
          %614 = vmatpush1.bf16.xpose.msra.mxu0 0
          %615 = vmatprep.subr.bf16.mxu0 0
          %616 = vmatpush1.bf16.xpose.msra.mxu0 0
          %617 = vmatprep.mubr.bf16.mxu0 0
          %618 = vmatmul.mubr.bf16.gmra.mrb[0].mxu0 %v580
          %v619 = vpop.f32.mrb[0].mxu0
          %v620 = vadd.f32 %v574, %v619
          %v621 = vpop.f32.mrb[0].mxu0
          %v622 = vpop.f32.mrb[0].mxu0
          %v623 = vpop.f32.mrb[0].mxu0
          %624 = vdwg.mxu0
          %v625 = vmul.f32 %v620, 0.25
          %s626 = smul.u32 %s28, 8
          %v627 = vlaneseq
          %v628 = vshrl.u32 %v627, 7
          %v629 = vstv %s626
          %v630 = vadd.s32 %v629, %v628
          %v631 = vlaneseq
          %v632 = vand.u32 %v631, 127
          %v633 = vstv %s520
          %v634 = vadd.s32 %v633, %v632
          %vm635 = vcmp.le.s32.totalorder %v634, %v630
          %v636 = vsel %vm635, %v625, -1e+30
          %v637 = vld [vmem:[#allocation2] sm:$0xff]
          %v638 = vsel %vm532, %v636, -inf
          %639 = vmax.xlane.f32.xlu0 %v638
          %v640 = vpop.xlane.xlu0 %639
          %v641 = vmax.f32 %v637, %v640
          %v642 = vsub.f32 %v637, %v641
          %v643 = vmul.f32 %v642, 1.442695
          %v644 = vpow.pop %v643
          %646 = vset.pattern.permute.xlu0 0
          %647 = vperm.xlu0 %646, %v641
          %v648 = vpop.permute.xlu0 %647
          %v650 = vsub.f32 %v636, %v648
          %v651 = vmul.f32 %v650, 1.442695
          %v652 = vpow.pop %v651
          %v653 = vld [vmem:[#allocation3] sm:$0xff]
          %v654 = vmul.f32 %v644, %v653
          %v655 = vsel %vm532, %v652, 0.0
          %656 = vadd.xlane.f32.xlu0 %v655
          %v657 = vpop.xlane.xlu0 %656
          %v658 = vadd.f32 %v654, %v657
          %vm659 = vcmask 7168
          %660 = vst.msk [vmem:[#allocation3] sm:$0xff] %vm659, %v658
          %v661 = vld [vmem:[#allocation4] sm:$0xff]
          %663 = vset.pattern.permute.xlu0 0
          %664 = vperm.xlu0 %663, %v644
          %v665 = vpop.permute.xlu0 %664
          %v667 = vmul.f32 %v665, %v661
          %v668 = vpack.c.bf16 %v652, %v652
          %v670 = vsel %vm532, %v668, 0
          %vm672 = vcmask 1043456
          %v674 = vsel %vm672, %v531, 0
          %676 = vmatprep.subr.bf16.mxu0 0
          %677 = vmatpush1.bf16.msra.mxu0 %v674
          %678 = vmatprep.subr.bf16.mxu0 0
          %679 = vmatpush1.bf16.msra.mxu0 0
          %680 = vmatprep.subr.bf16.mxu0 0
          %681 = vmatpush1.bf16.msra.mxu0 0
          %682 = vmatprep.subr.bf16.mxu0 0
          %683 = vmatpush1.bf16.msra.mxu0 0
          %684 = vmatprep.subr.bf16.mxu0 0
          %685 = vmatpush1.bf16.msra.mxu0 0
          %686 = vmatprep.subr.bf16.mxu0 0
          %687 = vmatpush1.bf16.msra.mxu0 0
          %688 = vmatprep.subr.bf16.mxu0 0
          %689 = vmatpush1.bf16.msra.mxu0 0
          %690 = vmatprep.subr.bf16.mxu0 0
          %691 = vmatpush1.bf16.msra.mxu0 0
          %692 = vmatprep.subr.bf16.mxu0 0
          %693 = vmatpush1.bf16.msra.mxu0 0
          %694 = vmatprep.subr.bf16.mxu0 0
          %695 = vmatpush1.bf16.msra.mxu0 0
          %696 = vmatprep.subr.bf16.mxu0 0
          %697 = vmatpush1.bf16.msra.mxu0 0
          %698 = vmatprep.subr.bf16.mxu0 0
          %699 = vmatpush1.bf16.msra.mxu0 0
          %700 = vmatprep.subr.bf16.mxu0 0
          %701 = vmatpush1.bf16.msra.mxu0 0
          %702 = vmatprep.subr.bf16.mxu0 0
          %703 = vmatpush1.bf16.msra.mxu0 0
          %704 = vmatprep.subr.bf16.mxu0 0
          %705 = vmatpush1.bf16.msra.mxu0 0
          %706 = vmatprep.subr.bf16.mxu0 0
          %707 = vmatpush1.bf16.msra.mxu0 0
          %708 = vmatprep.mubr.bf16.mxu0 0
          %709 = vmatmul.mubr.bf16.gmra.mrb[0].mxu0 %v670
          %v710 = vpop.f32.mrb[0].mxu0
          %v711 = vadd.f32 0.0, %v710
          %v712 = vpop.f32.mrb[0].mxu0
          %v713 = vpop.f32.mrb[0].mxu0
          %v714 = vpop.f32.mrb[0].mxu0
          %715 = vdwg.mxu0
          %v716 = vadd.f32 %v667, %v711
          %vm717 = vcmask 130048
          %718 = vst.msk [vmem:[#allocation4] sm:$0xff] %vm717, %v716
          %719 = vst.msk [vmem:[#allocation2] sm:$0xff] %vm659, %v641
        $region60: #{mla_forward.3} parent=47 // pred_fallthru
          _
        // Predicated region
        $region61: #{mla_forward.3} parent=47 // pred_check
          %p720 = pneg %p504
        $region62: #{mla_forward.3} parent=47 // pred_check_branch
          %722 = sbr.rel (%p720) target = $region64
        $region63: #{mla_forward.3} parent=47 // pred_region
          %v723 = vld [vmem:[#allocation4] sm:$0xff]
          %v724 = vld [vmem:[#allocation3] sm:$0xff]
          %v725 = vrcp.pop %v724
          %727 = vset.pattern.permute.xlu0 0
          %728 = vperm.xlu0 %727, %v725
          %v729 = vpop.permute.xlu0 %728
          %v731 = vmul.f32 %v723, %v729
          %v732 = vld [vmem:[#allocation5] sm:$0xff]
          %v733 = vpack.c.bf16 %v731, %v731
          %v734 = vld [vmem:[%s501] sm:$0xf]
          %v735 = vld [vmem:[%s501 + $0x4] sm:$0xf]
          %v738 = vunpack.c.l.b16 %v734
          %v739 = vunpack.c.l.b16 %v735
          %v740 = vpack.c.b16 %v739, %v738
          %vm742 = vcmask 130048
          %v744 = vsel %vm742, %v733, 0
          %746 = vmatprep.subr.bf16.mxu0 0
          %747 = vmatpush1.bf16.msra.mxu0 %v740
          %748 = vmatprep.subr.bf16.mxu0 0
          %749 = vmatpush1.bf16.msra.mxu0 0
          %750 = vmatprep.subr.bf16.mxu0 0
          %751 = vmatpush1.bf16.msra.mxu0 0
          %752 = vmatprep.subr.bf16.mxu0 0
          %753 = vmatpush1.bf16.msra.mxu0 0
          %754 = vmatprep.subr.bf16.mxu0 0
          %755 = vmatpush1.bf16.msra.mxu0 0
          %756 = vmatprep.subr.bf16.mxu0 0
          %757 = vmatpush1.bf16.msra.mxu0 0
          %758 = vmatprep.subr.bf16.mxu0 0
          %759 = vmatpush1.bf16.msra.mxu0 0
          %760 = vmatprep.subr.bf16.mxu0 0
          %761 = vmatpush1.bf16.msra.mxu0 0
          %762 = vmatprep.subr.bf16.mxu0 0
          %763 = vmatpush1.bf16.msra.mxu0 0
          %764 = vmatprep.subr.bf16.mxu0 0
          %765 = vmatpush1.bf16.msra.mxu0 0
          %766 = vmatprep.subr.bf16.mxu0 0
          %767 = vmatpush1.bf16.msra.mxu0 0
          %768 = vmatprep.subr.bf16.mxu0 0
          %769 = vmatpush1.bf16.msra.mxu0 0
          %770 = vmatprep.subr.bf16.mxu0 0
          %771 = vmatpush1.bf16.msra.mxu0 0
          %772 = vmatprep.subr.bf16.mxu0 0
          %773 = vmatpush1.bf16.msra.mxu0 0
          %774 = vmatprep.subr.bf16.mxu0 0
          %775 = vmatpush1.bf16.msra.mxu0 0
          %776 = vmatprep.subr.bf16.mxu0 0
          %777 = vmatpush1.bf16.msra.mxu0 0
          %778 = vmatprep.mubr.bf16.mxu0 0
          %779 = vmatmul.mubr.bf16.gmra.mrb[0].mxu0 %v744
          %v780 = vpop.f32.mrb[0].mxu0
          %v781 = vadd.f32 0.0, %v780
          %v782 = vpop.f32.mrb[0].mxu0
          %v783 = vpop.f32.mrb[0].mxu0
          %v784 = vpop.f32.mrb[0].mxu0
          %785 = vdwg.mxu0
          %v786 = vadd.f32 %v732, %v781
          %vm787 = vcmask 523264
          %788 = vst.msk [vmem:[#allocation5] sm:$0xff] %vm787, %v786
          %p789 = scmp.eq.s32.totalorder %s29, 3
          // Predicated region
          $region65: #{mla_forward.3} parent=63 // pred_check
            %p790 = pneg %p789
          $region66: #{mla_forward.3} parent=63 // pred_check_branch
            %792 = sbr.rel (%p790) target = $region68
          $region67: #{mla_forward.3} parent=63 // pred_region
            %v793 = vld [vmem:[#allocation5] sm:$0xff]
            %v794 = vld [vmem:[%s6] sm:$0x1]
            %v796 = vlaneseq
            %v797 = vshrl.u32 %v796, 7
            %v798 = vsub.s32 0, %v797
            %v799 = vrot.slane %v794, %v798
            %v801 = vadd.f32 %v793, %v799
            %802 = vst.msk [vmem:[%s445] sm:$0xff] %vm787, %v801
          $region68: #{mla_forward.3} parent=63 // pred_fallthru
            _
        $region64: #{mla_forward.3} parent=47 // pred_fallthru
          _
        %s803 = sand.u32 %s252, 1
        %s804 = scalar_lea.sflag [#allocation7], %s803
        %s805 = sand.u32 %s252, 1
        %s806 = smul.addr %s805, 8
        %s807 = scalar_lea.vmem [#allocation6], %s806
        // Predicated region
        $region69: #{mla_forward.3} parent=47 // pred_check
          %p808 = pneg %p262
        $region70: #{mla_forward.3} parent=47 // pred_check_branch
          %810 = sbr.rel (%p808) target = $region72
        $region71: #{mla_forward.3} parent=47 // pred_region
          %s812 = ssub.s32 128, 128
          %813 = vsyncadd %s804, %s812
          %s814 = sadd.s32 %s28, %s27
          %s815 = smul.addr %s814, 128
          %s816 = scalar_lea.hbm %s7, %s815
          %s818 = sshll.u32 %s807, 4
          %s819 = int_to_ptr.vmem [resolvable:$true] %s818
          %821 = dma.vmem_to_hbm [thread:$0]  %s819, 128, %s816, %s804
        $region72: #{mla_forward.3} parent=47 // pred_fallthru
          _
      $region48: #{mla_forward.3} parent=5 // pred_fallthru
        _
      %p822 = scmp.le.s32.totalorder 2, %s16
      // Predicated region
      $region73: #{mla_forward.3} parent=5 // pred_check
        %p823 = pneg %p822
      $region74: #{mla_forward.3} parent=5 // pred_check_branch
        %825 = sbr.rel (%p823) target = $region76
      $region75: #{mla_forward.3} parent=5 // pred_region
        %s826 = ssub.s32 %s16, 2
        // Predicated region
        $region77: #{mla_forward.3} parent=75 // pred_check
          %p827 = pneg %p268
        $region78: #{mla_forward.3} parent=75 // pred_check_branch
          %829 = sbr.rel (%p827) target = $region80
        $region79: #{mla_forward.3} parent=75 // pred_region
          %s830 = sand.u32 %s253, 1
          %s831 = scalar_lea.sflag [#allocation7], %s830
          %s832 = sand.u32 %s253, 1
          %s833 = smul.addr %s832, 8
          %s834 = scalar_lea.vmem [#allocation6], %s833
          %835 = dma.done %s831, 128
        $region80: #{mla_forward.3} parent=75 // pred_fallthru
          _
      $region76: #{mla_forward.3} parent=5 // pred_fallthru
        _
    $region6: #{mla_forward.3} parent=1 // loop_footer
      %s20 = sadd.s32 1, %s16
    $region7: #{mla_forward.3} parent=1 // loop_footer_branch
      %15 = sbr.rel target = $region3
    $region8: #{mla_forward.3} parent=1 // loop_exit
      _
    %836 = vsyncpa [#allocation7], 1
    %s837 = scalar_lea.sflag [#allocation7], 1
    %838 = vsyncpa %s837, 1

// kernel: mla_forward.2
$region0: #{mla_forward.2}
  #allocation0 [shape = 'u32[]', space=smem, size = 0x4, offset = 0x4, fixed_abs, tag = 'smem constant byte address 0x4 - core index']
  #allocation1 [shape = 'u32[144,128]{1,0:T(1,128)}', space=vmem, size = 0x12000, scoped, tag = 'internal scratch']
  %s0 = inlined_call_operand.vmem [shape: f32[2,8,64], index: 0, kind: input, shape index: {}]
  %s1 = inlined_call_operand.vmem [shape: bf16[64,21], index: 1, kind: input, shape index: {}]
  %s2 = inlined_call_operand.vmem [shape: f32[1,21], index: 2, kind: input, shape index: {}]
  %s3 = inlined_call_operand.vmem [shape: f32[1,21], index: 3, kind: input, shape index: {}]
  %s4 = inlined_call_operand.vmem [shape: f32[1,21], index: 4, kind: input, shape index: {}]
  %s5 = inlined_call_operand.vmem [shape: bf16[21,32], index: 5, kind: input, shape index: {}]
  %s6 = inlined_call_operand.vmem [shape: f32[1,32], index: 6, kind: input, shape index: {}]
  %s7 = inlined_call_operand.vmem [shape: bf16[21,32], index: 7, kind: input, shape index: {}]
  %s8 = inlined_call_operand.vmem [shape: f32[1,32], index: 8, kind: input, shape index: {}]
  %s9 = inlined_call_operand.vmem [shape: bf16[64,32], index: 9, kind: input, shape index: {}]
  %s10 = inlined_call_operand.vmem [shape: f32[1,32], index: 10, kind: input, shape index: {}]
  %s11 = inlined_call_operand.vmem [shape: bf16[64,8], index: 11, kind: input, shape index: {}]
  %s12 = inlined_call_operand.vmem [shape: f32[1,8], index: 12, kind: input, shape index: {}]
  %s13 = inlined_call_operand.vmem [shape: f32[1,32], index: 13, kind: input, shape index: {}]
  %s14 = inlined_call_operand.vmem [shape: f32[1,32], index: 14, kind: input, shape index: {}]
  %s15 = inlined_call_operand.vmem [shape: bf16[32,32], index: 15, kind: input, shape index: {}]
  %s16 = inlined_call_operand.vmem [shape: f32[1,32], index: 16, kind: input, shape index: {}]
  %s17 = inlined_call_operand.vmem [shape: bf16[32,64], index: 17, kind: input, shape index: {}]
  %s18 = inlined_call_operand.vmem [shape: f32[1,64], index: 18, kind: input, shape index: {}]
  %s19 = inlined_call_operand.vmem [shape: bf16[2,4,8,8], index: 19, kind: output, shape index: {0}]
  %s20 = inlined_call_operand.vmem [shape: bf16[2,4,8,8], index: 20, kind: output, shape index: {1}]
  %s21 = inlined_call_operand.vmem [shape: bf16[2,4,8,8], index: 21, kind: output, shape index: {2}]
  %s22 = inlined_call_operand.vmem [shape: bf16[2,4,8,16], index: 22, kind: output, shape index: {3}]
  %s23 = inlined_call_operand.vmem [shape: bf16[2,8,8], index: 23, kind: output, shape index: {4}]
  %24 = xla_tuple %s19, %s20, %s21, %s22, %s23
  %s25 = sld [smem:[#allocation0]]
  $region141: #{mla_forward.2} parent=0
    _
  %s27 = ssub.s32 1, %s25
  %s28 = scalar_select 0, %s27, %s25
  loop: start=0, step=1, limit=4
  $region2: #{mla_forward.2} parent=0 // loop_pre_header
    _
  $region3: #{mla_forward.2} parent=0 // loop_header
    %s30 = sphi 0, %s34
    %p31 = scmp.ge.s32.totalorder %s30, 4
    %s37 = sphi 0, %s49
    %s38 = sphi 0, %s45
    %s39 = sphi 0, %s37
    %s40 = sphi 0, %s38
    %s41 = sphi 0, %s39
    %s42 = sphi 0, %s40
    %s54 = sphi 0, %s56
    %s57 = sphi 0, %s54
    %s58 = sphi 0, %s57
    %s74 = sphi 0, %s58
    %s78 = sphi 0, %s78
    %s80 = sphi 0, %s78
    %s81 = sphi 0, %s80
    %s95 = sphi 0, %s81
    %s99 = sphi 0, %s99
    %s101 = sphi 0, %s99
    %s102 = sphi 0, %s101
    %s116 = sphi 0, %s102
    %s120 = sphi 0, %s120
    %s122 = sphi 0, %s120
    %s123 = sphi 0, %s122
    %s137 = sphi 0, %s123
    %s141 = sphi 0, %s141
    %s143 = sphi 0, %s141
    %s144 = sphi 0, %s143
    %s158 = sphi 0, %s144
    %s162 = sphi 0, %s162
    %s164 = sphi 0, %s162
    %s165 = sphi 0, %s164
    %s179 = sphi 0, %s165
    %s183 = sphi 0, %s183
    %s185 = sphi 0, %s183
    %s186 = sphi 0, %s185
    %s200 = sphi 0, %s186
    %s204 = sphi 0, %s204
    %s206 = sphi 0, %s204
    %s207 = sphi 0, %s206
    %s221 = sphi 0, %s207
    %s225 = sphi 0, %s225
    %s227 = sphi 0, %s225
    %s228 = sphi 0, %s227
    %s242 = sphi 0, %s228
    %s246 = sphi 0, %s246
    %s248 = sphi 0, %s246
    %s249 = sphi 0, %s248
    %s263 = sphi 0, %s249
    %s267 = sphi 0, %s267
    %s269 = sphi 0, %s267
    %s270 = sphi 0, %s269
    %s284 = sphi 0, %s270
    %s288 = sphi 0, %s288
    %s290 = sphi 0, %s288
    %s291 = sphi 0, %s290
    %s305 = sphi 0, %s291
    %s309 = sphi 0, %s309
    %s311 = sphi 0, %s309
    %s312 = sphi 0, %s311
    %s326 = sphi 0, %s312
    %s330 = sphi 0, %s330
    %s332 = sphi 0, %s330
    %s333 = sphi 0, %s332
    %s347 = sphi 0, %s333
    %s351 = sphi 0, %s351
    %s353 = sphi 0, %s351
    %s354 = sphi 0, %s353
    %s368 = sphi 0, %s354
    %s372 = sphi 0, %s372
    %s374 = sphi 0, %s372
    %s375 = sphi 0, %s374
    %s389 = sphi 0, %s375
    %s393 = sphi 0, %s393
    %s395 = sphi 0, %s393
    %s396 = sphi 0, %s395
    %s410 = sphi 0, %s396
    %s414 = sphi 0, %s414
    %s416 = sphi 0, %s414
    %s417 = sphi 0, %s416
    %s431 = sphi 0, %s417
    %s435 = sphi 0, %s435
    %s437 = sphi 0, %s435
    %s438 = sphi 0, %s437
    %s452 = sphi 0, %s438
    %s460 = sphi 0, %s462
    %s463 = sphi 0, %s460
    %s464 = sphi 0, %s463
    %s480 = sphi 0, %s464
    %s488 = sphi 0, %s490
    %s491 = sphi 0, %s488
    %s492 = sphi 0, %s491
    %s508 = sphi 0, %s492
    %s516 = sphi 0, %s518
    %s519 = sphi 0, %s516
    %s520 = sphi 0, %s519
    %s536 = sphi 0, %s520
    %s544 = sphi 0, %s546
    %s547 = sphi 0, %s544
    %s548 = sphi 0, %s547
    %s564 = sphi 0, %s548
    %s572 = sphi 0, %s574
    %s575 = sphi 0, %s572
    %s576 = sphi 0, %s575
    %s592 = sphi 0, %s576
  $region4: #{mla_forward.2} parent=0 // loop_header_branch
    %33 = sbr.rel (%p31) target = $region8
  $region5: #{mla_forward.2} parent=0 // loop_body
    %s35 = ssub.s32 %s30, 1
    %s36 = ssub.s32 %s30, 2
    %s43 = sadd.s32 1, %s38
    %p44 = scmp.ge.s32.totalorder %s43, 1
    %s45 = scalar_select %p44, 0, %s43
    %s46 = sadd.s32 1, %s37
    %s47 = scalar_select %p44, %s46, %s37
    %p48 = scmp.ge.s32.totalorder %s47, 2
    %s49 = scalar_select %p48, 0, %s47
    %s50 = ssub.s32 %s37, %s49
    %s51 = ssub.s32 %s38, %s45
    %s52 = sor.u32 %s50, %s51
    %p53 = scmp.eq.s32.totalorder %s52, 0
    %s55 = sadd.s32 %s54, 1
    %s56 = scalar_select %p53, %s54, %s55
    %p59 = pneg %p53
    %p60 = scmp.eq.s32.totalorder %s30, 1
    %p61 = por %p59, %p60
    %p62 = scmp.ne.s32.totalorder %s54, %s57
    %p63 = scmp.eq.s32.totalorder %s30, 0
    %p64 = por %p62, %p63
    %p65 = scmp.ne.s32.totalorder %s54, %s57
    %p66 = scmp.eq.s32.totalorder %s35, 1
    %p67 = por %p65, %p66
    %p68 = scmp.ne.s32.totalorder %s57, %s58
    %p69 = scmp.eq.s32.totalorder %s35, 0
    %p70 = por %p68, %p69
    %p71 = scmp.ne.s32.totalorder %s57, %s58
    %p72 = scmp.eq.s32.totalorder %s36, 1
    %p73 = por %p71, %p72
    %p75 = scmp.ne.s32.totalorder %s58, %s74
    %p76 = scmp.eq.s32.totalorder %s36, 0
    %p77 = por %p75, %p76
    %s79 = sadd.s32 %s78, 1
    %p82 = scmp.eq.s32.totalorder %s30, 1
    %p83 = scmp.ne.s32.totalorder %s78, %s80
    %p84 = scmp.eq.s32.totalorder %s30, 0
    %p85 = por %p83, %p84
    %p86 = scmp.ne.s32.totalorder %s78, %s80
    %p87 = scmp.eq.s32.totalorder %s35, 1
    %p88 = por %p86, %p87
    %p89 = scmp.ne.s32.totalorder %s80, %s81
    %p90 = scmp.eq.s32.totalorder %s35, 0
    %p91 = por %p89, %p90
    %p92 = scmp.ne.s32.totalorder %s80, %s81
    %p93 = scmp.eq.s32.totalorder %s36, 1
    %p94 = por %p92, %p93
    %p96 = scmp.ne.s32.totalorder %s81, %s95
    %p97 = scmp.eq.s32.totalorder %s36, 0
    %p98 = por %p96, %p97
    %s100 = sadd.s32 %s99, 1
    %p103 = scmp.eq.s32.totalorder %s30, 1
    %p104 = scmp.ne.s32.totalorder %s99, %s101
    %p105 = scmp.eq.s32.totalorder %s30, 0
    %p106 = por %p104, %p105
    %p107 = scmp.ne.s32.totalorder %s99, %s101
    %p108 = scmp.eq.s32.totalorder %s35, 1
    %p109 = por %p107, %p108
    %p110 = scmp.ne.s32.totalorder %s101, %s102
    %p111 = scmp.eq.s32.totalorder %s35, 0
    %p112 = por %p110, %p111
    %p113 = scmp.ne.s32.totalorder %s101, %s102
    %p114 = scmp.eq.s32.totalorder %s36, 1
    %p115 = por %p113, %p114
    %p117 = scmp.ne.s32.totalorder %s102, %s116
    %p118 = scmp.eq.s32.totalorder %s36, 0
    %p119 = por %p117, %p118
    %s121 = sadd.s32 %s120, 1
    %p124 = scmp.eq.s32.totalorder %s30, 1
    %p125 = scmp.ne.s32.totalorder %s120, %s122
    %p126 = scmp.eq.s32.totalorder %s30, 0
    %p127 = por %p125, %p126
    %p128 = scmp.ne.s32.totalorder %s120, %s122
    %p129 = scmp.eq.s32.totalorder %s35, 1
    %p130 = por %p128, %p129
    %p131 = scmp.ne.s32.totalorder %s122, %s123
    %p132 = scmp.eq.s32.totalorder %s35, 0
    %p133 = por %p131, %p132
    %p134 = scmp.ne.s32.totalorder %s122, %s123
    %p135 = scmp.eq.s32.totalorder %s36, 1
    %p136 = por %p134, %p135
    %p138 = scmp.ne.s32.totalorder %s123, %s137
    %p139 = scmp.eq.s32.totalorder %s36, 0
    %p140 = por %p138, %p139
    %s142 = sadd.s32 %s141, 1
    %p145 = scmp.eq.s32.totalorder %s30, 1
    %p146 = scmp.ne.s32.totalorder %s141, %s143
    %p147 = scmp.eq.s32.totalorder %s30, 0
    %p148 = por %p146, %p147
    %p149 = scmp.ne.s32.totalorder %s141, %s143
    %p150 = scmp.eq.s32.totalorder %s35, 1
    %p151 = por %p149, %p150
    %p152 = scmp.ne.s32.totalorder %s143, %s144
    %p153 = scmp.eq.s32.totalorder %s35, 0
    %p154 = por %p152, %p153
    %p155 = scmp.ne.s32.totalorder %s143, %s144
    %p156 = scmp.eq.s32.totalorder %s36, 1
    %p157 = por %p155, %p156
    %p159 = scmp.ne.s32.totalorder %s144, %s158
    %p160 = scmp.eq.s32.totalorder %s36, 0
    %p161 = por %p159, %p160
    %s163 = sadd.s32 %s162, 1
    %p166 = scmp.eq.s32.totalorder %s30, 1
    %p167 = scmp.ne.s32.totalorder %s162, %s164
    %p168 = scmp.eq.s32.totalorder %s30, 0
    %p169 = por %p167, %p168
    %p170 = scmp.ne.s32.totalorder %s162, %s164
    %p171 = scmp.eq.s32.totalorder %s35, 1
    %p172 = por %p170, %p171
    %p173 = scmp.ne.s32.totalorder %s164, %s165
    %p174 = scmp.eq.s32.totalorder %s35, 0
    %p175 = por %p173, %p174
    %p176 = scmp.ne.s32.totalorder %s164, %s165
    %p177 = scmp.eq.s32.totalorder %s36, 1
    %p178 = por %p176, %p177
    %p180 = scmp.ne.s32.totalorder %s165, %s179
    %p181 = scmp.eq.s32.totalorder %s36, 0
    %p182 = por %p180, %p181
    %s184 = sadd.s32 %s183, 1
    %p187 = scmp.eq.s32.totalorder %s30, 1
    %p188 = scmp.ne.s32.totalorder %s183, %s185
    %p189 = scmp.eq.s32.totalorder %s30, 0
    %p190 = por %p188, %p189
    %p191 = scmp.ne.s32.totalorder %s183, %s185
    %p192 = scmp.eq.s32.totalorder %s35, 1
    %p193 = por %p191, %p192
    %p194 = scmp.ne.s32.totalorder %s185, %s186
    %p195 = scmp.eq.s32.totalorder %s35, 0
    %p196 = por %p194, %p195
    %p197 = scmp.ne.s32.totalorder %s185, %s186
    %p198 = scmp.eq.s32.totalorder %s36, 1
    %p199 = por %p197, %p198
    %p201 = scmp.ne.s32.totalorder %s186, %s200
    %p202 = scmp.eq.s32.totalorder %s36, 0
    %p203 = por %p201, %p202
    %s205 = sadd.s32 %s204, 1
    %p208 = scmp.eq.s32.totalorder %s30, 1
    %p209 = scmp.ne.s32.totalorder %s204, %s206
    %p210 = scmp.eq.s32.totalorder %s30, 0
    %p211 = por %p209, %p210
    %p212 = scmp.ne.s32.totalorder %s204, %s206
    %p213 = scmp.eq.s32.totalorder %s35, 1
    %p214 = por %p212, %p213
    %p215 = scmp.ne.s32.totalorder %s206, %s207
    %p216 = scmp.eq.s32.totalorder %s35, 0
    %p217 = por %p215, %p216
    %p218 = scmp.ne.s32.totalorder %s206, %s207
    %p219 = scmp.eq.s32.totalorder %s36, 1
    %p220 = por %p218, %p219
    %p222 = scmp.ne.s32.totalorder %s207, %s221
    %p223 = scmp.eq.s32.totalorder %s36, 0
    %p224 = por %p222, %p223
    %s226 = sadd.s32 %s225, 1
    %p229 = scmp.eq.s32.totalorder %s30, 1
    %p230 = scmp.ne.s32.totalorder %s225, %s227
    %p231 = scmp.eq.s32.totalorder %s30, 0
    %p232 = por %p230, %p231
    %p233 = scmp.ne.s32.totalorder %s225, %s227
    %p234 = scmp.eq.s32.totalorder %s35, 1
    %p235 = por %p233, %p234
    %p236 = scmp.ne.s32.totalorder %s227, %s228
    %p237 = scmp.eq.s32.totalorder %s35, 0
    %p238 = por %p236, %p237
    %p239 = scmp.ne.s32.totalorder %s227, %s228
    %p240 = scmp.eq.s32.totalorder %s36, 1
    %p241 = por %p239, %p240
    %p243 = scmp.ne.s32.totalorder %s228, %s242
    %p244 = scmp.eq.s32.totalorder %s36, 0
    %p245 = por %p243, %p244
    %s247 = sadd.s32 %s246, 1
    %p250 = scmp.eq.s32.totalorder %s30, 1
    %p251 = scmp.ne.s32.totalorder %s246, %s248
    %p252 = scmp.eq.s32.totalorder %s30, 0
    %p253 = por %p251, %p252
    %p254 = scmp.ne.s32.totalorder %s246, %s248
    %p255 = scmp.eq.s32.totalorder %s35, 1
    %p256 = por %p254, %p255
    %p257 = scmp.ne.s32.totalorder %s248, %s249
    %p258 = scmp.eq.s32.totalorder %s35, 0
    %p259 = por %p257, %p258
    %p260 = scmp.ne.s32.totalorder %s248, %s249
    %p261 = scmp.eq.s32.totalorder %s36, 1
    %p262 = por %p260, %p261
    %p264 = scmp.ne.s32.totalorder %s249, %s263
    %p265 = scmp.eq.s32.totalorder %s36, 0
    %p266 = por %p264, %p265
    %s268 = sadd.s32 %s267, 1
    %p271 = scmp.eq.s32.totalorder %s30, 1
    %p272 = scmp.ne.s32.totalorder %s267, %s269
    %p273 = scmp.eq.s32.totalorder %s30, 0
    %p274 = por %p272, %p273
    %p275 = scmp.ne.s32.totalorder %s267, %s269
    %p276 = scmp.eq.s32.totalorder %s35, 1
    %p277 = por %p275, %p276
    %p278 = scmp.ne.s32.totalorder %s269, %s270
    %p279 = scmp.eq.s32.totalorder %s35, 0
    %p280 = por %p278, %p279
    %p281 = scmp.ne.s32.totalorder %s269, %s270
    %p282 = scmp.eq.s32.totalorder %s36, 1
    %p283 = por %p281, %p282
    %p285 = scmp.ne.s32.totalorder %s270, %s284
    %p286 = scmp.eq.s32.totalorder %s36, 0
    %p287 = por %p285, %p286
    %s289 = sadd.s32 %s288, 1
    %p292 = scmp.eq.s32.totalorder %s30, 1
    %p293 = scmp.ne.s32.totalorder %s288, %s290
    %p294 = scmp.eq.s32.totalorder %s30, 0
    %p295 = por %p293, %p294
    %p296 = scmp.ne.s32.totalorder %s288, %s290
    %p297 = scmp.eq.s32.totalorder %s35, 1
    %p298 = por %p296, %p297
    %p299 = scmp.ne.s32.totalorder %s290, %s291
    %p300 = scmp.eq.s32.totalorder %s35, 0
    %p301 = por %p299, %p300
    %p302 = scmp.ne.s32.totalorder %s290, %s291
    %p303 = scmp.eq.s32.totalorder %s36, 1
    %p304 = por %p302, %p303
    %p306 = scmp.ne.s32.totalorder %s291, %s305
    %p307 = scmp.eq.s32.totalorder %s36, 0
    %p308 = por %p306, %p307
    %s310 = sadd.s32 %s309, 1
    %p313 = scmp.eq.s32.totalorder %s30, 1
    %p314 = scmp.ne.s32.totalorder %s309, %s311
    %p315 = scmp.eq.s32.totalorder %s30, 0
    %p316 = por %p314, %p315
    %p317 = scmp.ne.s32.totalorder %s309, %s311
    %p318 = scmp.eq.s32.totalorder %s35, 1
    %p319 = por %p317, %p318
    %p320 = scmp.ne.s32.totalorder %s311, %s312
    %p321 = scmp.eq.s32.totalorder %s35, 0
    %p322 = por %p320, %p321
    %p323 = scmp.ne.s32.totalorder %s311, %s312
    %p324 = scmp.eq.s32.totalorder %s36, 1
    %p325 = por %p323, %p324
    %p327 = scmp.ne.s32.totalorder %s312, %s326
    %p328 = scmp.eq.s32.totalorder %s36, 0
    %p329 = por %p327, %p328
    %s331 = sadd.s32 %s330, 1
    %p334 = scmp.eq.s32.totalorder %s30, 1
    %p335 = scmp.ne.s32.totalorder %s330, %s332
    %p336 = scmp.eq.s32.totalorder %s30, 0
    %p337 = por %p335, %p336
    %p338 = scmp.ne.s32.totalorder %s330, %s332
    %p339 = scmp.eq.s32.totalorder %s35, 1
    %p340 = por %p338, %p339
    %p341 = scmp.ne.s32.totalorder %s332, %s333
    %p342 = scmp.eq.s32.totalorder %s35, 0
    %p343 = por %p341, %p342
    %p344 = scmp.ne.s32.totalorder %s332, %s333
    %p345 = scmp.eq.s32.totalorder %s36, 1
    %p346 = por %p344, %p345
    %p348 = scmp.ne.s32.totalorder %s333, %s347
    %p349 = scmp.eq.s32.totalorder %s36, 0
    %p350 = por %p348, %p349
    %s352 = sadd.s32 %s351, 1
    %p355 = scmp.eq.s32.totalorder %s30, 1
    %p356 = scmp.ne.s32.totalorder %s351, %s353
    %p357 = scmp.eq.s32.totalorder %s30, 0
    %p358 = por %p356, %p357
    %p359 = scmp.ne.s32.totalorder %s351, %s353
    %p360 = scmp.eq.s32.totalorder %s35, 1
    %p361 = por %p359, %p360
    %p362 = scmp.ne.s32.totalorder %s353, %s354
    %p363 = scmp.eq.s32.totalorder %s35, 0
    %p364 = por %p362, %p363
    %p365 = scmp.ne.s32.totalorder %s353, %s354
    %p366 = scmp.eq.s32.totalorder %s36, 1
    %p367 = por %p365, %p366
    %p369 = scmp.ne.s32.totalorder %s354, %s368
    %p370 = scmp.eq.s32.totalorder %s36, 0
    %p371 = por %p369, %p370
    %s373 = sadd.s32 %s372, 1
    %p376 = scmp.eq.s32.totalorder %s30, 1
    %p377 = scmp.ne.s32.totalorder %s372, %s374
    %p378 = scmp.eq.s32.totalorder %s30, 0
    %p379 = por %p377, %p378
    %p380 = scmp.ne.s32.totalorder %s372, %s374
    %p381 = scmp.eq.s32.totalorder %s35, 1
    %p382 = por %p380, %p381
    %p383 = scmp.ne.s32.totalorder %s374, %s375
    %p384 = scmp.eq.s32.totalorder %s35, 0
    %p385 = por %p383, %p384
    %p386 = scmp.ne.s32.totalorder %s374, %s375
    %p387 = scmp.eq.s32.totalorder %s36, 1
    %p388 = por %p386, %p387
    %p390 = scmp.ne.s32.totalorder %s375, %s389
    %p391 = scmp.eq.s32.totalorder %s36, 0
    %p392 = por %p390, %p391
    %s394 = sadd.s32 %s393, 1
    %p397 = scmp.eq.s32.totalorder %s30, 1
    %p398 = scmp.ne.s32.totalorder %s393, %s395
    %p399 = scmp.eq.s32.totalorder %s30, 0
    %p400 = por %p398, %p399
    %p401 = scmp.ne.s32.totalorder %s393, %s395
    %p402 = scmp.eq.s32.totalorder %s35, 1
    %p403 = por %p401, %p402
    %p404 = scmp.ne.s32.totalorder %s395, %s396
    %p405 = scmp.eq.s32.totalorder %s35, 0
    %p406 = por %p404, %p405
    %p407 = scmp.ne.s32.totalorder %s395, %s396
    %p408 = scmp.eq.s32.totalorder %s36, 1
    %p409 = por %p407, %p408
    %p411 = scmp.ne.s32.totalorder %s396, %s410
    %p412 = scmp.eq.s32.totalorder %s36, 0
    %p413 = por %p411, %p412
    %s415 = sadd.s32 %s414, 1
    %p418 = scmp.eq.s32.totalorder %s30, 1
    %p419 = scmp.ne.s32.totalorder %s414, %s416
    %p420 = scmp.eq.s32.totalorder %s30, 0
    %p421 = por %p419, %p420
    %p422 = scmp.ne.s32.totalorder %s414, %s416
    %p423 = scmp.eq.s32.totalorder %s35, 1
    %p424 = por %p422, %p423
    %p425 = scmp.ne.s32.totalorder %s416, %s417
    %p426 = scmp.eq.s32.totalorder %s35, 0
    %p427 = por %p425, %p426
    %p428 = scmp.ne.s32.totalorder %s416, %s417
    %p429 = scmp.eq.s32.totalorder %s36, 1
    %p430 = por %p428, %p429
    %p432 = scmp.ne.s32.totalorder %s417, %s431
    %p433 = scmp.eq.s32.totalorder %s36, 0
    %p434 = por %p432, %p433
    %s436 = sadd.s32 %s435, 1
    %p439 = scmp.eq.s32.totalorder %s30, 1
    %p440 = scmp.ne.s32.totalorder %s435, %s437
    %p441 = scmp.eq.s32.totalorder %s30, 0
    %p442 = por %p440, %p441
    %p443 = scmp.ne.s32.totalorder %s435, %s437
    %p444 = scmp.eq.s32.totalorder %s35, 1
    %p445 = por %p443, %p444
    %p446 = scmp.ne.s32.totalorder %s437, %s438
    %p447 = scmp.eq.s32.totalorder %s35, 0
    %p448 = por %p446, %p447
    %p449 = scmp.ne.s32.totalorder %s437, %s438
    %p450 = scmp.eq.s32.totalorder %s36, 1
    %p451 = por %p449, %p450
    %p453 = scmp.ne.s32.totalorder %s438, %s452
    %p454 = scmp.eq.s32.totalorder %s36, 0
    %p455 = por %p453, %p454
    %s456 = ssub.s32 %s37, %s49
    %s457 = ssub.s32 %s38, %s45
    %s458 = sor.u32 %s456, %s457
    %p459 = scmp.eq.s32.totalorder %s458, 0
    %s461 = sadd.s32 %s460, 1
    %s462 = scalar_select %p459, %s460, %s461
    %p465 = pneg %p459
    %p466 = scmp.eq.s32.totalorder %s30, 1
    %p467 = por %p465, %p466
    %p468 = scmp.ne.s32.totalorder %s460, %s463
    %p469 = scmp.eq.s32.totalorder %s30, 0
    %p470 = por %p468, %p469
    %p471 = scmp.ne.s32.totalorder %s460, %s463
    %p472 = scmp.eq.s32.totalorder %s35, 1
    %p473 = por %p471, %p472
    %p474 = scmp.ne.s32.totalorder %s463, %s464
    %p475 = scmp.eq.s32.totalorder %s35, 0
    %p476 = por %p474, %p475
    %p477 = scmp.ne.s32.totalorder %s463, %s464
    %p478 = scmp.eq.s32.totalorder %s36, 1
    %p479 = por %p477, %p478
    %p481 = scmp.ne.s32.totalorder %s464, %s480
    %p482 = scmp.eq.s32.totalorder %s36, 0
    %p483 = por %p481, %p482
    %s484 = ssub.s32 %s37, %s49
    %s485 = ssub.s32 %s38, %s45
    %s486 = sor.u32 %s484, %s485
    %p487 = scmp.eq.s32.totalorder %s486, 0
    %s489 = sadd.s32 %s488, 1
    %s490 = scalar_select %p487, %s488, %s489
    %p493 = pneg %p487
    %p494 = scmp.eq.s32.totalorder %s30, 1
    %p495 = por %p493, %p494
    %p496 = scmp.ne.s32.totalorder %s488, %s491
    %p497 = scmp.eq.s32.totalorder %s30, 0
    %p498 = por %p496, %p497
    %p499 = scmp.ne.s32.totalorder %s488, %s491
    %p500 = scmp.eq.s32.totalorder %s35, 1
    %p501 = por %p499, %p500
    %p502 = scmp.ne.s32.totalorder %s491, %s492
    %p503 = scmp.eq.s32.totalorder %s35, 0
    %p504 = por %p502, %p503
    %p505 = scmp.ne.s32.totalorder %s491, %s492
    %p506 = scmp.eq.s32.totalorder %s36, 1
    %p507 = por %p505, %p506
    %p509 = scmp.ne.s32.totalorder %s492, %s508
    %p510 = scmp.eq.s32.totalorder %s36, 0
    %p511 = por %p509, %p510
    %s512 = ssub.s32 %s37, %s49
    %s513 = ssub.s32 %s38, %s45
    %s514 = sor.u32 %s512, %s513
    %p515 = scmp.eq.s32.totalorder %s514, 0
    %s517 = sadd.s32 %s516, 1
    %s518 = scalar_select %p515, %s516, %s517
    %p521 = pneg %p515
    %p522 = scmp.eq.s32.totalorder %s30, 1
    %p523 = por %p521, %p522
    %p524 = scmp.ne.s32.totalorder %s516, %s519
    %p525 = scmp.eq.s32.totalorder %s30, 0
    %p526 = por %p524, %p525
    %p527 = scmp.ne.s32.totalorder %s516, %s519
    %p528 = scmp.eq.s32.totalorder %s35, 1
    %p529 = por %p527, %p528
    %p530 = scmp.ne.s32.totalorder %s519, %s520
    %p531 = scmp.eq.s32.totalorder %s35, 0
    %p532 = por %p530, %p531
    %p533 = scmp.ne.s32.totalorder %s519, %s520
    %p534 = scmp.eq.s32.totalorder %s36, 1
    %p535 = por %p533, %p534
    %p537 = scmp.ne.s32.totalorder %s520, %s536
    %p538 = scmp.eq.s32.totalorder %s36, 0
    %p539 = por %p537, %p538
    %s540 = ssub.s32 %s37, %s49
    %s541 = ssub.s32 %s38, %s45
    %s542 = sor.u32 %s540, %s541
    %p543 = scmp.eq.s32.totalorder %s542, 0
    %s545 = sadd.s32 %s544, 1
    %s546 = scalar_select %p543, %s544, %s545
    %p549 = pneg %p543
    %p550 = scmp.eq.s32.totalorder %s30, 1
    %p551 = por %p549, %p550
    %p552 = scmp.ne.s32.totalorder %s544, %s547
    %p553 = scmp.eq.s32.totalorder %s30, 0
    %p554 = por %p552, %p553
    %p555 = scmp.ne.s32.totalorder %s544, %s547
    %p556 = scmp.eq.s32.totalorder %s35, 1
    %p557 = por %p555, %p556
    %p558 = scmp.ne.s32.totalorder %s547, %s548
    %p559 = scmp.eq.s32.totalorder %s35, 0
    %p560 = por %p558, %p559
    %p561 = scmp.ne.s32.totalorder %s547, %s548
    %p562 = scmp.eq.s32.totalorder %s36, 1
    %p563 = por %p561, %p562
    %p565 = scmp.ne.s32.totalorder %s548, %s564
    %p566 = scmp.eq.s32.totalorder %s36, 0
    %p567 = por %p565, %p566
    %s568 = ssub.s32 %s37, %s49
    %s569 = ssub.s32 %s38, %s45
    %s570 = sor.u32 %s568, %s569
    %p571 = scmp.eq.s32.totalorder %s570, 0
    %s573 = sadd.s32 %s572, 1
    %s574 = scalar_select %p571, %s572, %s573
    %p577 = pneg %p571
    %p578 = scmp.eq.s32.totalorder %s30, 1
    %p579 = por %p577, %p578
    %p580 = scmp.ne.s32.totalorder %s572, %s575
    %p581 = scmp.eq.s32.totalorder %s30, 0
    %p582 = por %p580, %p581
    %p583 = scmp.ne.s32.totalorder %s572, %s575
    %p584 = scmp.eq.s32.totalorder %s35, 1
    %p585 = por %p583, %p584
    %p586 = scmp.ne.s32.totalorder %s575, %s576
    %p587 = scmp.eq.s32.totalorder %s35, 0
    %p588 = por %p586, %p587
    %p589 = scmp.ne.s32.totalorder %s575, %s576
    %p590 = scmp.eq.s32.totalorder %s36, 1
    %p591 = por %p589, %p590
    %p593 = scmp.ne.s32.totalorder %s576, %s592
    %p594 = scmp.eq.s32.totalorder %s36, 0
    %p595 = por %p593, %p594
    %p596 = scmp.le.s32.totalorder 1, %s30
    %p597 = scmp.lt.s32.totalorder %s30, 3
    %p598 = pnand %p596, %p597
    %p599 = pneg %p598
    // Predicated region
    $region9: #{mla_forward.2} parent=5 // pred_check
      _
    $region10: #{mla_forward.2} parent=5 // pred_check_branch
      %601 = sbr.rel (%p598) target = $region12
    $region11: #{mla_forward.2} parent=5 // pred_region
      %s602 = ssub.s32 %s30, 1
      // Predicated region
      $region13: #{mla_forward.2} parent=11 // pred_check
        %p603 = pneg %p91
      $region14: #{mla_forward.2} parent=11 // pred_check_branch
        %605 = sbr.rel (%p603) target = $region16
      $region15: #{mla_forward.2} parent=11 // pred_region
        _
      $region16: #{mla_forward.2} parent=11 // pred_fallthru
        _
      // Predicated region
      $region17: #{mla_forward.2} parent=11 // pred_check
        %p606 = pneg %p112
      $region18: #{mla_forward.2} parent=11 // pred_check_branch
        %608 = sbr.rel (%p606) target = $region20
      $region19: #{mla_forward.2} parent=11 // pred_region
        _
      $region20: #{mla_forward.2} parent=11 // pred_fallthru
        _
      // Predicated region
      $region21: #{mla_forward.2} parent=11 // pred_check
        %p609 = pneg %p133
      $region22: #{mla_forward.2} parent=11 // pred_check_branch
        %611 = sbr.rel (%p609) target = $region24
      $region23: #{mla_forward.2} parent=11 // pred_region
        _
      $region24: #{mla_forward.2} parent=11 // pred_fallthru
        _
      // Predicated region
      $region25: #{mla_forward.2} parent=11 // pred_check
        %p612 = pneg %p154
      $region26: #{mla_forward.2} parent=11 // pred_check_branch
        %614 = sbr.rel (%p612) target = $region28
      $region27: #{mla_forward.2} parent=11 // pred_region
        _
      $region28: #{mla_forward.2} parent=11 // pred_fallthru
        _
      // Predicated region
      $region29: #{mla_forward.2} parent=11 // pred_check
        %p615 = pneg %p175
      $region30: #{mla_forward.2} parent=11 // pred_check_branch
        %617 = sbr.rel (%p615) target = $region32
      $region31: #{mla_forward.2} parent=11 // pred_region
        _
      $region32: #{mla_forward.2} parent=11 // pred_fallthru
        _
      // Predicated region
      $region33: #{mla_forward.2} parent=11 // pred_check
        %p618 = pneg %p196
      $region34: #{mla_forward.2} parent=11 // pred_check_branch
        %620 = sbr.rel (%p618) target = $region36
      $region35: #{mla_forward.2} parent=11 // pred_region
        _
      $region36: #{mla_forward.2} parent=11 // pred_fallthru
        _
      // Predicated region
      $region37: #{mla_forward.2} parent=11 // pred_check
        %p621 = pneg %p217
      $region38: #{mla_forward.2} parent=11 // pred_check_branch
        %623 = sbr.rel (%p621) target = $region40
      $region39: #{mla_forward.2} parent=11 // pred_region
        _
      $region40: #{mla_forward.2} parent=11 // pred_fallthru
        _
      // Predicated region
      $region41: #{mla_forward.2} parent=11 // pred_check
        %p624 = pneg %p238
      $region42: #{mla_forward.2} parent=11 // pred_check_branch
        %626 = sbr.rel (%p624) target = $region44
      $region43: #{mla_forward.2} parent=11 // pred_region
        _
      $region44: #{mla_forward.2} parent=11 // pred_fallthru
        _
      // Predicated region
      $region45: #{mla_forward.2} parent=11 // pred_check
        %p627 = pneg %p259
      $region46: #{mla_forward.2} parent=11 // pred_check_branch
        %629 = sbr.rel (%p627) target = $region48
      $region47: #{mla_forward.2} parent=11 // pred_region
        _
      $region48: #{mla_forward.2} parent=11 // pred_fallthru
        _
      // Predicated region
      $region49: #{mla_forward.2} parent=11 // pred_check
        %p630 = pneg %p280
      $region50: #{mla_forward.2} parent=11 // pred_check_branch
        %632 = sbr.rel (%p630) target = $region52
      $region51: #{mla_forward.2} parent=11 // pred_region
        _
      $region52: #{mla_forward.2} parent=11 // pred_fallthru
        _
      // Predicated region
      $region53: #{mla_forward.2} parent=11 // pred_check
        %p633 = pneg %p301
      $region54: #{mla_forward.2} parent=11 // pred_check_branch
        %635 = sbr.rel (%p633) target = $region56
      $region55: #{mla_forward.2} parent=11 // pred_region
        _
      $region56: #{mla_forward.2} parent=11 // pred_fallthru
        _
      // Predicated region
      $region57: #{mla_forward.2} parent=11 // pred_check
        %p636 = pneg %p322
      $region58: #{mla_forward.2} parent=11 // pred_check_branch
        %638 = sbr.rel (%p636) target = $region60
      $region59: #{mla_forward.2} parent=11 // pred_region
        _
      $region60: #{mla_forward.2} parent=11 // pred_fallthru
        _
      // Predicated region
      $region61: #{mla_forward.2} parent=11 // pred_check
        %p639 = pneg %p343
      $region62: #{mla_forward.2} parent=11 // pred_check_branch
        %641 = sbr.rel (%p639) target = $region64
      $region63: #{mla_forward.2} parent=11 // pred_region
        _
      $region64: #{mla_forward.2} parent=11 // pred_fallthru
        _
      // Predicated region
      $region65: #{mla_forward.2} parent=11 // pred_check
        %p642 = pneg %p364
      $region66: #{mla_forward.2} parent=11 // pred_check_branch
        %644 = sbr.rel (%p642) target = $region68
      $region67: #{mla_forward.2} parent=11 // pred_region
        _
      $region68: #{mla_forward.2} parent=11 // pred_fallthru
        _
      // Predicated region
      $region69: #{mla_forward.2} parent=11 // pred_check
        %p645 = pneg %p385
      $region70: #{mla_forward.2} parent=11 // pred_check_branch
        %647 = sbr.rel (%p645) target = $region72
      $region71: #{mla_forward.2} parent=11 // pred_region
        _
      $region72: #{mla_forward.2} parent=11 // pred_fallthru
        _
      // Predicated region
      $region73: #{mla_forward.2} parent=11 // pred_check
        %p648 = pneg %p406
      $region74: #{mla_forward.2} parent=11 // pred_check_branch
        %650 = sbr.rel (%p648) target = $region76
      $region75: #{mla_forward.2} parent=11 // pred_region
        _
      $region76: #{mla_forward.2} parent=11 // pred_fallthru
        _
      // Predicated region
      $region77: #{mla_forward.2} parent=11 // pred_check
        %p651 = pneg %p427
      $region78: #{mla_forward.2} parent=11 // pred_check_branch
        %653 = sbr.rel (%p651) target = $region80
      $region79: #{mla_forward.2} parent=11 // pred_region
        _
      $region80: #{mla_forward.2} parent=11 // pred_fallthru
        _
      // Predicated region
      $region81: #{mla_forward.2} parent=11 // pred_check
        %p654 = pneg %p448
      $region82: #{mla_forward.2} parent=11 // pred_check_branch
        %656 = sbr.rel (%p654) target = $region84
      $region83: #{mla_forward.2} parent=11 // pred_region
        _
      $region84: #{mla_forward.2} parent=11 // pred_fallthru
        _
    $region12: #{mla_forward.2} parent=5 // pred_fallthru
      _
    %p657 = scmp.lt.s32.totalorder %s30, 2
    // Predicated region
    $region85: #{mla_forward.2} parent=5 // pred_check
      %p658 = pneg %p657
    $region86: #{mla_forward.2} parent=5 // pred_check_branch
      %660 = sbr.rel (%p658) target = $region88
    $region87: #{mla_forward.2} parent=5 // pred_region
      // Predicated region
      $region89: #{mla_forward.2} parent=87 // pred_check
        %p661 = pneg %p64
      $region90: #{mla_forward.2} parent=87 // pred_check_branch
        %663 = sbr.rel (%p661) target = $region92
      $region91: #{mla_forward.2} parent=87 // pred_region
        %p664 = scmp.lt.s32.totalorder %s37, 1
        %s665 = scalar_select %p664, %s37, 1
        %p666 = scmp.lt.s32.totalorder %s38, 0
        %s667 = scalar_select %p666, %s38, 0
        %s668 = sadd.s32 %s667, %s665
        %s669 = smul.addr %s668, 8
        %s670 = scalar_lea.vmem %s0, %s669
      $region92: #{mla_forward.2} parent=87 // pred_fallthru
        _
    $region88: #{mla_forward.2} parent=5 // pred_fallthru
      _
    %p671 = scmp.le.s32.totalorder 1, %s30
    %p672 = scmp.lt.s32.totalorder %s30, 3
    %p673 = pnand %p671, %p672
    %p674 = pneg %p673
    // Predicated region
    $region93: #{mla_forward.2} parent=5 // pred_check
      _
    $region94: #{mla_forward.2} parent=5 // pred_check_branch
      %676 = sbr.rel (%p673) target = $region96
    $region95: #{mla_forward.2} parent=5 // pred_region
      %s677 = ssub.s32 %s30, 1
      %p678 = scmp.lt.s32.totalorder %s39, 1
      %s679 = scalar_select %p678, %s39, 1
      %p680 = scmp.lt.s32.totalorder %s40, 0
      %s681 = scalar_select %p680, %s40, 0
      %s682 = sadd.s32 %s681, %s679
      %s683 = smul.addr %s682, 8
      %s684 = scalar_lea.vmem %s0, %s683
      %p685 = pneg %p70
      %p686 = pneg %p67
      %p687 = pneg %p91
      %p688 = pneg %p88
      %p689 = pneg %p112
      %p690 = pneg %p109
      %p691 = pneg %p133
      %p692 = pneg %p130
      %p693 = pneg %p154
      %p694 = pneg %p151
      %p695 = pneg %p175
      %p696 = pneg %p172
      %p697 = pneg %p196
      %p698 = pneg %p193
      %p699 = pneg %p217
      %p700 = pneg %p214
      %p701 = pneg %p238
      %p702 = pneg %p235
      %p703 = pneg %p259
      %p704 = pneg %p256
      %p705 = pneg %p280
      %p706 = pneg %p277
      %p707 = pneg %p301
      %p708 = pneg %p298
      %p709 = pneg %p322
      %p710 = pneg %p319
      %p711 = pneg %p343
      %p712 = pneg %p340
      %p713 = pneg %p364
      %p714 = pneg %p361
      %p715 = pneg %p385
      %p716 = pneg %p382
      %p717 = pneg %p406
      %p718 = pneg %p403
      %p719 = pneg %p427
      %p720 = pneg %p424
      %p721 = pneg %p448
      %p722 = pneg %p445
      %p723 = pneg %p476
      %p724 = pneg %p473
      %p725 = scmp.lt.s32.totalorder %s39, 1
      %s726 = scalar_select %p725, %s39, 1
      %p727 = scmp.lt.s32.totalorder %s40, 0
      %s728 = scalar_select %p727, %s40, 0
      %s729 = smul.addr %s726, 4
      %s730 = sadd.s32 %s728, %s729
      %s731 = smul.addr %s730, 4
      %s732 = scalar_lea.vmem %s19, %s731
      %p733 = pneg %p504
      %p734 = pneg %p501
      %p735 = scmp.lt.s32.totalorder %s39, 1
      %s736 = scalar_select %p735, %s39, 1
      %p737 = scmp.lt.s32.totalorder %s40, 0
      %s738 = scalar_select %p737, %s40, 0
      %s739 = smul.addr %s736, 4
      %s740 = sadd.s32 %s738, %s739
      %s741 = smul.addr %s740, 4
      %s742 = scalar_lea.vmem %s20, %s741
      %p743 = pneg %p532
      %p744 = pneg %p529
      %p745 = scmp.lt.s32.totalorder %s39, 1
      %s746 = scalar_select %p745, %s39, 1
      %p747 = scmp.lt.s32.totalorder %s40, 0
      %s748 = scalar_select %p747, %s40, 0
      %s749 = smul.addr %s746, 4
      %s750 = sadd.s32 %s748, %s749
      %s751 = smul.addr %s750, 4
      %s752 = scalar_lea.vmem %s21, %s751
      %p753 = pneg %p560
      %p754 = pneg %p557
      %p755 = scmp.lt.s32.totalorder %s39, 1
      %s756 = scalar_select %p755, %s39, 1
      %p757 = scmp.lt.s32.totalorder %s40, 0
      %s758 = scalar_select %p757, %s40, 0
      %s759 = smul.addr %s756, 4
      %s760 = sadd.s32 %s758, %s759
      %s761 = smul.addr %s760, 4
      %s762 = scalar_lea.vmem %s22, %s761
      %p763 = pneg %p588
      %p764 = pneg %p585
      %p765 = scmp.lt.s32.totalorder %s39, 1
      %s766 = scalar_select %p765, %s39, 1
      %p767 = scmp.lt.s32.totalorder %s40, 0
      %s768 = scalar_select %p767, %s40, 0
      %s769 = sadd.s32 %s768, %s766
      %s770 = smul.addr %s769, 4
      %s771 = scalar_lea.vmem %s23, %s770
      %p772 = scmp.lt.s32.totalorder %s39, 1
      %s773 = scalar_select %p772, %s39, 1
      %p774 = scmp.lt.s32.totalorder %s40, 0
      %s775 = scalar_select %p774, %s40, 0
      %s776 = sadd.s32 %s775, %s773
      %s777 = smul.addr %s776, 8
      %s778 = scalar_lea.vmem %s0, %s777
      %p779 = scmp.lt.s32.totalorder %s39, 1
      %s780 = scalar_select %p779, %s39, 1
      %p781 = scmp.lt.s32.totalorder %s40, 0
      %s782 = scalar_select %p781, %s40, 0
      %s783 = smul.addr %s780, 4
      %s784 = sadd.s32 %s782, %s783
      %s785 = smul.addr %s784, 4
      %s786 = scalar_lea.vmem %s19, %s785
      %p787 = scmp.lt.s32.totalorder %s39, 1
      %s788 = scalar_select %p787, %s39, 1
      %p789 = scmp.lt.s32.totalorder %s40, 0
      %s790 = scalar_select %p789, %s40, 0
      %s791 = smul.addr %s788, 4
      %s792 = sadd.s32 %s790, %s791
      %s793 = smul.addr %s792, 4
      %s794 = scalar_lea.vmem %s20, %s793
      %p795 = scmp.lt.s32.totalorder %s39, 1
      %s796 = scalar_select %p795, %s39, 1
      %p797 = scmp.lt.s32.totalorder %s40, 0
      %s798 = scalar_select %p797, %s40, 0
      %s799 = smul.addr %s796, 4
      %s800 = sadd.s32 %s798, %s799
      %s801 = smul.addr %s800, 4
      %s802 = scalar_lea.vmem %s21, %s801
      %p803 = scmp.lt.s32.totalorder %s39, 1
      %s804 = scalar_select %p803, %s39, 1
      %p805 = scmp.lt.s32.totalorder %s40, 0
      %s806 = scalar_select %p805, %s40, 0
      %s807 = smul.addr %s804, 4
      %s808 = sadd.s32 %s806, %s807
      %s809 = smul.addr %s808, 4
      %s810 = scalar_lea.vmem %s22, %s809
      %p811 = scmp.lt.s32.totalorder %s39, 1
      %s812 = scalar_select %p811, %s39, 1
      %p813 = scmp.lt.s32.totalorder %s40, 0
      %s814 = scalar_select %p813, %s40, 0
      %s815 = sadd.s32 %s814, %s812
      %s816 = smul.addr %s815, 4
      %s817 = scalar_lea.vmem %s23, %s816
      %v819 = vld [vmem:[%s778] sm:$0xff]
      %v820 = vpack.c.bf16 %v819, %v819
      %v821 = vld [vmem:[%s1] sm:$0xf]
      %v822 = vld [vmem:[%s1 + $0x4] sm:$0xf]
      %v823 = vld [vmem:[%s1 + $0x8] sm:$0xf]
      %v824 = vld [vmem:[%s1 + $0xc] sm:$0xf]
      %v825 = vld [vmem:[%s1 + $0x10] sm:$0xf]
      %v826 = vld [vmem:[%s1 + $0x14] sm:$0xf]
      %v827 = vld [vmem:[%s1 + $0x18] sm:$0xf]
      %v828 = vld [vmem:[%s1 + $0x1c] sm:$0xf]
      %v829 = vld [vmem:[%s2] sm:$0x1]
      %v831 = vlaneseq
      %v832 = vshrl.u32 %v831, 7
      %v833 = vsub.s32 0, %v832
      %v834 = vrot.slane %v829, %v833
      %v844 = vunpack.c.l.b16 %v821
      %v845 = vunpack.c.l.b16 %v822
      %v846 = vunpack.c.l.b16 %v823
      %v847 = vunpack.c.l.b16 %v824
      %v848 = vunpack.c.l.b16 %v825
      %v849 = vunpack.c.l.b16 %v826
      %v850 = vunpack.c.l.b16 %v827
      %v851 = vunpack.c.l.b16 %v828
      %v852 = vpack.c.b16 %v845, %v844
      %v853 = vpack.c.b16 %v847, %v846
      %v854 = vpack.c.b16 %v849, %v848
      %v855 = vpack.c.b16 %v851, %v850
      %vm860 = vcmask 523264
      %v862 = vsel %vm860, %v820, 0
      %864 = vmatprep.subr.bf16.mxu0 0
      %865 = vmatpush1.bf16.msra.mxu0 %v852
      %866 = vmatprep.subr.bf16.mxu0 0
      %867 = vmatpush1.bf16.msra.mxu0 %v853
      %868 = vmatprep.subr.bf16.mxu0 0
      %869 = vmatpush1.bf16.msra.mxu0 %v854
      %870 = vmatprep.subr.bf16.mxu0 0
      %871 = vmatpush1.bf16.msra.mxu0 %v855
      %872 = vmatprep.subr.bf16.mxu0 0
      %873 = vmatpush1.bf16.msra.mxu0 0
      %874 = vmatprep.subr.bf16.mxu0 0
      %875 = vmatpush1.bf16.msra.mxu0 0
      %876 = vmatprep.subr.bf16.mxu0 0
      %877 = vmatpush1.bf16.msra.mxu0 0
      %878 = vmatprep.subr.bf16.mxu0 0
      %879 = vmatpush1.bf16.msra.mxu0 0
      %880 = vmatprep.subr.bf16.mxu0 0
      %881 = vmatpush1.bf16.msra.mxu0 0
      %882 = vmatprep.subr.bf16.mxu0 0
      %883 = vmatpush1.bf16.msra.mxu0 0
      %884 = vmatprep.subr.bf16.mxu0 0
      %885 = vmatpush1.bf16.msra.mxu0 0
      %886 = vmatprep.subr.bf16.mxu0 0
      %887 = vmatpush1.bf16.msra.mxu0 0
      %888 = vmatprep.subr.bf16.mxu0 0
      %889 = vmatpush1.bf16.msra.mxu0 0
      %890 = vmatprep.subr.bf16.mxu0 0
      %891 = vmatpush1.bf16.msra.mxu0 0
      %892 = vmatprep.subr.bf16.mxu0 0
      %893 = vmatpush1.bf16.msra.mxu0 0
      %894 = vmatprep.subr.bf16.mxu0 0
      %895 = vmatpush1.bf16.msra.mxu0 0
      %896 = vmatprep.mubr.bf16.mxu0 0
      %897 = vmatmul.mubr.bf16.gmra.mrb[0].mxu0 %v862
      %v898 = vpop.f32.mrb[0].mxu0
      %v899 = vadd.f32 %v834, %v898
      %v900 = vpop.f32.mrb[0].mxu0
      %v901 = vpop.f32.mrb[0].mxu0
      %v902 = vpop.f32.mrb[0].mxu0
      %903 = vdwg.mxu0
      %v904 = vld [vmem:[%s3] sm:$0x1]
      %v905 = vld [vmem:[%s4] sm:$0x1]
      %vm906 = vcmask 171008
      %v907 = vsel %vm906, %v899, 0.0
      %908 = vadd.xlane.f32.xlu0 %v907
      %v909 = vpop.xlane.xlu0 %908
      %v910 = vrcp.pop 21.0
      %v911 = vmul.f32 %v909, %v910
      %v912 = vsub.f32 %v899, %v911
      %v913 = vmul.f32 %v912, %v912
      %v914 = vsel %vm906, %v913, 0.0
      %915 = vadd.xlane.f32.xlu0 %v914
      %v916 = vpop.xlane.xlu0 %915
      %v917 = vmul.f32 %v916, %v910
      %v918 = vadd.f32 %v917, 1e-05
      %v919 = vrsqrt.pop %v918
      %v920 = vmul.f32 %v912, %v919
      %v922 = vlaneseq
      %v923 = vshrl.u32 %v922, 7
      %v924 = vsub.s32 0, %v923
      %v925 = vrot.slane %v904, %v924
      %v927 = vmul.f32 %v920, %v925
      %v929 = vlaneseq
      %v930 = vshrl.u32 %v929, 7
      %v931 = vsub.s32 0, %v930
      %v932 = vrot.slane %v905, %v931
      %v934 = vadd.f32 %v927, %v932
      %v935 = vpack.c.bf16 %v934, %v934
      %v936 = vld [vmem:[%s5] sm:$0xf]
      %v937 = vld [vmem:[%s5 + $0x4] sm:$0xf]
      %v938 = vld [vmem:[%s5 + $0x8] sm:$0x7]
      %v939 = vld [vmem:[%s6] sm:$0x1]
      %v941 = vlaneseq
      %v942 = vshrl.u32 %v941, 7
      %v943 = vsub.s32 0, %v942
      %v944 = vrot.slane %v939, %v943
      %v949 = vunpack.c.l.b16 %v936
      %v950 = vunpack.c.l.b16 %v937
      %v951 = vunpack.c.l.b16 %v938
      %v952 = vpack.c.b16 %v950, %v949
      %v953 = vpack.c.b16 %v951, %v951
      %v956 = vsel %vm906, %v935, 0
      %vm958 = vcmask 1041408
      %vm959 = vcmask 1042432
      %v960 = vsel %vm958, 4294967295, 65535
      %v961 = vsel %vm959, %v960, 0
      %v963 = vand.u32 %v953, %v961
      %965 = vmatprep.subr.bf16.mxu0 0
      %966 = vmatpush1.bf16.msra.mxu0 %v952
      %967 = vmatprep.subr.bf16.mxu0 0
      %968 = vmatpush1.bf16.msra.mxu0 %v963
      %969 = vmatprep.subr.bf16.mxu0 0
      %970 = vmatpush1.bf16.msra.mxu0 0
      %971 = vmatprep.subr.bf16.mxu0 0
      %972 = vmatpush1.bf16.msra.mxu0 0
      %973 = vmatprep.subr.bf16.mxu0 0
      %974 = vmatpush1.bf16.msra.mxu0 0
      %975 = vmatprep.subr.bf16.mxu0 0
      %976 = vmatpush1.bf16.msra.mxu0 0
      %977 = vmatprep.subr.bf16.mxu0 0
      %978 = vmatpush1.bf16.msra.mxu0 0
      %979 = vmatprep.subr.bf16.mxu0 0
      %980 = vmatpush1.bf16.msra.mxu0 0
      %981 = vmatprep.subr.bf16.mxu0 0
      %982 = vmatpush1.bf16.msra.mxu0 0
      %983 = vmatprep.subr.bf16.mxu0 0
      %984 = vmatpush1.bf16.msra.mxu0 0
      %985 = vmatprep.subr.bf16.mxu0 0
      %986 = vmatpush1.bf16.msra.mxu0 0
      %987 = vmatprep.subr.bf16.mxu0 0
      %988 = vmatpush1.bf16.msra.mxu0 0
      %989 = vmatprep.subr.bf16.mxu0 0
      %990 = vmatpush1.bf16.msra.mxu0 0
      %991 = vmatprep.subr.bf16.mxu0 0
      %992 = vmatpush1.bf16.msra.mxu0 0
      %993 = vmatprep.subr.bf16.mxu0 0
      %994 = vmatpush1.bf16.msra.mxu0 0
      %995 = vmatprep.subr.bf16.mxu0 0
      %996 = vmatpush1.bf16.msra.mxu0 0
      %997 = vmatprep.mubr.bf16.mxu0 0
      %998 = vmatmul.mubr.bf16.gmra.mrb[0].mxu0 %v956
      %v999 = vpop.f32.mrb[0].mxu0
      %v1000 = vadd.f32 %v944, %v999
      %v1001 = vpop.f32.mrb[0].mxu0
      %v1002 = vpop.f32.mrb[0].mxu0
      %v1003 = vpop.f32.mrb[0].mxu0
      %1004 = vdwg.mxu0
      %v1005 = vld [vmem:[%s7] sm:$0xf]
      %v1006 = vld [vmem:[%s7 + $0x4] sm:$0xf]
      %v1007 = vld [vmem:[%s7 + $0x8] sm:$0x7]
      %v1008 = vld [vmem:[%s8] sm:$0x1]
      %v1010 = vlaneseq
      %v1011 = vshrl.u32 %v1010, 7
      %v1012 = vsub.s32 0, %v1011
      %v1013 = vrot.slane %v1008, %v1012
      %v1018 = vunpack.c.l.b16 %v1005
      %v1019 = vunpack.c.l.b16 %v1006
      %v1020 = vunpack.c.l.b16 %v1007
      %v1021 = vpack.c.b16 %v1019, %v1018
      %v1022 = vpack.c.b16 %v1020, %v1020
      %v1025 = vand.u32 %v1022, %v961
      %1027 = vmatprep.subr.bf16.mxu0 0
      %1028 = vmatpush1.bf16.msra.mxu0 %v1021
      %1029 = vmatprep.subr.bf16.mxu0 0
      %1030 = vmatpush1.bf16.msra.mxu0 %v1025
      %1031 = vmatprep.subr.bf16.mxu0 0
      %1032 = vmatpush1.bf16.msra.mxu0 0
      %1033 = vmatprep.subr.bf16.mxu0 0
      %1034 = vmatpush1.bf16.msra.mxu0 0
      %1035 = vmatprep.subr.bf16.mxu0 0
      %1036 = vmatpush1.bf16.msra.mxu0 0
      %1037 = vmatprep.subr.bf16.mxu0 0
      %1038 = vmatpush1.bf16.msra.mxu0 0
      %1039 = vmatprep.subr.bf16.mxu0 0
      %1040 = vmatpush1.bf16.msra.mxu0 0
      %1041 = vmatprep.subr.bf16.mxu0 0
      %1042 = vmatpush1.bf16.msra.mxu0 0
      %1043 = vmatprep.subr.bf16.mxu0 0
      %1044 = vmatpush1.bf16.msra.mxu0 0
      %1045 = vmatprep.subr.bf16.mxu0 0
      %1046 = vmatpush1.bf16.msra.mxu0 0
      %1047 = vmatprep.subr.bf16.mxu0 0
      %1048 = vmatpush1.bf16.msra.mxu0 0
      %1049 = vmatprep.subr.bf16.mxu0 0
      %1050 = vmatpush1.bf16.msra.mxu0 0
      %1051 = vmatprep.subr.bf16.mxu0 0
      %1052 = vmatpush1.bf16.msra.mxu0 0
      %1053 = vmatprep.subr.bf16.mxu0 0
      %1054 = vmatpush1.bf16.msra.mxu0 0
      %1055 = vmatprep.subr.bf16.mxu0 0
      %1056 = vmatpush1.bf16.msra.mxu0 0
      %1057 = vmatprep.subr.bf16.mxu0 0
      %1058 = vmatpush1.bf16.msra.mxu0 0
      %1059 = vmatprep.mubr.bf16.mxu0 0
      %1060 = vmatmul.mubr.bf16.gmra.mrb[0].mxu0 %v956
      %v1061 = vpop.f32.mrb[0].mxu0
      %v1062 = vadd.f32 %v1013, %v1061
      %v1063 = vpop.f32.mrb[0].mxu0
      %v1064 = vpop.f32.mrb[0].mxu0
      %v1065 = vpop.f32.mrb[0].mxu0
      %1066 = vdwg.mxu0
      %v1067 = vld [vmem:[%s9] sm:$0xf]
      %v1068 = vld [vmem:[%s9 + $0x4] sm:$0xf]
      %v1069 = vld [vmem:[%s9 + $0x8] sm:$0xf]
      %v1070 = vld [vmem:[%s9 + $0xc] sm:$0xf]
      %v1071 = vld [vmem:[%s9 + $0x10] sm:$0xf]
      %v1072 = vld [vmem:[%s9 + $0x14] sm:$0xf]
      %v1073 = vld [vmem:[%s9 + $0x18] sm:$0xf]
      %v1074 = vld [vmem:[%s9 + $0x1c] sm:$0xf]
      %v1075 = vld [vmem:[%s10] sm:$0x1]
      %v1077 = vlaneseq
      %v1078 = vshrl.u32 %v1077, 7
      %v1079 = vsub.s32 0, %v1078
      %v1080 = vrot.slane %v1075, %v1079
      %v1090 = vunpack.c.l.b16 %v1067
      %v1091 = vunpack.c.l.b16 %v1068
      %v1092 = vunpack.c.l.b16 %v1069
      %v1093 = vunpack.c.l.b16 %v1070
      %v1094 = vunpack.c.l.b16 %v1071
      %v1095 = vunpack.c.l.b16 %v1072
      %v1096 = vunpack.c.l.b16 %v1073
      %v1097 = vunpack.c.l.b16 %v1074
      %v1098 = vpack.c.b16 %v1091, %v1090
      %v1099 = vpack.c.b16 %v1093, %v1092
      %v1100 = vpack.c.b16 %v1095, %v1094
      %v1101 = vpack.c.b16 %v1097, %v1096
      %1106 = vmatprep.subr.bf16.mxu0 0
      %1107 = vmatpush1.bf16.msra.mxu0 %v1098
      %1108 = vmatprep.subr.bf16.mxu0 0
      %1109 = vmatpush1.bf16.msra.mxu0 %v1099
      %1110 = vmatprep.subr.bf16.mxu0 0
      %1111 = vmatpush1.bf16.msra.mxu0 %v1100
      %1112 = vmatprep.subr.bf16.mxu0 0
      %1113 = vmatpush1.bf16.msra.mxu0 %v1101
      %1114 = vmatprep.subr.bf16.mxu0 0
      %1115 = vmatpush1.bf16.msra.mxu0 0
      %1116 = vmatprep.subr.bf16.mxu0 0
      %1117 = vmatpush1.bf16.msra.mxu0 0
      %1118 = vmatprep.subr.bf16.mxu0 0
      %1119 = vmatpush1.bf16.msra.mxu0 0
      %1120 = vmatprep.subr.bf16.mxu0 0
      %1121 = vmatpush1.bf16.msra.mxu0 0
      %1122 = vmatprep.subr.bf16.mxu0 0
      %1123 = vmatpush1.bf16.msra.mxu0 0
      %1124 = vmatprep.subr.bf16.mxu0 0
      %1125 = vmatpush1.bf16.msra.mxu0 0
      %1126 = vmatprep.subr.bf16.mxu0 0
      %1127 = vmatpush1.bf16.msra.mxu0 0
      %1128 = vmatprep.subr.bf16.mxu0 0
      %1129 = vmatpush1.bf16.msra.mxu0 0
      %1130 = vmatprep.subr.bf16.mxu0 0
      %1131 = vmatpush1.bf16.msra.mxu0 0
      %1132 = vmatprep.subr.bf16.mxu0 0
      %1133 = vmatpush1.bf16.msra.mxu0 0
      %1134 = vmatprep.subr.bf16.mxu0 0
      %1135 = vmatpush1.bf16.msra.mxu0 0
      %1136 = vmatprep.subr.bf16.mxu0 0
      %1137 = vmatpush1.bf16.msra.mxu0 0
      %1138 = vmatprep.mubr.bf16.mxu0 0
      %1139 = vmatmul.mubr.bf16.gmra.mrb[0].mxu0 %v862
      %v1140 = vpop.f32.mrb[0].mxu0
      %v1141 = vadd.f32 %v1080, %v1140
      %v1142 = vpop.f32.mrb[0].mxu0
      %v1143 = vpop.f32.mrb[0].mxu0
      %v1144 = vpop.f32.mrb[0].mxu0
      %1145 = vdwg.mxu0
      %v1146 = vld [vmem:[%s11] sm:$0xf]
      %v1147 = vld [vmem:[%s11 + $0x4] sm:$0xf]
      %v1148 = vld [vmem:[%s11 + $0x8] sm:$0xf]
      %v1149 = vld [vmem:[%s11 + $0xc] sm:$0xf]
      %v1150 = vld [vmem:[%s11 + $0x10] sm:$0xf]
      %v1151 = vld [vmem:[%s11 + $0x14] sm:$0xf]
      %v1152 = vld [vmem:[%s11 + $0x18] sm:$0xf]
      %v1153 = vld [vmem:[%s11 + $0x1c] sm:$0xf]
      %v1154 = vld [vmem:[%s12] sm:$0x1]
      %v1156 = vlaneseq
      %v1157 = vshrl.u32 %v1156, 7
      %v1158 = vsub.s32 0, %v1157
      %v1159 = vrot.slane %v1154, %v1158
      %v1169 = vunpack.c.l.b16 %v1146
      %v1170 = vunpack.c.l.b16 %v1147
      %v1171 = vunpack.c.l.b16 %v1148
      %v1172 = vunpack.c.l.b16 %v1149
      %v1173 = vunpack.c.l.b16 %v1150
      %v1174 = vunpack.c.l.b16 %v1151
      %v1175 = vunpack.c.l.b16 %v1152
      %v1176 = vunpack.c.l.b16 %v1153
      %v1177 = vpack.c.b16 %v1170, %v1169
      %v1178 = vpack.c.b16 %v1172, %v1171
      %v1179 = vpack.c.b16 %v1174, %v1173
      %v1180 = vpack.c.b16 %v1176, %v1175
      %1185 = vmatprep.subr.bf16.mxu0 0
      %1186 = vmatpush1.bf16.msra.mxu0 %v1177
      %1187 = vmatprep.subr.bf16.mxu0 0
      %1188 = vmatpush1.bf16.msra.mxu0 %v1178
      %1189 = vmatprep.subr.bf16.mxu0 0
      %1190 = vmatpush1.bf16.msra.mxu0 %v1179
      %1191 = vmatprep.subr.bf16.mxu0 0
      %1192 = vmatpush1.bf16.msra.mxu0 %v1180
      %1193 = vmatprep.subr.bf16.mxu0 0
      %1194 = vmatpush1.bf16.msra.mxu0 0
      %1195 = vmatprep.subr.bf16.mxu0 0
      %1196 = vmatpush1.bf16.msra.mxu0 0
      %1197 = vmatprep.subr.bf16.mxu0 0
      %1198 = vmatpush1.bf16.msra.mxu0 0
      %1199 = vmatprep.subr.bf16.mxu0 0
      %1200 = vmatpush1.bf16.msra.mxu0 0
      %1201 = vmatprep.subr.bf16.mxu0 0
      %1202 = vmatpush1.bf16.msra.mxu0 0
      %1203 = vmatprep.subr.bf16.mxu0 0
      %1204 = vmatpush1.bf16.msra.mxu0 0
      %1205 = vmatprep.subr.bf16.mxu0 0
      %1206 = vmatpush1.bf16.msra.mxu0 0
      %1207 = vmatprep.subr.bf16.mxu0 0
      %1208 = vmatpush1.bf16.msra.mxu0 0
      %1209 = vmatprep.subr.bf16.mxu0 0
      %1210 = vmatpush1.bf16.msra.mxu0 0
      %1211 = vmatprep.subr.bf16.mxu0 0
      %1212 = vmatpush1.bf16.msra.mxu0 0
      %1213 = vmatprep.subr.bf16.mxu0 0
      %1214 = vmatpush1.bf16.msra.mxu0 0
      %1215 = vmatprep.subr.bf16.mxu0 0
      %1216 = vmatpush1.bf16.msra.mxu0 0
      %1217 = vmatprep.mubr.bf16.mxu0 0
      %1218 = vmatmul.mubr.bf16.gmra.mrb[0].mxu0 %v862
      %v1219 = vpop.f32.mrb[0].mxu0
      %v1220 = vadd.f32 %v1159, %v1219
      %v1221 = vpop.f32.mrb[0].mxu0
      %v1222 = vpop.f32.mrb[0].mxu0
      %v1223 = vpop.f32.mrb[0].mxu0
      %1224 = vdwg.mxu0
      %v1225 = vld [vmem:[%s13] sm:$0x1]
      %v1226 = vld [vmem:[%s14] sm:$0x1]
      %vm1227 = vcmask 261120
      %v1228 = vsel %vm1227, %v1141, 0.0
      %1229 = vadd.xlane.f32.xlu0 %v1228
      %v1230 = vpop.xlane.xlu0 %1229
      %v1231 = vrcp.pop 32.0
      %v1232 = vmul.f32 %v1230, %v1231
      %v1233 = vsub.f32 %v1141, %v1232
      %v1234 = vmul.f32 %v1233, %v1233
      %v1235 = vsel %vm1227, %v1234, 0.0
      %1236 = vadd.xlane.f32.xlu0 %v1235
      %v1237 = vpop.xlane.xlu0 %1236
      %v1238 = vmul.f32 %v1237, %v1231
      %v1239 = vadd.f32 %v1238, 1e-05
      %v1240 = vrsqrt.pop %v1239
      %v1241 = vmul.f32 %v1233, %v1240
      %v1243 = vlaneseq
      %v1244 = vshrl.u32 %v1243, 7
      %v1245 = vsub.s32 0, %v1244
      %v1246 = vrot.slane %v1225, %v1245
      %v1248 = vmul.f32 %v1241, %v1246
      %v1250 = vlaneseq
      %v1251 = vshrl.u32 %v1250, 7
      %v1252 = vsub.s32 0, %v1251
      %v1253 = vrot.slane %v1226, %v1252
      %v1255 = vadd.f32 %v1248, %v1253
      %v1256 = vpack.c.bf16 %v1255, %v1255
      %v1257 = vld [vmem:[%s15] sm:$0xf]
      %v1258 = vld [vmem:[%s15 + $0x4] sm:$0xf]
      %v1259 = vld [vmem:[%s15 + $0x8] sm:$0xf]
      %v1260 = vld [vmem:[%s15 + $0xc] sm:$0xf]
      %v1261 = vld [vmem:[%s16] sm:$0x1]
      %v1263 = vlaneseq
      %v1264 = vshrl.u32 %v1263, 7
      %v1265 = vsub.s32 0, %v1264
      %v1266 = vrot.slane %v1261, %v1265
      %v1272 = vunpack.c.l.b16 %v1257
      %v1273 = vunpack.c.l.b16 %v1258
      %v1274 = vunpack.c.l.b16 %v1259
      %v1275 = vunpack.c.l.b16 %v1260
      %v1276 = vpack.c.b16 %v1273, %v1272
      %v1277 = vpack.c.b16 %v1275, %v1274
      %v1281 = vsel %vm1227, %v1256, 0
      %1283 = vmatprep.subr.bf16.mxu0 0
      %1284 = vmatpush1.bf16.msra.mxu0 %v1276
      %1285 = vmatprep.subr.bf16.mxu0 0
      %1286 = vmatpush1.bf16.msra.mxu0 %v1277
      %1287 = vmatprep.subr.bf16.mxu0 0
      %1288 = vmatpush1.bf16.msra.mxu0 0
      %1289 = vmatprep.subr.bf16.mxu0 0
      %1290 = vmatpush1.bf16.msra.mxu0 0
      %1291 = vmatprep.subr.bf16.mxu0 0
      %1292 = vmatpush1.bf16.msra.mxu0 0
      %1293 = vmatprep.subr.bf16.mxu0 0
      %1294 = vmatpush1.bf16.msra.mxu0 0
      %1295 = vmatprep.subr.bf16.mxu0 0
      %1296 = vmatpush1.bf16.msra.mxu0 0
      %1297 = vmatprep.subr.bf16.mxu0 0
      %1298 = vmatpush1.bf16.msra.mxu0 0
      %1299 = vmatprep.subr.bf16.mxu0 0
      %1300 = vmatpush1.bf16.msra.mxu0 0
      %1301 = vmatprep.subr.bf16.mxu0 0
      %1302 = vmatpush1.bf16.msra.mxu0 0
      %1303 = vmatprep.subr.bf16.mxu0 0
      %1304 = vmatpush1.bf16.msra.mxu0 0
      %1305 = vmatprep.subr.bf16.mxu0 0
      %1306 = vmatpush1.bf16.msra.mxu0 0
      %1307 = vmatprep.subr.bf16.mxu0 0
      %1308 = vmatpush1.bf16.msra.mxu0 0
      %1309 = vmatprep.subr.bf16.mxu0 0
      %1310 = vmatpush1.bf16.msra.mxu0 0
      %1311 = vmatprep.subr.bf16.mxu0 0
      %1312 = vmatpush1.bf16.msra.mxu0 0
      %1313 = vmatprep.subr.bf16.mxu0 0
      %1314 = vmatpush1.bf16.msra.mxu0 0
      %1315 = vmatprep.mubr.bf16.mxu0 0
      %1316 = vmatmul.mubr.bf16.gmra.mrb[0].mxu0 %v1281
      %v1317 = vpop.f32.mrb[0].mxu0
      %v1318 = vadd.f32 %v1266, %v1317
      %v1319 = vpop.f32.mrb[0].mxu0
      %v1320 = vpop.f32.mrb[0].mxu0
      %v1321 = vpop.f32.mrb[0].mxu0
      %1322 = vdwg.mxu0
      %v1323 = vld [vmem:[%s17] sm:$0xf]
      %v1324 = vld [vmem:[%s17 + $0x4] sm:$0xf]
      %v1325 = vld [vmem:[%s17 + $0x8] sm:$0xf]
      %v1326 = vld [vmem:[%s17 + $0xc] sm:$0xf]
      %v1327 = vld [vmem:[%s18] sm:$0x1]
      %v1329 = vlaneseq
      %v1330 = vshrl.u32 %v1329, 7
      %v1331 = vsub.s32 0, %v1330
      %v1332 = vrot.slane %v1327, %v1331
      %v1338 = vunpack.c.l.b16 %v1323
      %v1339 = vunpack.c.l.b16 %v1324
      %v1340 = vunpack.c.l.b16 %v1325
      %v1341 = vunpack.c.l.b16 %v1326
      %v1342 = vpack.c.b16 %v1339, %v1338
      %v1343 = vpack.c.b16 %v1341, %v1340
      %1346 = vmatprep.subr.bf16.mxu0 0
      %1347 = vmatpush1.bf16.msra.mxu0 %v1342
      %1348 = vmatprep.subr.bf16.mxu0 0
      %1349 = vmatpush1.bf16.msra.mxu0 %v1343
      %1350 = vmatprep.subr.bf16.mxu0 0
      %1351 = vmatpush1.bf16.msra.mxu0 0
      %1352 = vmatprep.subr.bf16.mxu0 0
      %1353 = vmatpush1.bf16.msra.mxu0 0
      %1354 = vmatprep.subr.bf16.mxu0 0
      %1355 = vmatpush1.bf16.msra.mxu0 0
      %1356 = vmatprep.subr.bf16.mxu0 0
      %1357 = vmatpush1.bf16.msra.mxu0 0
      %1358 = vmatprep.subr.bf16.mxu0 0
      %1359 = vmatpush1.bf16.msra.mxu0 0
      %1360 = vmatprep.subr.bf16.mxu0 0
      %1361 = vmatpush1.bf16.msra.mxu0 0
      %1362 = vmatprep.subr.bf16.mxu0 0
      %1363 = vmatpush1.bf16.msra.mxu0 0
      %1364 = vmatprep.subr.bf16.mxu0 0
      %1365 = vmatpush1.bf16.msra.mxu0 0
      %1366 = vmatprep.subr.bf16.mxu0 0
      %1367 = vmatpush1.bf16.msra.mxu0 0
      %1368 = vmatprep.subr.bf16.mxu0 0
      %1369 = vmatpush1.bf16.msra.mxu0 0
      %1370 = vmatprep.subr.bf16.mxu0 0
      %1371 = vmatpush1.bf16.msra.mxu0 0
      %1372 = vmatprep.subr.bf16.mxu0 0
      %1373 = vmatpush1.bf16.msra.mxu0 0
      %1374 = vmatprep.subr.bf16.mxu0 0
      %1375 = vmatpush1.bf16.msra.mxu0 0
      %1376 = vmatprep.subr.bf16.mxu0 0
      %1377 = vmatpush1.bf16.msra.mxu0 0
      %1378 = vmatprep.mubr.bf16.mxu0 0
      %1379 = vmatmul.mubr.bf16.gmra.mrb[0].mxu0 %v1281
      %v1380 = vpop.f32.mrb[0].mxu0
      %v1381 = vadd.f32 %v1332, %v1380
      %v1382 = vpop.f32.mrb[0].mxu0
      %v1383 = vpop.f32.mrb[0].mxu0
      %v1384 = vpop.f32.mrb[0].mxu0
      %1385 = vdwg.mxu0
      %v1386 = vpack.c.bf16 %v1220, %v1220
      %vm1387 = vcmask 60416
      %1388 = vst.msk [vmem:[%s817] sm:$0xf] %vm1387, %v1386
      %v1389 = vpack.c.bf16 %v1000, %v1000
      %1390 = vst.msk [vmem:[%s786] sm:$0xf] %vm1387, %v1389
      %v1391 = vpack.c.bf16 %v1062, %v1062
      %1392 = vst.msk [vmem:[%s794] sm:$0xf] %vm1387, %v1391
      %v1393 = vpack.c.bf16 %v1318, %v1318
      %1394 = vst.msk [vmem:[%s802] sm:$0xf] %vm1387, %v1393
      %v1395 = vpack.c.bf16 %v1381, %v1381
      %vm1396 = vcmask 125952
      %1397 = vst.msk [vmem:[%s810] sm:$0xf] %vm1396, %v1395
      %v1399 = vunpack.c.l.b16 %v1389
      %v1400 = vpack.c.b16 %v1399, %v1399
      %1401 = vrot.lane.b32.xlu0 %v1400, 120
      %v1402 = vpop.permute.xlu0 %1401
      %s1404 = scalar_lea.vmem %s786, 4
      %1405 = vst.msk [vmem:[%s1404] sm:$0xf] %vm1387, %v1402
      %v1407 = vunpack.c.l.b16 %v1391
      %v1408 = vpack.c.b16 %v1407, %v1407
      %1409 = vrot.lane.b32.xlu0 %v1408, 120
      %v1410 = vpop.permute.xlu0 %1409
      %s1412 = scalar_lea.vmem %s794, 4
      %1413 = vst.msk [vmem:[%s1412] sm:$0xf] %vm1387, %v1410
      %v1415 = vunpack.c.l.b16 %v1393
      %v1416 = vpack.c.b16 %v1415, %v1415
      %1417 = vrot.lane.b32.xlu0 %v1416, 120
      %v1418 = vpop.permute.xlu0 %1417
      %s1420 = scalar_lea.vmem %s802, 4
      %1421 = vst.msk [vmem:[%s1420] sm:$0xf] %vm1387, %v1418
      %v1423 = vunpack.c.l.b16 %v1395
      %v1424 = vpack.c.b16 %v1423, %v1423
      %1425 = vrot.lane.b32.xlu0 %v1424, 112
      %v1426 = vpop.permute.xlu0 %1425
      %s1428 = scalar_lea.vmem %s810, 4
      %1429 = vst.msk [vmem:[%s1428] sm:$0xf] %vm1396, %v1426
      %1430 = vrot.lane.b32.xlu0 %v1400, 112
      %v1431 = vpop.permute.xlu0 %1430
      %s1433 = scalar_lea.vmem %s786, 8
      %1434 = vst.msk [vmem:[%s1433] sm:$0xf] %vm1387, %v1431
      %1435 = vrot.lane.b32.xlu0 %v1408, 112
      %v1436 = vpop.permute.xlu0 %1435
      %s1438 = scalar_lea.vmem %s794, 8
      %1439 = vst.msk [vmem:[%s1438] sm:$0xf] %vm1387, %v1436
      %1440 = vrot.lane.b32.xlu0 %v1416, 112
      %v1441 = vpop.permute.xlu0 %1440
      %s1443 = scalar_lea.vmem %s802, 8
      %1444 = vst.msk [vmem:[%s1443] sm:$0xf] %vm1387, %v1441
      %1445 = vrot.lane.b32.xlu0 %v1424, 96
      %v1446 = vpop.permute.xlu0 %1445
      %s1448 = scalar_lea.vmem %s810, 8
      %1449 = vst.msk [vmem:[%s1448] sm:$0xf] %vm1396, %v1446
      %1450 = vrot.lane.b32.xlu0 %v1400, 104
      %v1451 = vpop.permute.xlu0 %1450
      %s1453 = scalar_lea.vmem %s786, 12
      %1454 = vst.msk [vmem:[%s1453] sm:$0xf] %vm1387, %v1451
      %1455 = vrot.lane.b32.xlu0 %v1408, 104
      %v1456 = vpop.permute.xlu0 %1455
      %s1458 = scalar_lea.vmem %s794, 12
      %1459 = vst.msk [vmem:[%s1458] sm:$0xf] %vm1387, %v1456
      %1460 = vrot.lane.b32.xlu0 %v1416, 104
      %v1461 = vpop.permute.xlu0 %1460
      %s1463 = scalar_lea.vmem %s802, 12
      %1464 = vst.msk [vmem:[%s1463] sm:$0xf] %vm1387, %v1461
      %1465 = vrot.lane.b32.xlu0 %v1424, 80
      %v1466 = vpop.permute.xlu0 %1465
      %s1468 = scalar_lea.vmem %s810, 12
      %1469 = vst.msk [vmem:[%s1468] sm:$0xf] %vm1396, %v1466
      %p1470 = scmp.lt.s32.totalorder %s39, 1
      %s1471 = scalar_select %p1470, %s39, 1
      %p1472 = scmp.lt.s32.totalorder %s40, 0
      %s1473 = scalar_select %p1472, %s40, 0
      %s1474 = smul.addr %s1471, 4
      %s1475 = sadd.s32 %s1473, %s1474
      %s1476 = smul.addr %s1475, 4
      %s1477 = scalar_lea.vmem %s19, %s1476
      %p1478 = scmp.lt.s32.totalorder %s39, 1
      %s1479 = scalar_select %p1478, %s39, 1
      %p1480 = scmp.lt.s32.totalorder %s40, 0
      %s1481 = scalar_select %p1480, %s40, 0
      %s1482 = smul.addr %s1479, 4
      %s1483 = sadd.s32 %s1481, %s1482
      %s1484 = smul.addr %s1483, 4
      %s1485 = scalar_lea.vmem %s20, %s1484
      %p1486 = scmp.lt.s32.totalorder %s39, 1
      %s1487 = scalar_select %p1486, %s39, 1
      %p1488 = scmp.lt.s32.totalorder %s40, 0
      %s1489 = scalar_select %p1488, %s40, 0
      %s1490 = smul.addr %s1487, 4
      %s1491 = sadd.s32 %s1489, %s1490
      %s1492 = smul.addr %s1491, 4
      %s1493 = scalar_lea.vmem %s21, %s1492
      %p1494 = scmp.lt.s32.totalorder %s39, 1
      %s1495 = scalar_select %p1494, %s39, 1
      %p1496 = scmp.lt.s32.totalorder %s40, 0
      %s1497 = scalar_select %p1496, %s40, 0
      %s1498 = smul.addr %s1495, 4
      %s1499 = sadd.s32 %s1497, %s1498
      %s1500 = smul.addr %s1499, 4
      %s1501 = scalar_lea.vmem %s22, %s1500
      %p1502 = scmp.lt.s32.totalorder %s39, 1
      %s1503 = scalar_select %p1502, %s39, 1
      %p1504 = scmp.lt.s32.totalorder %s40, 0
      %s1505 = scalar_select %p1504, %s40, 0
      %s1506 = sadd.s32 %s1505, %s1503
      %s1507 = smul.addr %s1506, 4
      %s1508 = scalar_lea.vmem %s23, %s1507
      // Predicated region
      $region97: #{mla_forward.2} parent=95 // pred_check
        %p1509 = pneg %p473
      $region98: #{mla_forward.2} parent=95 // pred_check_branch
        %1511 = sbr.rel (%p1509) target = $region100
      $region99: #{mla_forward.2} parent=95 // pred_region
        _
      $region100: #{mla_forward.2} parent=95 // pred_fallthru
        _
      // Predicated region
      $region101: #{mla_forward.2} parent=95 // pred_check
        %p1512 = pneg %p501
      $region102: #{mla_forward.2} parent=95 // pred_check_branch
        %1514 = sbr.rel (%p1512) target = $region104
      $region103: #{mla_forward.2} parent=95 // pred_region
        _
      $region104: #{mla_forward.2} parent=95 // pred_fallthru
        _
      // Predicated region
      $region105: #{mla_forward.2} parent=95 // pred_check
        %p1515 = pneg %p529
      $region106: #{mla_forward.2} parent=95 // pred_check_branch
        %1517 = sbr.rel (%p1515) target = $region108
      $region107: #{mla_forward.2} parent=95 // pred_region
        _
      $region108: #{mla_forward.2} parent=95 // pred_fallthru
        _
      // Predicated region
      $region109: #{mla_forward.2} parent=95 // pred_check
        %p1518 = pneg %p557
      $region110: #{mla_forward.2} parent=95 // pred_check_branch
        %1520 = sbr.rel (%p1518) target = $region112
      $region111: #{mla_forward.2} parent=95 // pred_region
        _
      $region112: #{mla_forward.2} parent=95 // pred_fallthru
        _
      // Predicated region
      $region113: #{mla_forward.2} parent=95 // pred_check
        %p1521 = pneg %p585
      $region114: #{mla_forward.2} parent=95 // pred_check_branch
        %1523 = sbr.rel (%p1521) target = $region116
      $region115: #{mla_forward.2} parent=95 // pred_region
        _
      $region116: #{mla_forward.2} parent=95 // pred_fallthru
        _
    $region96: #{mla_forward.2} parent=5 // pred_fallthru
      _
    %p1524 = scmp.le.s32.totalorder 2, %s30
    // Predicated region
    $region117: #{mla_forward.2} parent=5 // pred_check
      %p1525 = pneg %p1524
    $region118: #{mla_forward.2} parent=5 // pred_check_branch
      %1527 = sbr.rel (%p1525) target = $region120
    $region119: #{mla_forward.2} parent=5 // pred_region
      %s1528 = ssub.s32 %s30, 2
      // Predicated region
      $region121: #{mla_forward.2} parent=119 // pred_check
        %p1529 = pneg %p479
      $region122: #{mla_forward.2} parent=119 // pred_check_branch
        %1531 = sbr.rel (%p1529) target = $region124
      $region123: #{mla_forward.2} parent=119 // pred_region
        %p1532 = scmp.lt.s32.totalorder %s41, 1
        %s1533 = scalar_select %p1532, %s41, 1
        %p1534 = scmp.lt.s32.totalorder %s42, 0
        %s1535 = scalar_select %p1534, %s42, 0
        %s1536 = smul.addr %s1533, 4
        %s1537 = sadd.s32 %s1535, %s1536
        %s1538 = smul.addr %s1537, 4
        %s1539 = scalar_lea.vmem %s19, %s1538
      $region124: #{mla_forward.2} parent=119 // pred_fallthru
        _
      // Predicated region
      $region125: #{mla_forward.2} parent=119 // pred_check
        %p1540 = pneg %p507
      $region126: #{mla_forward.2} parent=119 // pred_check_branch
        %1542 = sbr.rel (%p1540) target = $region128
      $region127: #{mla_forward.2} parent=119 // pred_region
        %p1543 = scmp.lt.s32.totalorder %s41, 1
        %s1544 = scalar_select %p1543, %s41, 1
        %p1545 = scmp.lt.s32.totalorder %s42, 0
        %s1546 = scalar_select %p1545, %s42, 0
        %s1547 = smul.addr %s1544, 4
        %s1548 = sadd.s32 %s1546, %s1547
        %s1549 = smul.addr %s1548, 4
        %s1550 = scalar_lea.vmem %s20, %s1549
      $region128: #{mla_forward.2} parent=119 // pred_fallthru
        _
      // Predicated region
      $region129: #{mla_forward.2} parent=119 // pred_check
        %p1551 = pneg %p535
      $region130: #{mla_forward.2} parent=119 // pred_check_branch
        %1553 = sbr.rel (%p1551) target = $region132
      $region131: #{mla_forward.2} parent=119 // pred_region
        %p1554 = scmp.lt.s32.totalorder %s41, 1
        %s1555 = scalar_select %p1554, %s41, 1
        %p1556 = scmp.lt.s32.totalorder %s42, 0
        %s1557 = scalar_select %p1556, %s42, 0
        %s1558 = smul.addr %s1555, 4
        %s1559 = sadd.s32 %s1557, %s1558
        %s1560 = smul.addr %s1559, 4
        %s1561 = scalar_lea.vmem %s21, %s1560
      $region132: #{mla_forward.2} parent=119 // pred_fallthru
        _
      // Predicated region
      $region133: #{mla_forward.2} parent=119 // pred_check
        %p1562 = pneg %p563
      $region134: #{mla_forward.2} parent=119 // pred_check_branch
        %1564 = sbr.rel (%p1562) target = $region136
      $region135: #{mla_forward.2} parent=119 // pred_region
        %p1565 = scmp.lt.s32.totalorder %s41, 1
        %s1566 = scalar_select %p1565, %s41, 1
        %p1567 = scmp.lt.s32.totalorder %s42, 0
        %s1568 = scalar_select %p1567, %s42, 0
        %s1569 = smul.addr %s1566, 4
        %s1570 = sadd.s32 %s1568, %s1569
        %s1571 = smul.addr %s1570, 4
        %s1572 = scalar_lea.vmem %s22, %s1571
      $region136: #{mla_forward.2} parent=119 // pred_fallthru
        _
      // Predicated region
      $region137: #{mla_forward.2} parent=119 // pred_check
        %p1573 = pneg %p591
      $region138: #{mla_forward.2} parent=119 // pred_check_branch
        %1575 = sbr.rel (%p1573) target = $region140
      $region139: #{mla_forward.2} parent=119 // pred_region
        %p1576 = scmp.lt.s32.totalorder %s41, 1
        %s1577 = scalar_select %p1576, %s41, 1
        %p1578 = scmp.lt.s32.totalorder %s42, 0
        %s1579 = scalar_select %p1578, %s42, 0
        %s1580 = sadd.s32 %s1579, %s1577
        %s1581 = smul.addr %s1580, 4
        %s1582 = scalar_lea.vmem %s23, %s1581
      $region140: #{mla_forward.2} parent=119 // pred_fallthru
        _
    $region120: #{mla_forward.2} parent=5 // pred_fallthru
      _
  $region6: #{mla_forward.2} parent=0 // loop_footer
    %s34 = sadd.s32 1, %s30
  $region7: #{mla_forward.2} parent=0 // loop_footer_branch
    %29 = sbr.rel target = $region3
  $region8: #{mla_forward.2} parent=0 // loop_exit
    _

</llo_original>
